<compile_context>
chip_gen: v7x
topology: tpu7x:2x2x1
jax: 0.10.0
libtpu: 0.0.40
codegen_flags: <defaults>
</compile_context>

<pallas_src>
import functools

import jax
import jax.numpy as jnp
from jax.experimental import pallas as pl
from jax.experimental.pallas import tpu as pltpu

SEQ = 90           # board squares; hard-coded inside the PyTorch module
COL_TILE = 2048    # output-column tile (multiple of 128); 8100 -> padded to 8192 -> 4 tiles


def _mish(v):
    # mish(x) = x * tanh(softplus(x)), numerically-stable softplus.
    sp = jnp.maximum(v, 0.0) + jnp.log(1.0 + jnp.exp(-jnp.abs(v)))
    return v * jnp.tanh(sp)


def _layernorm(v, g, b, eps):
    mu = jnp.mean(v, axis=-1, keepdims=True)
    var = jnp.mean((v - mu) * (v - mu), axis=-1, keepdims=True)
    return (v - mu) * jax.lax.rsqrt(var + eps) * g + b


def smolgen_kernel(x_ref, w1_ref, b1_ref, g1_ref, be1_ref,
                   w2_ref, b2_ref, g2_ref, be2_ref, wgen_ref,
                   o_ref, *, num_heads, gen_sz, eps):
    B = x_ref.shape[0]
    H, GS = num_heads, gen_sz

    # dense1 (compress already folded into w1_eff host-side) + Mish + LayerNorm.
    # bf16 MXU operands, f32 accumulation, f32 elementwise math.
    # NOTE: recomputed per output-column tile so the grid axis stays "parallel"
    # (cost is a ~0.8 MFLOP matmul + ~400 transcendentals, hidden under the wgen DMA).
    h1 = jnp.dot(x_ref[...].astype(jnp.bfloat16), w1_ref[...],
                 preferred_element_type=jnp.float32) + b1_ref[...]
    h1 = _layernorm(_mish(h1), g1_ref[...], be1_ref[...], eps)

    # dense2 + Mish + LayerNorm.
    h2 = jnp.dot(h1.astype(jnp.bfloat16), w2_ref[...],
                 preferred_element_type=jnp.float32) + b2_ref[...]
    h2 = _layernorm(_mish(h2), g2_ref[...], be2_ref[...], eps)
    h2 = h2.astype(jnp.bfloat16)                                   # (B, H*GS)

    wgen = wgen_ref[...]                                           # (GS, COL_TILE) bf16
    # One MXU dot per head on a static lane slice of h2, stored straight into a
    # contiguous lane-dense row block of the output (no scratch regrouping / scatter).
    for h in range(H):
        o_ref[h * B:(h + 1) * B, :] = jnp.dot(
            h2[:, h * GS:(h + 1) * GS], wgen, preferred_element_type=jnp.float32)


def prepare_smolgen_params(p, *, col_tile=COL_TILE):
    """One-time host-side re-layout / fusion of the PyTorch-layout parameters."""
    HC, E = p["wc"].shape
    HS = p["w1"].shape[0]
    GS, SS = p["wgen"].shape
    hi = jax.lax.Precision.HIGHEST

    # Fold compress into dense1:
    #   flow_flat[b, s*HC+c] = sum_e x[b,s,e] * wc[c,e]
    #   h1[b, j] = sum_{s,e} x[b,s,e] * W1_eff[s*E+e, j] + b1[j]
    #   W1_eff[s*E+e, j] = sum_c wc[c,e] * w1[j, s*HC+c]
    w1_r = p["w1"].reshape(HS, SEQ, HC)                      # (j, s, c)
    w1_eff = jnp.einsum("ce,jsc->sej", p["wc"], w1_r, precision=hi).reshape(SEQ * E, HS)

    # Pad weight_gen columns (8100 -> multiple of col_tile) so the output axis tiles
    # cleanly into (8,128)-aligned blocks; padded columns are zero and sliced off outside.
    ss_pad = ((SS + col_tile - 1) // col_tile) * col_tile
    wgen = jnp.pad(p["wgen"], ((0, 0), (0, ss_pad - SS)))

    return {
        "w1_eff": w1_eff.astype(jnp.bfloat16),   # (90*E, HS)
        "b1": p["b1"][None, :],
        "ln1_g": p["ln1_g"][None, :],
        "ln1_b": p["ln1_b"][None, :],
        "w2t": p["w2"].T.astype(jnp.bfloat16),   # (HS, H*GS)
        "b2": p["b2"][None, :],
        "ln2_g": p["ln2_g"][None, :],
        "ln2_b": p["ln2_b"][None, :],
        "wgen": wgen.astype(jnp.bfloat16),       # (GS, ss_pad)
    }


def smolgen_pallas(x, kp, *, num_heads, gen_sz, eps=1e-3, col_tile=COL_TILE):
    B, S, E = x.shape
    assert S == SEQ, "SmolgenModule hard-codes a sequence length of 90"
    H, GS = num_heads, gen_sz
    HS = kp["w1_eff"].shape[1]
    SS = SEQ * SEQ
    ss_pad = kp["wgen"].shape[1]
    assert ss_pad % col_tile == 0
    n_tiles = ss_pad // col_tile

    # Free contiguous reshape: compress is folded into w1_eff, so the kernel consumes
    # x directly as (B, 90*E) rows — no host-side transpose, no in-kernel flatten.
    x2 = x.reshape(B, SEQ * E)

    args = (x2, kp["w1_eff"], kp["b1"], kp["ln1_g"], kp["ln1_b"],
            kp["w2t"], kp["b2"], kp["ln2_g"], kp["ln2_b"], kp["wgen"])

    def full_spec(a):
        nd = a.ndim
        return pl.BlockSpec(a.shape, lambda j, _nd=nd: (0,) * _nd)

    in_specs = [full_spec(a) for a in args[:-1]]
    in_specs.append(pl.BlockSpec((GS, col_tile), lambda j: (0, j)))       # wgen column tile
    out_spec = pl.BlockSpec((H * B, col_tile), lambda j: (0, j))

    kernel = functools.partial(smolgen_kernel, num_heads=H, gen_sz=GS, eps=eps)

    flops = (n_tiles * 2 * B * (SEQ * E * HS + HS * H * GS)   # dense1/2 (recomputed per tile)
             + 2 * B * H * GS * ss_pad)                       # weight_gen matmul
    transcendentals = n_tiles * 4 * B * (HS + H * GS)
    bytes_accessed = (sum(int(a.size) * a.dtype.itemsize for a in args)
                      + H * B * ss_pad * 4)

    out_hb = pl.pallas_call(
        kernel,
        out_shape=jax.ShapeDtypeStruct((H * B, ss_pad), jnp.float32),
        grid=(n_tiles,),
        in_specs=in_specs,
        out_specs=out_spec,
        compiler_params=pltpu.CompilerParams(
            dimension_semantics=("parallel",),        # v7x: split column tiles across 2 TCs
            vmem_limit_bytes=32 * 1024 * 1024),
        cost_estimate=pl.CostEstimate(flops=flops,
                                      transcendentals=transcendentals,
                                      bytes_accessed=bytes_accessed),
    )(*args)

    # Layout plumbing outside the kernel (tiny): drop padded columns and reorder
    # the (head, batch) row blocks back to (batch, head, 90, 90).
    out = out_hb[:, :SS].reshape(H, B, SS).transpose(1, 0, 2)
    return out.reshape(B, H, SEQ, SEQ)


def smolgen_reference(x, p, *, num_heads, gen_sz, eps=1e-3):
    """Pure-JAX f32 reference matching the PyTorch forward semantics (Mish activation)."""
    B, S, _ = x.shape
    hi = jax.lax.Precision.HIGHEST
    flow = jnp.einsum("bse,ce->bsc", x, p["wc"], precision=hi)      # compress, no bias
    flow = flow.reshape(B, -1)                                      # (B, 90*HC)
    flow = jnp.dot(flow, p["w1"].T, precision=hi) + p["b1"]
    flow = _layernorm(_mish(flow), p["ln1_g"], p["ln1_b"], eps)
    flow = jnp.dot(flow, p["w2"].T, precision=hi) + p["b2"]
    flow = _layernorm(_mish(flow), p["ln2_g"], p["ln2_b"], eps)
    flow = flow.reshape(B, num_heads, gen_sz)
    w = jnp.einsum("bhg,gp->bhp", flow, p["wgen"], precision=hi)
    return w.reshape(B, num_heads, S, S)


def init_params(key, *, embedding_size, num_heads, hidden_channels, hidden_sz, gen_sz):
    import math
    E, HC, HS, H, GS = embedding_size, hidden_channels, hidden_sz, num_heads, gen_sz
    ks = jax.random.split(key, 6)

    def u(k, shape, fan_in):
        s = 1.0 / math.sqrt(fan_in)
        return jax.random.uniform(k, shape, jnp.float32, -s, s)

    xg = math.sqrt(6.0 / (GS + SEQ * SEQ))                  # xavier-uniform for weight_gen
    return {
        "wc": u(ks[0], (HC, E), E),                         # compress.weight (no bias)
        "w1": u(ks[1], (HS, SEQ * HC), SEQ * HC),           # dense1.weight
        "b1": u(ks[2], (HS,), SEQ * HC),                    # dense1.bias
        "ln1_g": jnp.ones((HS,), jnp.float32),
        "ln1_b": jnp.zeros((HS,), jnp.float32),
        "w2": u(ks[3], (GS * H, HS), HS),                   # dense2.weight
        "b2": u(ks[4], (GS * H,), HS),                      # dense2.bias
        "ln2_g": jnp.ones((GS * H,), jnp.float32),
        "ln2_b": jnp.zeros((GS * H,), jnp.float32),
        "wgen": jax.random.uniform(ks[5], (GS, SEQ * SEQ), jnp.float32, -xg, xg),
    }


if __name__ == "__main__":
    # Small config consistent with the module: batch=2, embedding=32, heads=4,
    # smolgen_hidden_channels=4, smolgen_hidden_sz=64, smolgen_gen_sz=32, seq fixed at 90.
    B, E, H = 2, 32, 4
    HC, HS, GS = 4, 64, 32

    key = jax.random.PRNGKey(0)
    kx, kp = jax.random.split(key)
    x = jax.random.normal(kx, (B, SEQ, E), jnp.float32)
    params = init_params(kp, embedding_size=E, num_heads=H,
                         hidden_channels=HC, hidden_sz=HS, gen_sz=GS)

    kparams = prepare_smolgen_params(params)
    out = smolgen_pallas(x, kparams, num_heads=H, gen_sz=GS, eps=1e-3)
    out = jax.block_until_ready(out)

    ref = smolgen_reference(x, params, num_heads=H, gen_sz=GS, eps=1e-3)
    assert out.shape == (B, H, SEQ, SEQ)
    max_err = float(jnp.max(jnp.abs(out - ref)))
    # bf16 MXU operands vs. the f32 reference -> loosened tolerance (expected ~1e-3 level).
    assert max_err < 2e-2, f"max abs diff {max_err}"

    print("KERNEL_OK")
</pallas_src>

<mosaic_0001>
module attributes {stable_mosaic.version = 11 : i64} {
  func.func @smolgen_kernel(%arg0: i32, %arg1: memref<2x2880xf32, #tpu.memory_space<vmem>>, %arg2: memref<2880x64xbf16, #tpu.memory_space<vmem>>, %arg3: memref<1x64xf32, #tpu.memory_space<vmem>>, %arg4: memref<1x64xf32, #tpu.memory_space<vmem>>, %arg5: memref<1x64xf32, #tpu.memory_space<vmem>>, %arg6: memref<64x128xbf16, #tpu.memory_space<vmem>>, %arg7: memref<1x128xf32, #tpu.memory_space<vmem>>, %arg8: memref<1x128xf32, #tpu.memory_space<vmem>>, %arg9: memref<1x128xf32, #tpu.memory_space<vmem>>, %arg10: memref<32x2048xbf16, #tpu.memory_space<vmem>>, %arg11: memref<8x2048xf32, #tpu.memory_space<vmem>>) attributes {dimension_semantics = [#tpu.dimension_semantics<parallel>], iteration_bounds = array<i64: 4>, scalar_prefetch = 0 : i64, scratch_operands = 0 : i64, tpu.core_type = #tpu.core_type<tc>, window_params = [{pipeline_mode = #tpu.pipeline_mode<synchronous>, transform_indices = @transform_0, window_bounds = array<i64: 2, 2880>}, {pipeline_mode = #tpu.pipeline_mode<synchronous>, transform_indices = @transform_1, window_bounds = array<i64: 2880, 64>}, {pipeline_mode = #tpu.pipeline_mode<synchronous>, transform_indices = @transform_2, window_bounds = array<i64: 1, 64>}, {pipeline_mode = #tpu.pipeline_mode<synchronous>, transform_indices = @transform_3, window_bounds = array<i64: 1, 64>}, {pipeline_mode = #tpu.pipeline_mode<synchronous>, transform_indices = @transform_4, window_bounds = array<i64: 1, 64>}, {pipeline_mode = #tpu.pipeline_mode<synchronous>, transform_indices = @transform_5, window_bounds = array<i64: 64, 128>}, {pipeline_mode = #tpu.pipeline_mode<synchronous>, transform_indices = @transform_6, window_bounds = array<i64: 1, 128>}, {pipeline_mode = #tpu.pipeline_mode<synchronous>, transform_indices = @transform_7, window_bounds = array<i64: 1, 128>}, {pipeline_mode = #tpu.pipeline_mode<synchronous>, transform_indices = @transform_8, window_bounds = array<i64: 1, 128>}, {transform_indices = @transform_9, window_bounds = array<i64: 32, 2048>}, {transform_indices = @transform_10, window_bounds = array<i64: 8, 2048>}]} {
    %c0 = arith.constant 0 : index
    %c0_0 = arith.constant 0 : index
    %0 = vector.load %arg1[%c0, %c0_0] : memref<2x2880xf32, #tpu.memory_space<vmem>>, vector<2x2880xf32>
    %1 = arith.truncf %0 : vector<2x2880xf32> to vector<2x2880xbf16>
    %c0_1 = arith.constant 0 : index
    %c0_2 = arith.constant 0 : index
    %2 = vector.load %arg2[%c0_1, %c0_2] : memref<2880x64xbf16, #tpu.memory_space<vmem>>, vector<2880x64xbf16>
    %cst = arith.constant dense<0.000000e+00> : vector<2x64xf32>
    %3 = tpu.matmul %1, %2, %cst {dimension_numbers = #tpu.dot_dimension_numbers<[1], [0], [0], [1], [0, 0, 1, 1], [], []>} : vector<2x2880xbf16>, vector<2880x64xbf16>, vector<2x64xf32> -> vector<2x64xf32>
    %c0_3 = arith.constant 0 : index
    %c0_4 = arith.constant 0 : index
    %4 = vector.load %arg3[%c0_3, %c0_4] : memref<1x64xf32, #tpu.memory_space<vmem>>, vector<1x64xf32>
    %5 = vector.broadcast %4 : vector<1x64xf32> to vector<2x64xf32>
    %6 = arith.addf %3, %5 : vector<2x64xf32>
    %cst_5 = arith.constant 0.000000e+00 : f32
    %7 = vector.broadcast %cst_5 : f32 to vector<2x64xf32>
    %8 = arith.maximumf %6, %7 : vector<2x64xf32>
    %9 = math.absf %6 : vector<2x64xf32>
    %cst_6 = arith.constant 0.000000e+00 : f32
    %10 = vector.broadcast %cst_6 : f32 to vector<2x64xf32>
    %11 = arith.subf %10, %9 : vector<2x64xf32>
    %12 = math.exp %11 : vector<2x64xf32>
    %cst_7 = arith.constant 1.000000e+00 : f32
    %13 = vector.broadcast %cst_7 : f32 to vector<2x64xf32>
    %14 = arith.addf %13, %12 : vector<2x64xf32>
    %15 = math.log %14 : vector<2x64xf32>
    %16 = arith.addf %8, %15 : vector<2x64xf32>
    %17 = math.tanh %16 : vector<2x64xf32>
    %18 = arith.mulf %6, %17 : vector<2x64xf32>
    %c0_8 = arith.constant 0 : index
    %c0_9 = arith.constant 0 : index
    %19 = vector.load %arg4[%c0_8, %c0_9] : memref<1x64xf32, #tpu.memory_space<vmem>>, vector<1x64xf32>
    %c0_10 = arith.constant 0 : index
    %c0_11 = arith.constant 0 : index
    %20 = vector.load %arg5[%c0_10, %c0_11] : memref<1x64xf32, #tpu.memory_space<vmem>>, vector<1x64xf32>
    %cst_12 = arith.constant dense<0.000000e+00> : vector<2xf32>
    %21 = vector.multi_reduction <add>, %18, %cst_12 [1] : vector<2x64xf32> to vector<2xf32>
    %22 = vector.shape_cast %21 : vector<2xf32> to vector<2x1xf32>
    %cst_13 = arith.constant 6.400000e+01 : f32
    %23 = vector.broadcast %cst_13 : f32 to vector<2x1xf32>
    %24 = arith.divf %22, %23 : vector<2x1xf32>
    %25 = vector.broadcast %24 : vector<2x1xf32> to vector<2x64xf32>
    %26 = arith.subf %18, %25 : vector<2x64xf32>
    %27 = vector.broadcast %24 : vector<2x1xf32> to vector<2x64xf32>
    %28 = arith.subf %18, %27 : vector<2x64xf32>
    %29 = arith.mulf %26, %28 : vector<2x64xf32>
    %cst_14 = arith.constant dense<0.000000e+00> : vector<2xf32>
    %30 = vector.multi_reduction <add>, %29, %cst_14 [1] : vector<2x64xf32> to vector<2xf32>
    %31 = vector.shape_cast %30 : vector<2xf32> to vector<2x1xf32>
    %cst_15 = arith.constant 6.400000e+01 : f32
    %32 = vector.broadcast %cst_15 : f32 to vector<2x1xf32>
    %33 = arith.divf %31, %32 : vector<2x1xf32>
    %34 = vector.broadcast %24 : vector<2x1xf32> to vector<2x64xf32>
    %35 = arith.subf %18, %34 : vector<2x64xf32>
    %cst_16 = arith.constant 1.000000e-03 : f32
    %36 = vector.broadcast %cst_16 : f32 to vector<2x1xf32>
    %37 = arith.addf %33, %36 : vector<2x1xf32>
    %38 = math.rsqrt %37 : vector<2x1xf32>
    %39 = vector.broadcast %38 : vector<2x1xf32> to vector<2x64xf32>
    %40 = arith.mulf %35, %39 : vector<2x64xf32>
    %41 = vector.broadcast %19 : vector<1x64xf32> to vector<2x64xf32>
    %42 = arith.mulf %40, %41 : vector<2x64xf32>
    %43 = vector.broadcast %20 : vector<1x64xf32> to vector<2x64xf32>
    %44 = arith.addf %42, %43 : vector<2x64xf32>
    %45 = arith.truncf %44 : vector<2x64xf32> to vector<2x64xbf16>
    %c0_17 = arith.constant 0 : index
    %c0_18 = arith.constant 0 : index
    %46 = vector.load %arg6[%c0_17, %c0_18] : memref<64x128xbf16, #tpu.memory_space<vmem>>, vector<64x128xbf16>
    %cst_19 = arith.constant dense<0.000000e+00> : vector<2x128xf32>
    %47 = tpu.matmul %45, %46, %cst_19 {dimension_numbers = #tpu.dot_dimension_numbers<[1], [0], [0], [1], [0, 0, 1, 1], [], []>} : vector<2x64xbf16>, vector<64x128xbf16>, vector<2x128xf32> -> vector<2x128xf32>
    %c0_20 = arith.constant 0 : index
    %c0_21 = arith.constant 0 : index
    %48 = vector.load %arg7[%c0_20, %c0_21] : memref<1x128xf32, #tpu.memory_space<vmem>>, vector<1x128xf32>
    %49 = vector.broadcast %48 : vector<1x128xf32> to vector<2x128xf32>
    %50 = arith.addf %47, %49 : vector<2x128xf32>
    %cst_22 = arith.constant 0.000000e+00 : f32
    %51 = vector.broadcast %cst_22 : f32 to vector<2x128xf32>
    %52 = arith.maximumf %50, %51 : vector<2x128xf32>
    %53 = math.absf %50 : vector<2x128xf32>
    %cst_23 = arith.constant 0.000000e+00 : f32
    %54 = vector.broadcast %cst_23 : f32 to vector<2x128xf32>
    %55 = arith.subf %54, %53 : vector<2x128xf32>
    %56 = math.exp %55 : vector<2x128xf32>
    %cst_24 = arith.constant 1.000000e+00 : f32
    %57 = vector.broadcast %cst_24 : f32 to vector<2x128xf32>
    %58 = arith.addf %57, %56 : vector<2x128xf32>
    %59 = math.log %58 : vector<2x128xf32>
    %60 = arith.addf %52, %59 : vector<2x128xf32>
    %61 = math.tanh %60 : vector<2x128xf32>
    %62 = arith.mulf %50, %61 : vector<2x128xf32>
    %c0_25 = arith.constant 0 : index
    %c0_26 = arith.constant 0 : index
    %63 = vector.load %arg8[%c0_25, %c0_26] : memref<1x128xf32, #tpu.memory_space<vmem>>, vector<1x128xf32>
    %c0_27 = arith.constant 0 : index
    %c0_28 = arith.constant 0 : index
    %64 = vector.load %arg9[%c0_27, %c0_28] : memref<1x128xf32, #tpu.memory_space<vmem>>, vector<1x128xf32>
    %cst_29 = arith.constant dense<0.000000e+00> : vector<2xf32>
    %65 = vector.multi_reduction <add>, %62, %cst_29 [1] : vector<2x128xf32> to vector<2xf32>
    %66 = vector.shape_cast %65 : vector<2xf32> to vector<2x1xf32>
    %cst_30 = arith.constant 1.280000e+02 : f32
    %67 = vector.broadcast %cst_30 : f32 to vector<2x1xf32>
    %68 = arith.divf %66, %67 : vector<2x1xf32>
    %69 = vector.broadcast %68 : vector<2x1xf32> to vector<2x128xf32>
    %70 = arith.subf %62, %69 : vector<2x128xf32>
    %71 = vector.broadcast %68 : vector<2x1xf32> to vector<2x128xf32>
    %72 = arith.subf %62, %71 : vector<2x128xf32>
    %73 = arith.mulf %70, %72 : vector<2x128xf32>
    %cst_31 = arith.constant dense<0.000000e+00> : vector<2xf32>
    %74 = vector.multi_reduction <add>, %73, %cst_31 [1] : vector<2x128xf32> to vector<2xf32>
    %75 = vector.shape_cast %74 : vector<2xf32> to vector<2x1xf32>
    %cst_32 = arith.constant 1.280000e+02 : f32
    %76 = vector.broadcast %cst_32 : f32 to vector<2x1xf32>
    %77 = arith.divf %75, %76 : vector<2x1xf32>
    %78 = vector.broadcast %68 : vector<2x1xf32> to vector<2x128xf32>
    %79 = arith.subf %62, %78 : vector<2x128xf32>
    %cst_33 = arith.constant 1.000000e-03 : f32
    %80 = vector.broadcast %cst_33 : f32 to vector<2x1xf32>
    %81 = arith.addf %77, %80 : vector<2x1xf32>
    %82 = math.rsqrt %81 : vector<2x1xf32>
    %83 = vector.broadcast %82 : vector<2x1xf32> to vector<2x128xf32>
    %84 = arith.mulf %79, %83 : vector<2x128xf32>
    %85 = vector.broadcast %63 : vector<1x128xf32> to vector<2x128xf32>
    %86 = arith.mulf %84, %85 : vector<2x128xf32>
    %87 = vector.broadcast %64 : vector<1x128xf32> to vector<2x128xf32>
    %88 = arith.addf %86, %87 : vector<2x128xf32>
    %89 = arith.truncf %88 : vector<2x128xf32> to vector<2x128xbf16>
    %c0_34 = arith.constant 0 : index
    %c0_35 = arith.constant 0 : index
    %90 = vector.load %arg10[%c0_34, %c0_35] : memref<32x2048xbf16, #tpu.memory_space<vmem>>, vector<32x2048xbf16>
    %91 = vector.extract_strided_slice %89 {offsets = [0, 0], sizes = [2, 32], strides = [1, 1]} : vector<2x128xbf16> to vector<2x32xbf16>
    %cst_36 = arith.constant dense<0.000000e+00> : vector<2x2048xf32>
    %92 = tpu.matmul %91, %90, %cst_36 {dimension_numbers = #tpu.dot_dimension_numbers<[1], [0], [0], [1], [0, 0, 1, 1], [], []>} : vector<2x32xbf16>, vector<32x2048xbf16>, vector<2x2048xf32> -> vector<2x2048xf32>
    %c0_37 = arith.constant 0 : index
    %c0_38 = arith.constant 0 : index
    %93 = vector.load %arg11[%c0_37, %c0_38] : memref<8x2048xf32, #tpu.memory_space<vmem>>, vector<2x2048xf32>
    tpu.vector_store %arg11[%c0_37, %c0_38], %92 {strides = array<i32>} : memref<8x2048xf32, #tpu.memory_space<vmem>>, vector<2x2048xf32>,
    %94 = vector.extract_strided_slice %89 {offsets = [0, 32], sizes = [2, 32], strides = [1, 1]} : vector<2x128xbf16> to vector<2x32xbf16>
    %cst_39 = arith.constant dense<0.000000e+00> : vector<2x2048xf32>
    %95 = tpu.matmul %94, %90, %cst_39 {dimension_numbers = #tpu.dot_dimension_numbers<[1], [0], [0], [1], [0, 0, 1, 1], [], []>} : vector<2x32xbf16>, vector<32x2048xbf16>, vector<2x2048xf32> -> vector<2x2048xf32>
    %c2 = arith.constant 2 : index
    %c0_40 = arith.constant 0 : index
    %96 = vector.load %arg11[%c2, %c0_40] : memref<8x2048xf32, #tpu.memory_space<vmem>>, vector<2x2048xf32>
    tpu.vector_store %arg11[%c2, %c0_40], %95 {strides = array<i32>} : memref<8x2048xf32, #tpu.memory_space<vmem>>, vector<2x2048xf32>,
    %97 = vector.extract_strided_slice %89 {offsets = [0, 64], sizes = [2, 32], strides = [1, 1]} : vector<2x128xbf16> to vector<2x32xbf16>
    %cst_41 = arith.constant dense<0.000000e+00> : vector<2x2048xf32>
    %98 = tpu.matmul %97, %90, %cst_41 {dimension_numbers = #tpu.dot_dimension_numbers<[1], [0], [0], [1], [0, 0, 1, 1], [], []>} : vector<2x32xbf16>, vector<32x2048xbf16>, vector<2x2048xf32> -> vector<2x2048xf32>
    %c4 = arith.constant 4 : index
    %c0_42 = arith.constant 0 : index
    %99 = vector.load %arg11[%c4, %c0_42] : memref<8x2048xf32, #tpu.memory_space<vmem>>, vector<2x2048xf32>
    tpu.vector_store %arg11[%c4, %c0_42], %98 {strides = array<i32>} : memref<8x2048xf32, #tpu.memory_space<vmem>>, vector<2x2048xf32>,
    %100 = vector.extract_strided_slice %89 {offsets = [0, 96], sizes = [2, 32], strides = [1, 1]} : vector<2x128xbf16> to vector<2x32xbf16>
    %cst_43 = arith.constant dense<0.000000e+00> : vector<2x2048xf32>
    %101 = tpu.matmul %100, %90, %cst_43 {dimension_numbers = #tpu.dot_dimension_numbers<[1], [0], [0], [1], [0, 0, 1, 1], [], []>} : vector<2x32xbf16>, vector<32x2048xbf16>, vector<2x2048xf32> -> vector<2x2048xf32>
    %c6 = arith.constant 6 : index
    %c0_44 = arith.constant 0 : index
    %102 = vector.load %arg11[%c6, %c0_44] : memref<8x2048xf32, #tpu.memory_space<vmem>>, vector<2x2048xf32>
    tpu.vector_store %arg11[%c6, %c0_44], %101 {strides = array<i32>} : memref<8x2048xf32, #tpu.memory_space<vmem>>, vector<2x2048xf32>,
    return
  }
  func.func @transform_0(%arg0: i32) -> (i32, i32) {
    %c0_i32 = arith.constant 0 : i32
    %c0_i32_0 = arith.constant 0 : i32
    %c0_i32_1 = arith.constant 0 : i32
    return %c0_i32, %c0_i32_0 : i32, i32
  }
  func.func @transform_1(%arg0: i32) -> (i32, i32) {
    %c0_i32 = arith.constant 0 : i32
    %c0_i32_0 = arith.constant 0 : i32
    %c0_i32_1 = arith.constant 0 : i32
    return %c0_i32, %c0_i32_0 : i32, i32
  }
  func.func @transform_2(%arg0: i32) -> (i32, i32) {
    %c0_i32 = arith.constant 0 : i32
    %c0_i32_0 = arith.constant 0 : i32
    %c0_i32_1 = arith.constant 0 : i32
    return %c0_i32, %c0_i32_0 : i32, i32
  }
  func.func @transform_3(%arg0: i32) -> (i32, i32) {
    %c0_i32 = arith.constant 0 : i32
    %c0_i32_0 = arith.constant 0 : i32
    %c0_i32_1 = arith.constant 0 : i32
    return %c0_i32, %c0_i32_0 : i32, i32
  }
  func.func @transform_4(%arg0: i32) -> (i32, i32) {
    %c0_i32 = arith.constant 0 : i32
    %c0_i32_0 = arith.constant 0 : i32
    %c0_i32_1 = arith.constant 0 : i32
    return %c0_i32, %c0_i32_0 : i32, i32
  }
  func.func @transform_5(%arg0: i32) -> (i32, i32) {
    %c0_i32 = arith.constant 0 : i32
    %c0_i32_0 = arith.constant 0 : i32
    %c0_i32_1 = arith.constant 0 : i32
    return %c0_i32, %c0_i32_0 : i32, i32
  }
  func.func @transform_6(%arg0: i32) -> (i32, i32) {
    %c0_i32 = arith.constant 0 : i32
    %c0_i32_0 = arith.constant 0 : i32
    %c0_i32_1 = arith.constant 0 : i32
    return %c0_i32, %c0_i32_0 : i32, i32
  }
  func.func @transform_7(%arg0: i32) -> (i32, i32) {
    %c0_i32 = arith.constant 0 : i32
    %c0_i32_0 = arith.constant 0 : i32
    %c0_i32_1 = arith.constant 0 : i32
    return %c0_i32, %c0_i32_0 : i32, i32
  }
  func.func @transform_8(%arg0: i32) -> (i32, i32) {
    %c0_i32 = arith.constant 0 : i32
    %c0_i32_0 = arith.constant 0 : i32
    %c0_i32_1 = arith.constant 0 : i32
    return %c0_i32, %c0_i32_0 : i32, i32
  }
  func.func @transform_9(%arg0: i32) -> (i32, i32) {
    %c0_i32 = arith.constant 0 : i32
    %c0_i32_0 = arith.constant 0 : i32
    return %c0_i32, %arg0 : i32, i32
  }
  func.func @transform_10(%arg0: i32) -> (i32, i32) {
    %c0_i32 = arith.constant 0 : i32
    %c0_i32_0 = arith.constant 0 : i32
    return %c0_i32, %arg0 : i32, i32
  }
}

</mosaic_0001>

<llo_original>
// kernel: tpu_custom_call.1
$region0: #{tpu_custom_call.1}
  #allocation0 [shape = 'u32[]', space=smem, size = 0x4, offset = 0x4, fixed_abs, tag = 'smem constant byte address 0x4 - core index']
  #allocation1 [shape = 'u32[144,128]{1,0:T(1,128)}', space=vmem, size = 0x12000, scoped, tag = 'internal scratch']
  %s0 = inlined_call_operand.vmem [shape: f32[2,2880], index: 0, kind: input, shape index: {}]
  %s1 = inlined_call_operand.vmem [shape: bf16[2880,64], index: 1, kind: input, shape index: {}]
  %s2 = inlined_call_operand.vmem [shape: f32[1,64], index: 2, kind: input, shape index: {}]
  %s3 = inlined_call_operand.vmem [shape: f32[1,64], index: 3, kind: input, shape index: {}]
  %s4 = inlined_call_operand.vmem [shape: f32[1,64], index: 4, kind: input, shape index: {}]
  %s5 = inlined_call_operand.vmem [shape: bf16[64,128], index: 5, kind: input, shape index: {}]
  %s6 = inlined_call_operand.vmem [shape: f32[1,128], index: 6, kind: input, shape index: {}]
  %s7 = inlined_call_operand.vmem [shape: f32[1,128], index: 7, kind: input, shape index: {}]
  %s8 = inlined_call_operand.vmem [shape: f32[1,128], index: 8, kind: input, shape index: {}]
  %s9 = inlined_call_operand.vmem [shape: bf16[32,8192], index: 9, kind: input, shape index: {}]
  %s10 = inlined_call_operand.hbm [shape: f32[8,8192], index: 10, kind: output, shape index: {}]
  %s11 = sld [smem:[#allocation0]]
  $region96: #{tpu_custom_call.1} parent=0
    _
  %s13 = ssub.s32 1, %s11
  %s14 = scalar_select 0, %s13, %s11
  $region1: #{tpu_custom_call.1} parent=0
    #allocation2 [shape = 'u8[262144]{0}', space=vmem, size = 0x40000, scoped, tag = 'input window, operand 9']
    #allocation3 [shape = 'u8[131072]{0}', space=vmem, size = 0x20000, scoped, tag = 'output window, operand 0']
    #allocation4 [shape = 's32[2]{0}', space=sflag, size = 0x8, scoped, tag = 'scoped memory for tpu_custom_call.1']
    %15 = vsyncpa [#allocation4], 0
    %s16 = scalar_lea.sflag [#allocation4], 1
    %17 = vsyncpa %s16, 0
    loop: start=0, step=1, limit=6
    $region2: #{tpu_custom_call.1} parent=1 // loop_pre_header
      _
    $region3: #{tpu_custom_call.1} parent=1 // loop_header
      %s19 = sphi 0, %s23
      %p20 = scmp.ge.s32.totalorder %s19, 6
      %s27 = sphi 0, %s27
      %s29 = sphi 0, %s27
      %s30 = sphi 0, %s29
      %s44 = sphi 0, %s30
      %s48 = sphi 0, %s48
      %s50 = sphi 0, %s48
      %s51 = sphi 0, %s50
      %s65 = sphi 0, %s51
      %s69 = sphi 0, %s69
      %s71 = sphi 0, %s69
      %s72 = sphi 0, %s71
      %s86 = sphi 0, %s72
      %s90 = sphi 0, %s90
      %s92 = sphi 0, %s90
      %s93 = sphi 0, %s92
      %s107 = sphi 0, %s93
      %s111 = sphi 0, %s111
      %s113 = sphi 0, %s111
      %s114 = sphi 0, %s113
      %s128 = sphi 0, %s114
      %s132 = sphi 0, %s132
      %s134 = sphi 0, %s132
      %s135 = sphi 0, %s134
      %s149 = sphi 0, %s135
      %s153 = sphi 0, %s153
      %s155 = sphi 0, %s153
      %s156 = sphi 0, %s155
      %s170 = sphi 0, %s156
      %s174 = sphi 0, %s174
      %s176 = sphi 0, %s174
      %s177 = sphi 0, %s176
      %s191 = sphi 0, %s177
      %s195 = sphi 0, %s195
      %s197 = sphi 0, %s195
      %s198 = sphi 0, %s197
      %s212 = sphi 0, %s198
      %s218 = sphi 0, %s220
      %s221 = sphi 0, %s218
      %s222 = sphi 0, %s221
      %s238 = sphi 0, %s222
      %s244 = sphi 0, %s246
      %s247 = sphi 0, %s244
      %s248 = sphi 0, %s247
      %s264 = sphi 0, %s248
    $region4: #{tpu_custom_call.1} parent=1 // loop_header_branch
      %22 = sbr.rel (%p20) target = $region8
    $region5: #{tpu_custom_call.1} parent=1 // loop_body
      %s24 = ssub.s32 %s19, 1
      %s25 = ssub.s32 %s19, 2
      %s26 = sadd.s32 %s19, 1
      %s28 = sadd.s32 %s27, 1
      %p31 = scmp.eq.s32.totalorder %s19, 3
      %p32 = scmp.ne.s32.totalorder %s27, %s29
      %p33 = scmp.eq.s32.totalorder %s19, 0
      %p34 = por %p32, %p33
      %p35 = scmp.ne.s32.totalorder %s27, %s29
      %p36 = scmp.eq.s32.totalorder %s24, 3
      %p37 = por %p35, %p36
      %p38 = scmp.ne.s32.totalorder %s29, %s30
      %p39 = scmp.eq.s32.totalorder %s24, 0
      %p40 = por %p38, %p39
      %p41 = scmp.ne.s32.totalorder %s29, %s30
      %p42 = scmp.eq.s32.totalorder %s25, 3
      %p43 = por %p41, %p42
      %p45 = scmp.ne.s32.totalorder %s30, %s44
      %p46 = scmp.eq.s32.totalorder %s25, 0
      %p47 = por %p45, %p46
      %s49 = sadd.s32 %s48, 1
      %p52 = scmp.eq.s32.totalorder %s19, 3
      %p53 = scmp.ne.s32.totalorder %s48, %s50
      %p54 = scmp.eq.s32.totalorder %s19, 0
      %p55 = por %p53, %p54
      %p56 = scmp.ne.s32.totalorder %s48, %s50
      %p57 = scmp.eq.s32.totalorder %s24, 3
      %p58 = por %p56, %p57
      %p59 = scmp.ne.s32.totalorder %s50, %s51
      %p60 = scmp.eq.s32.totalorder %s24, 0
      %p61 = por %p59, %p60
      %p62 = scmp.ne.s32.totalorder %s50, %s51
      %p63 = scmp.eq.s32.totalorder %s25, 3
      %p64 = por %p62, %p63
      %p66 = scmp.ne.s32.totalorder %s51, %s65
      %p67 = scmp.eq.s32.totalorder %s25, 0
      %p68 = por %p66, %p67
      %s70 = sadd.s32 %s69, 1
      %p73 = scmp.eq.s32.totalorder %s19, 3
      %p74 = scmp.ne.s32.totalorder %s69, %s71
      %p75 = scmp.eq.s32.totalorder %s19, 0
      %p76 = por %p74, %p75
      %p77 = scmp.ne.s32.totalorder %s69, %s71
      %p78 = scmp.eq.s32.totalorder %s24, 3
      %p79 = por %p77, %p78
      %p80 = scmp.ne.s32.totalorder %s71, %s72
      %p81 = scmp.eq.s32.totalorder %s24, 0
      %p82 = por %p80, %p81
      %p83 = scmp.ne.s32.totalorder %s71, %s72
      %p84 = scmp.eq.s32.totalorder %s25, 3
      %p85 = por %p83, %p84
      %p87 = scmp.ne.s32.totalorder %s72, %s86
      %p88 = scmp.eq.s32.totalorder %s25, 0
      %p89 = por %p87, %p88
      %s91 = sadd.s32 %s90, 1
      %p94 = scmp.eq.s32.totalorder %s19, 3
      %p95 = scmp.ne.s32.totalorder %s90, %s92
      %p96 = scmp.eq.s32.totalorder %s19, 0
      %p97 = por %p95, %p96
      %p98 = scmp.ne.s32.totalorder %s90, %s92
      %p99 = scmp.eq.s32.totalorder %s24, 3
      %p100 = por %p98, %p99
      %p101 = scmp.ne.s32.totalorder %s92, %s93
      %p102 = scmp.eq.s32.totalorder %s24, 0
      %p103 = por %p101, %p102
      %p104 = scmp.ne.s32.totalorder %s92, %s93
      %p105 = scmp.eq.s32.totalorder %s25, 3
      %p106 = por %p104, %p105
      %p108 = scmp.ne.s32.totalorder %s93, %s107
      %p109 = scmp.eq.s32.totalorder %s25, 0
      %p110 = por %p108, %p109
      %s112 = sadd.s32 %s111, 1
      %p115 = scmp.eq.s32.totalorder %s19, 3
      %p116 = scmp.ne.s32.totalorder %s111, %s113
      %p117 = scmp.eq.s32.totalorder %s19, 0
      %p118 = por %p116, %p117
      %p119 = scmp.ne.s32.totalorder %s111, %s113
      %p120 = scmp.eq.s32.totalorder %s24, 3
      %p121 = por %p119, %p120
      %p122 = scmp.ne.s32.totalorder %s113, %s114
      %p123 = scmp.eq.s32.totalorder %s24, 0
      %p124 = por %p122, %p123
      %p125 = scmp.ne.s32.totalorder %s113, %s114
      %p126 = scmp.eq.s32.totalorder %s25, 3
      %p127 = por %p125, %p126
      %p129 = scmp.ne.s32.totalorder %s114, %s128
      %p130 = scmp.eq.s32.totalorder %s25, 0
      %p131 = por %p129, %p130
      %s133 = sadd.s32 %s132, 1
      %p136 = scmp.eq.s32.totalorder %s19, 3
      %p137 = scmp.ne.s32.totalorder %s132, %s134
      %p138 = scmp.eq.s32.totalorder %s19, 0
      %p139 = por %p137, %p138
      %p140 = scmp.ne.s32.totalorder %s132, %s134
      %p141 = scmp.eq.s32.totalorder %s24, 3
      %p142 = por %p140, %p141
      %p143 = scmp.ne.s32.totalorder %s134, %s135
      %p144 = scmp.eq.s32.totalorder %s24, 0
      %p145 = por %p143, %p144
      %p146 = scmp.ne.s32.totalorder %s134, %s135
      %p147 = scmp.eq.s32.totalorder %s25, 3
      %p148 = por %p146, %p147
      %p150 = scmp.ne.s32.totalorder %s135, %s149
      %p151 = scmp.eq.s32.totalorder %s25, 0
      %p152 = por %p150, %p151
      %s154 = sadd.s32 %s153, 1
      %p157 = scmp.eq.s32.totalorder %s19, 3
      %p158 = scmp.ne.s32.totalorder %s153, %s155
      %p159 = scmp.eq.s32.totalorder %s19, 0
      %p160 = por %p158, %p159
      %p161 = scmp.ne.s32.totalorder %s153, %s155
      %p162 = scmp.eq.s32.totalorder %s24, 3
      %p163 = por %p161, %p162
      %p164 = scmp.ne.s32.totalorder %s155, %s156
      %p165 = scmp.eq.s32.totalorder %s24, 0
      %p166 = por %p164, %p165
      %p167 = scmp.ne.s32.totalorder %s155, %s156
      %p168 = scmp.eq.s32.totalorder %s25, 3
      %p169 = por %p167, %p168
      %p171 = scmp.ne.s32.totalorder %s156, %s170
      %p172 = scmp.eq.s32.totalorder %s25, 0
      %p173 = por %p171, %p172
      %s175 = sadd.s32 %s174, 1
      %p178 = scmp.eq.s32.totalorder %s19, 3
      %p179 = scmp.ne.s32.totalorder %s174, %s176
      %p180 = scmp.eq.s32.totalorder %s19, 0
      %p181 = por %p179, %p180
      %p182 = scmp.ne.s32.totalorder %s174, %s176
      %p183 = scmp.eq.s32.totalorder %s24, 3
      %p184 = por %p182, %p183
      %p185 = scmp.ne.s32.totalorder %s176, %s177
      %p186 = scmp.eq.s32.totalorder %s24, 0
      %p187 = por %p185, %p186
      %p188 = scmp.ne.s32.totalorder %s176, %s177
      %p189 = scmp.eq.s32.totalorder %s25, 3
      %p190 = por %p188, %p189
      %p192 = scmp.ne.s32.totalorder %s177, %s191
      %p193 = scmp.eq.s32.totalorder %s25, 0
      %p194 = por %p192, %p193
      %s196 = sadd.s32 %s195, 1
      %p199 = scmp.eq.s32.totalorder %s19, 3
      %p200 = scmp.ne.s32.totalorder %s195, %s197
      %p201 = scmp.eq.s32.totalorder %s19, 0
      %p202 = por %p200, %p201
      %p203 = scmp.ne.s32.totalorder %s195, %s197
      %p204 = scmp.eq.s32.totalorder %s24, 3
      %p205 = por %p203, %p204
      %p206 = scmp.ne.s32.totalorder %s197, %s198
      %p207 = scmp.eq.s32.totalorder %s24, 0
      %p208 = por %p206, %p207
      %p209 = scmp.ne.s32.totalorder %s197, %s198
      %p210 = scmp.eq.s32.totalorder %s25, 3
      %p211 = por %p209, %p210
      %p213 = scmp.ne.s32.totalorder %s198, %s212
      %p214 = scmp.eq.s32.totalorder %s25, 0
      %p215 = por %p213, %p214
      %s216 = ssub.s32 %s19, %s26
      %p217 = scmp.eq.s32.totalorder %s216, 0
      %s219 = sadd.s32 %s218, 1
      %s220 = scalar_select %p217, %s218, %s219
      %p223 = pneg %p217
      %p224 = scmp.eq.s32.totalorder %s19, 3
      %p225 = por %p223, %p224
      %p226 = scmp.ne.s32.totalorder %s218, %s221
      %p227 = scmp.eq.s32.totalorder %s19, 0
      %p228 = por %p226, %p227
      %p229 = scmp.ne.s32.totalorder %s218, %s221
      %p230 = scmp.eq.s32.totalorder %s24, 3
      %p231 = por %p229, %p230
      %p232 = scmp.ne.s32.totalorder %s221, %s222
      %p233 = scmp.eq.s32.totalorder %s24, 0
      %p234 = por %p232, %p233
      %p235 = scmp.ne.s32.totalorder %s221, %s222
      %p236 = scmp.eq.s32.totalorder %s25, 3
      %p237 = por %p235, %p236
      %p239 = scmp.ne.s32.totalorder %s222, %s238
      %p240 = scmp.eq.s32.totalorder %s25, 0
      %p241 = por %p239, %p240
      %s242 = ssub.s32 %s19, %s26
      %p243 = scmp.eq.s32.totalorder %s242, 0
      %s245 = sadd.s32 %s244, 1
      %s246 = scalar_select %p243, %s244, %s245
      %p249 = pneg %p243
      %p250 = scmp.eq.s32.totalorder %s19, 3
      %p251 = por %p249, %p250
      %p252 = scmp.ne.s32.totalorder %s244, %s247
      %p253 = scmp.eq.s32.totalorder %s19, 0
      %p254 = por %p252, %p253
      %p255 = scmp.ne.s32.totalorder %s244, %s247
      %p256 = scmp.eq.s32.totalorder %s24, 3
      %p257 = por %p255, %p256
      %p258 = scmp.ne.s32.totalorder %s247, %s248
      %p259 = scmp.eq.s32.totalorder %s24, 0
      %p260 = por %p258, %p259
      %p261 = scmp.ne.s32.totalorder %s247, %s248
      %p262 = scmp.eq.s32.totalorder %s25, 3
      %p263 = por %p261, %p262
      %p265 = scmp.ne.s32.totalorder %s248, %s264
      %p266 = scmp.eq.s32.totalorder %s25, 0
      %p267 = por %p265, %p266
      %p268 = scmp.le.s32.totalorder 1, %s19
      %p269 = scmp.lt.s32.totalorder %s19, 5
      %p270 = pnand %p268, %p269
      %p271 = pneg %p270
      // Predicated region
      $region9: #{tpu_custom_call.1} parent=5 // pred_check
        _
      $region10: #{tpu_custom_call.1} parent=5 // pred_check_branch
        %273 = sbr.rel (%p270) target = $region12
      $region11: #{tpu_custom_call.1} parent=5 // pred_region
        %s274 = ssub.s32 %s19, 1
        // Predicated region
        $region13: #{tpu_custom_call.1} parent=11 // pred_check
          %p275 = pneg %p40
        $region14: #{tpu_custom_call.1} parent=11 // pred_check_branch
          %277 = sbr.rel (%p275) target = $region16
        $region15: #{tpu_custom_call.1} parent=11 // pred_region
          _
        $region16: #{tpu_custom_call.1} parent=11 // pred_fallthru
          _
        // Predicated region
        $region17: #{tpu_custom_call.1} parent=11 // pred_check
          %p278 = pneg %p61
        $region18: #{tpu_custom_call.1} parent=11 // pred_check_branch
          %280 = sbr.rel (%p278) target = $region20
        $region19: #{tpu_custom_call.1} parent=11 // pred_region
          _
        $region20: #{tpu_custom_call.1} parent=11 // pred_fallthru
          _
        // Predicated region
        $region21: #{tpu_custom_call.1} parent=11 // pred_check
          %p281 = pneg %p82
        $region22: #{tpu_custom_call.1} parent=11 // pred_check_branch
          %283 = sbr.rel (%p281) target = $region24
        $region23: #{tpu_custom_call.1} parent=11 // pred_region
          _
        $region24: #{tpu_custom_call.1} parent=11 // pred_fallthru
          _
        // Predicated region
        $region25: #{tpu_custom_call.1} parent=11 // pred_check
          %p284 = pneg %p103
        $region26: #{tpu_custom_call.1} parent=11 // pred_check_branch
          %286 = sbr.rel (%p284) target = $region28
        $region27: #{tpu_custom_call.1} parent=11 // pred_region
          _
        $region28: #{tpu_custom_call.1} parent=11 // pred_fallthru
          _
        // Predicated region
        $region29: #{tpu_custom_call.1} parent=11 // pred_check
          %p287 = pneg %p124
        $region30: #{tpu_custom_call.1} parent=11 // pred_check_branch
          %289 = sbr.rel (%p287) target = $region32
        $region31: #{tpu_custom_call.1} parent=11 // pred_region
          _
        $region32: #{tpu_custom_call.1} parent=11 // pred_fallthru
          _
        // Predicated region
        $region33: #{tpu_custom_call.1} parent=11 // pred_check
          %p290 = pneg %p145
        $region34: #{tpu_custom_call.1} parent=11 // pred_check_branch
          %292 = sbr.rel (%p290) target = $region36
        $region35: #{tpu_custom_call.1} parent=11 // pred_region
          _
        $region36: #{tpu_custom_call.1} parent=11 // pred_fallthru
          _
        // Predicated region
        $region37: #{tpu_custom_call.1} parent=11 // pred_check
          %p293 = pneg %p166
        $region38: #{tpu_custom_call.1} parent=11 // pred_check_branch
          %295 = sbr.rel (%p293) target = $region40
        $region39: #{tpu_custom_call.1} parent=11 // pred_region
          _
        $region40: #{tpu_custom_call.1} parent=11 // pred_fallthru
          _
        // Predicated region
        $region41: #{tpu_custom_call.1} parent=11 // pred_check
          %p296 = pneg %p187
        $region42: #{tpu_custom_call.1} parent=11 // pred_check_branch
          %298 = sbr.rel (%p296) target = $region44
        $region43: #{tpu_custom_call.1} parent=11 // pred_region
          _
        $region44: #{tpu_custom_call.1} parent=11 // pred_fallthru
          _
        // Predicated region
        $region45: #{tpu_custom_call.1} parent=11 // pred_check
          %p299 = pneg %p208
        $region46: #{tpu_custom_call.1} parent=11 // pred_check_branch
          %301 = sbr.rel (%p299) target = $region48
        $region47: #{tpu_custom_call.1} parent=11 // pred_region
          _
        $region48: #{tpu_custom_call.1} parent=11 // pred_fallthru
          _
      $region12: #{tpu_custom_call.1} parent=5 // pred_fallthru
        _
      %p302 = scmp.lt.s32.totalorder %s19, 4
      // Predicated region
      $region49: #{tpu_custom_call.1} parent=5 // pred_check
        %p303 = pneg %p302
      $region50: #{tpu_custom_call.1} parent=5 // pred_check_branch
        %305 = sbr.rel (%p303) target = $region52
      $region51: #{tpu_custom_call.1} parent=5 // pred_region
        // Predicated region
        $region53: #{tpu_custom_call.1} parent=51 // pred_check
          %p306 = pneg %p228
        $region54: #{tpu_custom_call.1} parent=51 // pred_check_branch
          %308 = sbr.rel (%p306) target = $region56
        $region55: #{tpu_custom_call.1} parent=51 // pred_region
          %s309 = sand.u32 %s218, 1
          %s310 = sand.u32 %s218, 1
          %s311 = smul.addr %s310, 256
          %s312 = scalar_lea.vmem [#allocation2], %s311
          %s313 = smul.u32 16, %s19
          %s314 = smul.addr %s313, 4
          %s315 = scalar_lea.vmem %s9, %s314
          // Predicated region
          $region57: #{tpu_custom_call.1} parent=55 // pred_check
            _
          $region58: #{tpu_custom_call.1} parent=55 // pred_check_branch
            %317 = sbr.rel (0) target = $region60
          $region59: #{tpu_custom_call.1} parent=55 // pred_region
            // Predicated region
            $region61: #{tpu_custom_call.1} parent=59 // pred_check
              _
            $region62: #{tpu_custom_call.1} parent=59 // pred_check_branch
              %319 = sbr.rel (0) target = $region64
            $region63: #{tpu_custom_call.1} parent=59 // pred_region
              loop: start=0, step=1, limit=1
              $region65: #{tpu_custom_call.1} parent=63 // loop_pre_header
                _
              $region66: #{tpu_custom_call.1} parent=63 // loop_header
                %s321 = sphi 0, %s325
                %p322 = scmp.ge.s32.totalorder %s321, 1
                %s326 = sphi %s315, %s315
                %s327 = sphi %s312, %s312
              $region67: #{tpu_custom_call.1} parent=63 // loop_header_branch
                %324 = sbr.rel (%p322) target = $region71
              $region68: #{tpu_custom_call.1} parent=63 // loop_body
                %v328 = vld [vmem:[%s326] sm:$0xff]
                %329 = vst [vmem:[%s327] sm:$0xff] %v328
                %v330 = vld [vmem:[%s326 + $0x8] sm:$0xff]
                %331 = vst [vmem:[%s327 + $0x8] sm:$0xff] %v330
                %v332 = vld [vmem:[%s326 + $0x10] sm:$0xff]
                %333 = vst [vmem:[%s327 + $0x10] sm:$0xff] %v332
                %v334 = vld [vmem:[%s326 + $0x18] sm:$0xff]
                %335 = vst [vmem:[%s327 + $0x18] sm:$0xff] %v334
                %v336 = vld [vmem:[%s326 + $0x20] sm:$0xff]
                %337 = vst [vmem:[%s327 + $0x20] sm:$0xff] %v336
                %v338 = vld [vmem:[%s326 + $0x28] sm:$0xff]
                %339 = vst [vmem:[%s327 + $0x28] sm:$0xff] %v338
                %v340 = vld [vmem:[%s326 + $0x30] sm:$0xff]
                %341 = vst [vmem:[%s327 + $0x30] sm:$0xff] %v340
                %v342 = vld [vmem:[%s326 + $0x38] sm:$0xff]
                %343 = vst [vmem:[%s327 + $0x38] sm:$0xff] %v342
                %v344 = vld [vmem:[%s326 + $0x100] sm:$0xff]
                %345 = vst [vmem:[%s327 + $0x40] sm:$0xff] %v344
                %v346 = vld [vmem:[%s326 + $0x108] sm:$0xff]
                %347 = vst [vmem:[%s327 + $0x48] sm:$0xff] %v346
                %v348 = vld [vmem:[%s326 + $0x110] sm:$0xff]
                %349 = vst [vmem:[%s327 + $0x50] sm:$0xff] %v348
                %v350 = vld [vmem:[%s326 + $0x118] sm:$0xff]
                %351 = vst [vmem:[%s327 + $0x58] sm:$0xff] %v350
                %v352 = vld [vmem:[%s326 + $0x120] sm:$0xff]
                %353 = vst [vmem:[%s327 + $0x60] sm:$0xff] %v352
                %v354 = vld [vmem:[%s326 + $0x128] sm:$0xff]
                %355 = vst [vmem:[%s327 + $0x68] sm:$0xff] %v354
                %v356 = vld [vmem:[%s326 + $0x130] sm:$0xff]
                %357 = vst [vmem:[%s327 + $0x70] sm:$0xff] %v356
                %v358 = vld [vmem:[%s326 + $0x138] sm:$0xff]
                %359 = vst [vmem:[%s327 + $0x78] sm:$0xff] %v358
                %v360 = vld [vmem:[%s326 + $0x200] sm:$0xff]
                %361 = vst [vmem:[%s327 + $0x80] sm:$0xff] %v360
                %v362 = vld [vmem:[%s326 + $0x208] sm:$0xff]
                %363 = vst [vmem:[%s327 + $0x88] sm:$0xff] %v362
                %v364 = vld [vmem:[%s326 + $0x210] sm:$0xff]
                %365 = vst [vmem:[%s327 + $0x90] sm:$0xff] %v364
                %v366 = vld [vmem:[%s326 + $0x218] sm:$0xff]
                %367 = vst [vmem:[%s327 + $0x98] sm:$0xff] %v366
                %v368 = vld [vmem:[%s326 + $0x220] sm:$0xff]
                %369 = vst [vmem:[%s327 + $0xa0] sm:$0xff] %v368
                %v370 = vld [vmem:[%s326 + $0x228] sm:$0xff]
                %371 = vst [vmem:[%s327 + $0xa8] sm:$0xff] %v370
                %v372 = vld [vmem:[%s326 + $0x230] sm:$0xff]
                %373 = vst [vmem:[%s327 + $0xb0] sm:$0xff] %v372
                %v374 = vld [vmem:[%s326 + $0x238] sm:$0xff]
                %375 = vst [vmem:[%s327 + $0xb8] sm:$0xff] %v374
                %v376 = vld [vmem:[%s326 + $0x300] sm:$0xff]
                %377 = vst [vmem:[%s327 + $0xc0] sm:$0xff] %v376
                %v378 = vld [vmem:[%s326 + $0x308] sm:$0xff]
                %379 = vst [vmem:[%s327 + $0xc8] sm:$0xff] %v378
                %v380 = vld [vmem:[%s326 + $0x310] sm:$0xff]
                %381 = vst [vmem:[%s327 + $0xd0] sm:$0xff] %v380
                %v382 = vld [vmem:[%s326 + $0x318] sm:$0xff]
                %383 = vst [vmem:[%s327 + $0xd8] sm:$0xff] %v382
                %v384 = vld [vmem:[%s326 + $0x320] sm:$0xff]
                %385 = vst [vmem:[%s327 + $0xe0] sm:$0xff] %v384
                %v386 = vld [vmem:[%s326 + $0x328] sm:$0xff]
                %387 = vst [vmem:[%s327 + $0xe8] sm:$0xff] %v386
                %v388 = vld [vmem:[%s326 + $0x330] sm:$0xff]
                %389 = vst [vmem:[%s327 + $0xf0] sm:$0xff] %v388
                %v390 = vld [vmem:[%s326 + $0x338] sm:$0xff]
                %391 = vst [vmem:[%s327 + $0xf8] sm:$0xff] %v390
              $region69: #{tpu_custom_call.1} parent=63 // loop_footer
                %s325 = sadd.s32 1, %s321
              $region70: #{tpu_custom_call.1} parent=63 // loop_footer_branch
                %320 = sbr.rel target = $region66
              $region71: #{tpu_custom_call.1} parent=63 // loop_exit
                _
            $region64: #{tpu_custom_call.1} parent=59 // pred_fallthru
              _
            // Predicated region
            $region72: #{tpu_custom_call.1} parent=59 // pred_check
              _
            $region73: #{tpu_custom_call.1} parent=59 // pred_check_branch
              %393 = sbr.rel target = $region75
            $region74: #{tpu_custom_call.1} parent=59 // pred_region
              _
            $region75: #{tpu_custom_call.1} parent=59 // pred_fallthru
              _
          $region60: #{tpu_custom_call.1} parent=55 // pred_fallthru
            _
          %394 = vnop
        $region56: #{tpu_custom_call.1} parent=51 // pred_fallthru
          _
      $region52: #{tpu_custom_call.1} parent=5 // pred_fallthru
        _
      %p395 = scmp.le.s32.totalorder 1, %s19
      %p396 = scmp.lt.s32.totalorder %s19, 5
      %p397 = pnand %p395, %p396
      %p398 = pneg %p397
      // Predicated region
      $region76: #{tpu_custom_call.1} parent=5 // pred_check
        _
      $region77: #{tpu_custom_call.1} parent=5 // pred_check_branch
        %400 = sbr.rel (%p397) target = $region79
      $region78: #{tpu_custom_call.1} parent=5 // pred_region
        %s401 = ssub.s32 %s19, 1
        %s402 = sand.u32 %s221, 1
        %s403 = sand.u32 %s221, 1
        %s404 = smul.addr %s403, 256
        %s405 = scalar_lea.vmem [#allocation2], %s404
        // Predicated region
        $region80: #{tpu_custom_call.1} parent=78 // pred_check
          %p406 = pneg %p234
        $region81: #{tpu_custom_call.1} parent=78 // pred_check_branch
          %408 = sbr.rel (%p406) target = $region83
        $region82: #{tpu_custom_call.1} parent=78 // pred_region
          _
        $region83: #{tpu_custom_call.1} parent=78 // pred_fallthru
          _
        %p409 = pneg %p40
        %p410 = pneg %p37
        %p411 = pneg %p61
        %p412 = pneg %p58
        %p413 = pneg %p82
        %p414 = pneg %p79
        %p415 = pneg %p103
        %p416 = pneg %p100
        %p417 = pneg %p124
        %p418 = pneg %p121
        %p419 = pneg %p145
        %p420 = pneg %p142
        %p421 = pneg %p166
        %p422 = pneg %p163
        %p423 = pneg %p187
        %p424 = pneg %p184
        %p425 = pneg %p208
        %p426 = pneg %p205
        %s427 = sand.u32 %s221, 1
        %s428 = sand.u32 %s221, 1
        %s429 = smul.addr %s428, 256
        %s430 = scalar_lea.vmem [#allocation2], %s429
        %p431 = pneg %p234
        %p432 = pneg %p231
        %p433 = pneg %p260
        %p434 = pneg %p257
        %s435 = sand.u32 %s247, 1
        %s436 = scalar_lea.sflag [#allocation4], %s435
        %s437 = sand.u32 %s247, 1
        %s438 = smul.addr %s437, 128
        %s439 = scalar_lea.vmem [#allocation3], %s438
        %s440 = smul.u32 16, %s24
        %s441 = smul.u32 16, %s24
        %v443 = vld [vmem:[%s0] sm:$0xff]
        %v444 = vld [vmem:[%s0 + $0x8] sm:$0xff]
        %v445 = vld [vmem:[%s0 + $0x10] sm:$0xff]
        %v446 = vld [vmem:[%s0 + $0x18] sm:$0xff]
        %v447 = vld [vmem:[%s0 + $0x20] sm:$0xff]
        %v448 = vld [vmem:[%s0 + $0x28] sm:$0x3f]
        %v455 = vcombine.high %v443, %v443
        %v457 = vunpack.c.l.s4 1983009808
        %v458 = vunpack.c.0.s8 %v457
        %v459 = vlaneseq
        %v460 = vshrl.u32 %v459, 7
        %v461 = vsub.s32 %v458, %v460
        %v462 = vrot.slane %v443, %v461
        %v464 = vunpack.c.l.s4 1983009808
        %v465 = vunpack.c.0.s8 %v464
        %v466 = vlaneseq
        %v467 = vshrl.u32 %v466, 7
        %v468 = vsub.s32 %v465, %v467
        %v469 = vrot.slane %v455, %v468
        %v470 = vcombine.high %v462, %v462
        %v471 = vcombine.high %v469, %v469
        %v472 = vcombine.high %v444, %v444
        %v474 = vunpack.c.l.s4 1983009808
        %v475 = vunpack.c.0.s8 %v474
        %v476 = vlaneseq
        %v477 = vshrl.u32 %v476, 7
        %v478 = vsub.s32 %v475, %v477
        %v479 = vrot.slane %v444, %v478
        %v481 = vunpack.c.l.s4 1983009808
        %v482 = vunpack.c.0.s8 %v481
        %v483 = vlaneseq
        %v484 = vshrl.u32 %v483, 7
        %v485 = vsub.s32 %v482, %v484
        %v486 = vrot.slane %v472, %v485
        %v487 = vcombine.high %v479, %v479
        %v488 = vcombine.high %v486, %v486
        %v489 = vcombine.high %v445, %v445
        %v491 = vunpack.c.l.s4 1983009808
        %v492 = vunpack.c.0.s8 %v491
        %v493 = vlaneseq
        %v494 = vshrl.u32 %v493, 7
        %v495 = vsub.s32 %v492, %v494
        %v496 = vrot.slane %v445, %v495
        %v498 = vunpack.c.l.s4 1983009808
        %v499 = vunpack.c.0.s8 %v498
        %v500 = vlaneseq
        %v501 = vshrl.u32 %v500, 7
        %v502 = vsub.s32 %v499, %v501
        %v503 = vrot.slane %v489, %v502
        %v504 = vcombine.high %v496, %v496
        %v505 = vcombine.high %v503, %v503
        %v506 = vcombine.high %v446, %v446
        %v508 = vunpack.c.l.s4 1983009808
        %v509 = vunpack.c.0.s8 %v508
        %v510 = vlaneseq
        %v511 = vshrl.u32 %v510, 7
        %v512 = vsub.s32 %v509, %v511
        %v513 = vrot.slane %v446, %v512
        %v515 = vunpack.c.l.s4 1983009808
        %v516 = vunpack.c.0.s8 %v515
        %v517 = vlaneseq
        %v518 = vshrl.u32 %v517, 7
        %v519 = vsub.s32 %v516, %v518
        %v520 = vrot.slane %v506, %v519
        %v521 = vcombine.high %v513, %v513
        %v522 = vcombine.high %v520, %v520
        %v523 = vcombine.high %v447, %v447
        %v525 = vunpack.c.l.s4 1983009808
        %v526 = vunpack.c.0.s8 %v525
        %v527 = vlaneseq
        %v528 = vshrl.u32 %v527, 7
        %v529 = vsub.s32 %v526, %v528
        %v530 = vrot.slane %v447, %v529
        %v532 = vunpack.c.l.s4 1983009808
        %v533 = vunpack.c.0.s8 %v532
        %v534 = vlaneseq
        %v535 = vshrl.u32 %v534, 7
        %v536 = vsub.s32 %v533, %v535
        %v537 = vrot.slane %v523, %v536
        %v538 = vcombine.high %v530, %v530
        %v539 = vcombine.high %v537, %v537
        %v540 = vcombine.high %v448, %v448
        %v542 = vunpack.c.l.s4 1983009808
        %v543 = vunpack.c.0.s8 %v542
        %v544 = vlaneseq
        %v545 = vshrl.u32 %v544, 7
        %v546 = vsub.s32 %v543, %v545
        %v547 = vrot.slane %v448, %v546
        %v549 = vunpack.c.l.s4 1983009808
        %v550 = vunpack.c.0.s8 %v549
        %v551 = vlaneseq
        %v552 = vshrl.u32 %v551, 7
        %v553 = vsub.s32 %v550, %v552
        %v554 = vrot.slane %v540, %v553
        %v555 = vcombine.high %v547, %v547
        %v579 = vpack.c.bf16 %v462, %v462
        %v580 = vpack.c.bf16 %v470, %v470
        %v581 = vpack.c.bf16 %v469, %v469
        %v582 = vpack.c.bf16 %v471, %v471
        %v583 = vpack.c.bf16 %v479, %v479
        %v584 = vpack.c.bf16 %v487, %v487
        %v585 = vpack.c.bf16 %v486, %v486
        %v586 = vpack.c.bf16 %v488, %v488
        %v587 = vpack.c.bf16 %v496, %v496
        %v588 = vpack.c.bf16 %v504, %v504
        %v589 = vpack.c.bf16 %v503, %v503
        %v590 = vpack.c.bf16 %v505, %v505
        %v591 = vpack.c.bf16 %v513, %v513
        %v592 = vpack.c.bf16 %v521, %v521
        %v593 = vpack.c.bf16 %v520, %v520
        %v594 = vpack.c.bf16 %v522, %v522
        %v595 = vpack.c.bf16 %v530, %v530
        %v596 = vpack.c.bf16 %v538, %v538
        %v597 = vpack.c.bf16 %v537, %v537
        %v598 = vpack.c.bf16 %v539, %v539
        %v599 = vpack.c.bf16 %v547, %v547
        %v600 = vpack.c.bf16 %v555, %v555
        %v601 = vpack.c.bf16 %v554, %v554
        %v602 = vld [vmem:[%s1] sm:$0xf]
        %v603 = vld [vmem:[%s1 + $0x4] sm:$0xf]
        %v604 = vld [vmem:[%s1 + $0x8] sm:$0xf]
        %v605 = vld [vmem:[%s1 + $0xc] sm:$0xf]
        %v606 = vld [vmem:[%s1 + $0x10] sm:$0xf]
        %v607 = vld [vmem:[%s1 + $0x14] sm:$0xf]
        %v608 = vld [vmem:[%s1 + $0x18] sm:$0xf]
        %v609 = vld [vmem:[%s1 + $0x1c] sm:$0xf]
        %v610 = vld [vmem:[%s1 + $0x20] sm:$0xf]
        %v611 = vld [vmem:[%s1 + $0x24] sm:$0xf]
        %v612 = vld [vmem:[%s1 + $0x28] sm:$0xf]
        %v613 = vld [vmem:[%s1 + $0x2c] sm:$0xf]
        %v614 = vld [vmem:[%s1 + $0x30] sm:$0xf]
        %v615 = vld [vmem:[%s1 + $0x34] sm:$0xf]
        %v616 = vld [vmem:[%s1 + $0x38] sm:$0xf]
        %v617 = vld [vmem:[%s1 + $0x3c] sm:$0xf]
        %v618 = vld [vmem:[%s1 + $0x40] sm:$0xf]
        %v619 = vld [vmem:[%s1 + $0x44] sm:$0xf]
        %v620 = vld [vmem:[%s1 + $0x48] sm:$0xf]
        %v621 = vld [vmem:[%s1 + $0x4c] sm:$0xf]
        %v622 = vld [vmem:[%s1 + $0x50] sm:$0xf]
        %v623 = vld [vmem:[%s1 + $0x54] sm:$0xf]
        %v624 = vld [vmem:[%s1 + $0x58] sm:$0xf]
        %v625 = vld [vmem:[%s1 + $0x5c] sm:$0xf]
        %v626 = vld [vmem:[%s1 + $0x60] sm:$0xf]
        %v627 = vld [vmem:[%s1 + $0x64] sm:$0xf]
        %v628 = vld [vmem:[%s1 + $0x68] sm:$0xf]
        %v629 = vld [vmem:[%s1 + $0x6c] sm:$0xf]
        %v630 = vld [vmem:[%s1 + $0x70] sm:$0xf]
        %v631 = vld [vmem:[%s1 + $0x74] sm:$0xf]
        %v632 = vld [vmem:[%s1 + $0x78] sm:$0xf]
        %v633 = vld [vmem:[%s1 + $0x7c] sm:$0xf]
        %v634 = vld [vmem:[%s1 + $0x80] sm:$0xf]
        %v635 = vld [vmem:[%s1 + $0x84] sm:$0xf]
        %v636 = vld [vmem:[%s1 + $0x88] sm:$0xf]
        %v637 = vld [vmem:[%s1 + $0x8c] sm:$0xf]
        %v638 = vld [vmem:[%s1 + $0x90] sm:$0xf]
        %v639 = vld [vmem:[%s1 + $0x94] sm:$0xf]
        %v640 = vld [vmem:[%s1 + $0x98] sm:$0xf]
        %v641 = vld [vmem:[%s1 + $0x9c] sm:$0xf]
        %v642 = vld [vmem:[%s1 + $0xa0] sm:$0xf]
        %v643 = vld [vmem:[%s1 + $0xa4] sm:$0xf]
        %v644 = vld [vmem:[%s1 + $0xa8] sm:$0xf]
        %v645 = vld [vmem:[%s1 + $0xac] sm:$0xf]
        %v646 = vld [vmem:[%s1 + $0xb0] sm:$0xf]
        %v647 = vld [vmem:[%s1 + $0xb4] sm:$0xf]
        %v648 = vld [vmem:[%s1 + $0xb8] sm:$0xf]
        %v649 = vld [vmem:[%s1 + $0xbc] sm:$0xf]
        %v650 = vld [vmem:[%s1 + $0xc0] sm:$0xf]
        %v651 = vld [vmem:[%s1 + $0xc4] sm:$0xf]
        %v652 = vld [vmem:[%s1 + $0xc8] sm:$0xf]
        %v653 = vld [vmem:[%s1 + $0xcc] sm:$0xf]
        %v654 = vld [vmem:[%s1 + $0xd0] sm:$0xf]
        %v655 = vld [vmem:[%s1 + $0xd4] sm:$0xf]
        %v656 = vld [vmem:[%s1 + $0xd8] sm:$0xf]
        %v657 = vld [vmem:[%s1 + $0xdc] sm:$0xf]
        %v658 = vld [vmem:[%s1 + $0xe0] sm:$0xf]
        %v659 = vld [vmem:[%s1 + $0xe4] sm:$0xf]
        %v660 = vld [vmem:[%s1 + $0xe8] sm:$0xf]
        %v661 = vld [vmem:[%s1 + $0xec] sm:$0xf]
        %v662 = vld [vmem:[%s1 + $0xf0] sm:$0xf]
        %v663 = vld [vmem:[%s1 + $0xf4] sm:$0xf]
        %v664 = vld [vmem:[%s1 + $0xf8] sm:$0xf]
        %v665 = vld [vmem:[%s1 + $0xfc] sm:$0xf]
        %v666 = vld [vmem:[%s1 + $0x100] sm:$0xf]
        %v667 = vld [vmem:[%s1 + $0x104] sm:$0xf]
        %v668 = vld [vmem:[%s1 + $0x108] sm:$0xf]
        %v669 = vld [vmem:[%s1 + $0x10c] sm:$0xf]
        %v670 = vld [vmem:[%s1 + $0x110] sm:$0xf]
        %v671 = vld [vmem:[%s1 + $0x114] sm:$0xf]
        %v672 = vld [vmem:[%s1 + $0x118] sm:$0xf]
        %v673 = vld [vmem:[%s1 + $0x11c] sm:$0xf]
        %v674 = vld [vmem:[%s1 + $0x120] sm:$0xf]
        %v675 = vld [vmem:[%s1 + $0x124] sm:$0xf]
        %v676 = vld [vmem:[%s1 + $0x128] sm:$0xf]
        %v677 = vld [vmem:[%s1 + $0x12c] sm:$0xf]
        %v678 = vld [vmem:[%s1 + $0x130] sm:$0xf]
        %v679 = vld [vmem:[%s1 + $0x134] sm:$0xf]
        %v680 = vld [vmem:[%s1 + $0x138] sm:$0xf]
        %v681 = vld [vmem:[%s1 + $0x13c] sm:$0xf]
        %v682 = vld [vmem:[%s1 + $0x140] sm:$0xf]
        %v683 = vld [vmem:[%s1 + $0x144] sm:$0xf]
        %v684 = vld [vmem:[%s1 + $0x148] sm:$0xf]
        %v685 = vld [vmem:[%s1 + $0x14c] sm:$0xf]
        %v686 = vld [vmem:[%s1 + $0x150] sm:$0xf]
        %v687 = vld [vmem:[%s1 + $0x154] sm:$0xf]
        %v688 = vld [vmem:[%s1 + $0x158] sm:$0xf]
        %v689 = vld [vmem:[%s1 + $0x15c] sm:$0xf]
        %v690 = vld [vmem:[%s1 + $0x160] sm:$0xf]
        %v691 = vld [vmem:[%s1 + $0x164] sm:$0xf]
        %v692 = vld [vmem:[%s1 + $0x168] sm:$0xf]
        %v693 = vld [vmem:[%s1 + $0x16c] sm:$0xf]
        %v694 = vld [vmem:[%s1 + $0x170] sm:$0xf]
        %v695 = vld [vmem:[%s1 + $0x174] sm:$0xf]
        %v696 = vld [vmem:[%s1 + $0x178] sm:$0xf]
        %v697 = vld [vmem:[%s1 + $0x17c] sm:$0xf]
        %v698 = vld [vmem:[%s1 + $0x180] sm:$0xf]
        %v699 = vld [vmem:[%s1 + $0x184] sm:$0xf]
        %v700 = vld [vmem:[%s1 + $0x188] sm:$0xf]
        %v701 = vld [vmem:[%s1 + $0x18c] sm:$0xf]
        %v702 = vld [vmem:[%s1 + $0x190] sm:$0xf]
        %v703 = vld [vmem:[%s1 + $0x194] sm:$0xf]
        %v704 = vld [vmem:[%s1 + $0x198] sm:$0xf]
        %v705 = vld [vmem:[%s1 + $0x19c] sm:$0xf]
        %v706 = vld [vmem:[%s1 + $0x1a0] sm:$0xf]
        %v707 = vld [vmem:[%s1 + $0x1a4] sm:$0xf]
        %v708 = vld [vmem:[%s1 + $0x1a8] sm:$0xf]
        %v709 = vld [vmem:[%s1 + $0x1ac] sm:$0xf]
        %v710 = vld [vmem:[%s1 + $0x1b0] sm:$0xf]
        %v711 = vld [vmem:[%s1 + $0x1b4] sm:$0xf]
        %v712 = vld [vmem:[%s1 + $0x1b8] sm:$0xf]
        %v713 = vld [vmem:[%s1 + $0x1bc] sm:$0xf]
        %v714 = vld [vmem:[%s1 + $0x1c0] sm:$0xf]
        %v715 = vld [vmem:[%s1 + $0x1c4] sm:$0xf]
        %v716 = vld [vmem:[%s1 + $0x1c8] sm:$0xf]
        %v717 = vld [vmem:[%s1 + $0x1cc] sm:$0xf]
        %v718 = vld [vmem:[%s1 + $0x1d0] sm:$0xf]
        %v719 = vld [vmem:[%s1 + $0x1d4] sm:$0xf]
        %v720 = vld [vmem:[%s1 + $0x1d8] sm:$0xf]
        %v721 = vld [vmem:[%s1 + $0x1dc] sm:$0xf]
        %v722 = vld [vmem:[%s1 + $0x1e0] sm:$0xf]
        %v723 = vld [vmem:[%s1 + $0x1e4] sm:$0xf]
        %v724 = vld [vmem:[%s1 + $0x1e8] sm:$0xf]
        %v725 = vld [vmem:[%s1 + $0x1ec] sm:$0xf]
        %v726 = vld [vmem:[%s1 + $0x1f0] sm:$0xf]
        %v727 = vld [vmem:[%s1 + $0x1f4] sm:$0xf]
        %v728 = vld [vmem:[%s1 + $0x1f8] sm:$0xf]
        %v729 = vld [vmem:[%s1 + $0x1fc] sm:$0xf]
        %v730 = vld [vmem:[%s1 + $0x200] sm:$0xf]
        %v731 = vld [vmem:[%s1 + $0x204] sm:$0xf]
        %v732 = vld [vmem:[%s1 + $0x208] sm:$0xf]
        %v733 = vld [vmem:[%s1 + $0x20c] sm:$0xf]
        %v734 = vld [vmem:[%s1 + $0x210] sm:$0xf]
        %v735 = vld [vmem:[%s1 + $0x214] sm:$0xf]
        %v736 = vld [vmem:[%s1 + $0x218] sm:$0xf]
        %v737 = vld [vmem:[%s1 + $0x21c] sm:$0xf]
        %v738 = vld [vmem:[%s1 + $0x220] sm:$0xf]
        %v739 = vld [vmem:[%s1 + $0x224] sm:$0xf]
        %v740 = vld [vmem:[%s1 + $0x228] sm:$0xf]
        %v741 = vld [vmem:[%s1 + $0x22c] sm:$0xf]
        %v742 = vld [vmem:[%s1 + $0x230] sm:$0xf]
        %v743 = vld [vmem:[%s1 + $0x234] sm:$0xf]
        %v744 = vld [vmem:[%s1 + $0x238] sm:$0xf]
        %v745 = vld [vmem:[%s1 + $0x23c] sm:$0xf]
        %v746 = vld [vmem:[%s1 + $0x240] sm:$0xf]
        %v747 = vld [vmem:[%s1 + $0x244] sm:$0xf]
        %v748 = vld [vmem:[%s1 + $0x248] sm:$0xf]
        %v749 = vld [vmem:[%s1 + $0x24c] sm:$0xf]
        %v750 = vld [vmem:[%s1 + $0x250] sm:$0xf]
        %v751 = vld [vmem:[%s1 + $0x254] sm:$0xf]
        %v752 = vld [vmem:[%s1 + $0x258] sm:$0xf]
        %v753 = vld [vmem:[%s1 + $0x25c] sm:$0xf]
        %v754 = vld [vmem:[%s1 + $0x260] sm:$0xf]
        %v755 = vld [vmem:[%s1 + $0x264] sm:$0xf]
        %v756 = vld [vmem:[%s1 + $0x268] sm:$0xf]
        %v757 = vld [vmem:[%s1 + $0x26c] sm:$0xf]
        %v758 = vld [vmem:[%s1 + $0x270] sm:$0xf]
        %v759 = vld [vmem:[%s1 + $0x274] sm:$0xf]
        %v760 = vld [vmem:[%s1 + $0x278] sm:$0xf]
        %v761 = vld [vmem:[%s1 + $0x27c] sm:$0xf]
        %v762 = vld [vmem:[%s1 + $0x280] sm:$0xf]
        %v763 = vld [vmem:[%s1 + $0x284] sm:$0xf]
        %v764 = vld [vmem:[%s1 + $0x288] sm:$0xf]
        %v765 = vld [vmem:[%s1 + $0x28c] sm:$0xf]
        %v766 = vld [vmem:[%s1 + $0x290] sm:$0xf]
        %v767 = vld [vmem:[%s1 + $0x294] sm:$0xf]
        %v768 = vld [vmem:[%s1 + $0x298] sm:$0xf]
        %v769 = vld [vmem:[%s1 + $0x29c] sm:$0xf]
        %v770 = vld [vmem:[%s1 + $0x2a0] sm:$0xf]
        %v771 = vld [vmem:[%s1 + $0x2a4] sm:$0xf]
        %v772 = vld [vmem:[%s1 + $0x2a8] sm:$0xf]
        %v773 = vld [vmem:[%s1 + $0x2ac] sm:$0xf]
        %v774 = vld [vmem:[%s1 + $0x2b0] sm:$0xf]
        %v775 = vld [vmem:[%s1 + $0x2b4] sm:$0xf]
        %v776 = vld [vmem:[%s1 + $0x2b8] sm:$0xf]
        %v777 = vld [vmem:[%s1 + $0x2bc] sm:$0xf]
        %v778 = vld [vmem:[%s1 + $0x2c0] sm:$0xf]
        %v779 = vld [vmem:[%s1 + $0x2c4] sm:$0xf]
        %v780 = vld [vmem:[%s1 + $0x2c8] sm:$0xf]
        %v781 = vld [vmem:[%s1 + $0x2cc] sm:$0xf]
        %v782 = vld [vmem:[%s1 + $0x2d0] sm:$0xf]
        %v783 = vld [vmem:[%s1 + $0x2d4] sm:$0xf]
        %v784 = vld [vmem:[%s1 + $0x2d8] sm:$0xf]
        %v785 = vld [vmem:[%s1 + $0x2dc] sm:$0xf]
        %v786 = vld [vmem:[%s1 + $0x2e0] sm:$0xf]
        %v787 = vld [vmem:[%s1 + $0x2e4] sm:$0xf]
        %v788 = vld [vmem:[%s1 + $0x2e8] sm:$0xf]
        %v789 = vld [vmem:[%s1 + $0x2ec] sm:$0xf]
        %v790 = vld [vmem:[%s1 + $0x2f0] sm:$0xf]
        %v791 = vld [vmem:[%s1 + $0x2f4] sm:$0xf]
        %v792 = vld [vmem:[%s1 + $0x2f8] sm:$0xf]
        %v793 = vld [vmem:[%s1 + $0x2fc] sm:$0xf]
        %v794 = vld [vmem:[%s1 + $0x300] sm:$0xf]
        %v795 = vld [vmem:[%s1 + $0x304] sm:$0xf]
        %v796 = vld [vmem:[%s1 + $0x308] sm:$0xf]
        %v797 = vld [vmem:[%s1 + $0x30c] sm:$0xf]
        %v798 = vld [vmem:[%s1 + $0x310] sm:$0xf]
        %v799 = vld [vmem:[%s1 + $0x314] sm:$0xf]
        %v800 = vld [vmem:[%s1 + $0x318] sm:$0xf]
        %v801 = vld [vmem:[%s1 + $0x31c] sm:$0xf]
        %v802 = vld [vmem:[%s1 + $0x320] sm:$0xf]
        %v803 = vld [vmem:[%s1 + $0x324] sm:$0xf]
        %v804 = vld [vmem:[%s1 + $0x328] sm:$0xf]
        %v805 = vld [vmem:[%s1 + $0x32c] sm:$0xf]
        %v806 = vld [vmem:[%s1 + $0x330] sm:$0xf]
        %v807 = vld [vmem:[%s1 + $0x334] sm:$0xf]
        %v808 = vld [vmem:[%s1 + $0x338] sm:$0xf]
        %v809 = vld [vmem:[%s1 + $0x33c] sm:$0xf]
        %v810 = vld [vmem:[%s1 + $0x340] sm:$0xf]
        %v811 = vld [vmem:[%s1 + $0x344] sm:$0xf]
        %v812 = vld [vmem:[%s1 + $0x348] sm:$0xf]
        %v813 = vld [vmem:[%s1 + $0x34c] sm:$0xf]
        %v814 = vld [vmem:[%s1 + $0x350] sm:$0xf]
        %v815 = vld [vmem:[%s1 + $0x354] sm:$0xf]
        %v816 = vld [vmem:[%s1 + $0x358] sm:$0xf]
        %v817 = vld [vmem:[%s1 + $0x35c] sm:$0xf]
        %v818 = vld [vmem:[%s1 + $0x360] sm:$0xf]
        %v819 = vld [vmem:[%s1 + $0x364] sm:$0xf]
        %v820 = vld [vmem:[%s1 + $0x368] sm:$0xf]
        %v821 = vld [vmem:[%s1 + $0x36c] sm:$0xf]
        %v822 = vld [vmem:[%s1 + $0x370] sm:$0xf]
        %v823 = vld [vmem:[%s1 + $0x374] sm:$0xf]
        %v824 = vld [vmem:[%s1 + $0x378] sm:$0xf]
        %v825 = vld [vmem:[%s1 + $0x37c] sm:$0xf]
        %v826 = vld [vmem:[%s1 + $0x380] sm:$0xf]
        %v827 = vld [vmem:[%s1 + $0x384] sm:$0xf]
        %v828 = vld [vmem:[%s1 + $0x388] sm:$0xf]
        %v829 = vld [vmem:[%s1 + $0x38c] sm:$0xf]
        %v830 = vld [vmem:[%s1 + $0x390] sm:$0xf]
        %v831 = vld [vmem:[%s1 + $0x394] sm:$0xf]
        %v832 = vld [vmem:[%s1 + $0x398] sm:$0xf]
        %v833 = vld [vmem:[%s1 + $0x39c] sm:$0xf]
        %v834 = vld [vmem:[%s1 + $0x3a0] sm:$0xf]
        %v835 = vld [vmem:[%s1 + $0x3a4] sm:$0xf]
        %v836 = vld [vmem:[%s1 + $0x3a8] sm:$0xf]
        %v837 = vld [vmem:[%s1 + $0x3ac] sm:$0xf]
        %v838 = vld [vmem:[%s1 + $0x3b0] sm:$0xf]
        %v839 = vld [vmem:[%s1 + $0x3b4] sm:$0xf]
        %v840 = vld [vmem:[%s1 + $0x3b8] sm:$0xf]
        %v841 = vld [vmem:[%s1 + $0x3bc] sm:$0xf]
        %v842 = vld [vmem:[%s1 + $0x3c0] sm:$0xf]
        %v843 = vld [vmem:[%s1 + $0x3c4] sm:$0xf]
        %v844 = vld [vmem:[%s1 + $0x3c8] sm:$0xf]
        %v845 = vld [vmem:[%s1 + $0x3cc] sm:$0xf]
        %v846 = vld [vmem:[%s1 + $0x3d0] sm:$0xf]
        %v847 = vld [vmem:[%s1 + $0x3d4] sm:$0xf]
        %v848 = vld [vmem:[%s1 + $0x3d8] sm:$0xf]
        %v849 = vld [vmem:[%s1 + $0x3dc] sm:$0xf]
        %v850 = vld [vmem:[%s1 + $0x3e0] sm:$0xf]
        %v851 = vld [vmem:[%s1 + $0x3e4] sm:$0xf]
        %v852 = vld [vmem:[%s1 + $0x3e8] sm:$0xf]
        %v853 = vld [vmem:[%s1 + $0x3ec] sm:$0xf]
        %v854 = vld [vmem:[%s1 + $0x3f0] sm:$0xf]
        %v855 = vld [vmem:[%s1 + $0x3f4] sm:$0xf]
        %v856 = vld [vmem:[%s1 + $0x3f8] sm:$0xf]
        %v857 = vld [vmem:[%s1 + $0x3fc] sm:$0xf]
        %v858 = vld [vmem:[%s1 + $0x400] sm:$0xf]
        %v859 = vld [vmem:[%s1 + $0x404] sm:$0xf]
        %v860 = vld [vmem:[%s1 + $0x408] sm:$0xf]
        %v861 = vld [vmem:[%s1 + $0x40c] sm:$0xf]
        %v862 = vld [vmem:[%s1 + $0x410] sm:$0xf]
        %v863 = vld [vmem:[%s1 + $0x414] sm:$0xf]
        %v864 = vld [vmem:[%s1 + $0x418] sm:$0xf]
        %v865 = vld [vmem:[%s1 + $0x41c] sm:$0xf]
        %v866 = vld [vmem:[%s1 + $0x420] sm:$0xf]
        %v867 = vld [vmem:[%s1 + $0x424] sm:$0xf]
        %v868 = vld [vmem:[%s1 + $0x428] sm:$0xf]
        %v869 = vld [vmem:[%s1 + $0x42c] sm:$0xf]
        %v870 = vld [vmem:[%s1 + $0x430] sm:$0xf]
        %v871 = vld [vmem:[%s1 + $0x434] sm:$0xf]
        %v872 = vld [vmem:[%s1 + $0x438] sm:$0xf]
        %v873 = vld [vmem:[%s1 + $0x43c] sm:$0xf]
        %v874 = vld [vmem:[%s1 + $0x440] sm:$0xf]
        %v875 = vld [vmem:[%s1 + $0x444] sm:$0xf]
        %v876 = vld [vmem:[%s1 + $0x448] sm:$0xf]
        %v877 = vld [vmem:[%s1 + $0x44c] sm:$0xf]
        %v878 = vld [vmem:[%s1 + $0x450] sm:$0xf]
        %v879 = vld [vmem:[%s1 + $0x454] sm:$0xf]
        %v880 = vld [vmem:[%s1 + $0x458] sm:$0xf]
        %v881 = vld [vmem:[%s1 + $0x45c] sm:$0xf]
        %v882 = vld [vmem:[%s1 + $0x460] sm:$0xf]
        %v883 = vld [vmem:[%s1 + $0x464] sm:$0xf]
        %v884 = vld [vmem:[%s1 + $0x468] sm:$0xf]
        %v885 = vld [vmem:[%s1 + $0x46c] sm:$0xf]
        %v886 = vld [vmem:[%s1 + $0x470] sm:$0xf]
        %v887 = vld [vmem:[%s1 + $0x474] sm:$0xf]
        %v888 = vld [vmem:[%s1 + $0x478] sm:$0xf]
        %v889 = vld [vmem:[%s1 + $0x47c] sm:$0xf]
        %v890 = vld [vmem:[%s1 + $0x480] sm:$0xf]
        %v891 = vld [vmem:[%s1 + $0x484] sm:$0xf]
        %v892 = vld [vmem:[%s1 + $0x488] sm:$0xf]
        %v893 = vld [vmem:[%s1 + $0x48c] sm:$0xf]
        %v894 = vld [vmem:[%s1 + $0x490] sm:$0xf]
        %v895 = vld [vmem:[%s1 + $0x494] sm:$0xf]
        %v896 = vld [vmem:[%s1 + $0x498] sm:$0xf]
        %v897 = vld [vmem:[%s1 + $0x49c] sm:$0xf]
        %v898 = vld [vmem:[%s1 + $0x4a0] sm:$0xf]
        %v899 = vld [vmem:[%s1 + $0x4a4] sm:$0xf]
        %v900 = vld [vmem:[%s1 + $0x4a8] sm:$0xf]
        %v901 = vld [vmem:[%s1 + $0x4ac] sm:$0xf]
        %v902 = vld [vmem:[%s1 + $0x4b0] sm:$0xf]
        %v903 = vld [vmem:[%s1 + $0x4b4] sm:$0xf]
        %v904 = vld [vmem:[%s1 + $0x4b8] sm:$0xf]
        %v905 = vld [vmem:[%s1 + $0x4bc] sm:$0xf]
        %v906 = vld [vmem:[%s1 + $0x4c0] sm:$0xf]
        %v907 = vld [vmem:[%s1 + $0x4c4] sm:$0xf]
        %v908 = vld [vmem:[%s1 + $0x4c8] sm:$0xf]
        %v909 = vld [vmem:[%s1 + $0x4cc] sm:$0xf]
        %v910 = vld [vmem:[%s1 + $0x4d0] sm:$0xf]
        %v911 = vld [vmem:[%s1 + $0x4d4] sm:$0xf]
        %v912 = vld [vmem:[%s1 + $0x4d8] sm:$0xf]
        %v913 = vld [vmem:[%s1 + $0x4dc] sm:$0xf]
        %v914 = vld [vmem:[%s1 + $0x4e0] sm:$0xf]
        %v915 = vld [vmem:[%s1 + $0x4e4] sm:$0xf]
        %v916 = vld [vmem:[%s1 + $0x4e8] sm:$0xf]
        %v917 = vld [vmem:[%s1 + $0x4ec] sm:$0xf]
        %v918 = vld [vmem:[%s1 + $0x4f0] sm:$0xf]
        %v919 = vld [vmem:[%s1 + $0x4f4] sm:$0xf]
        %v920 = vld [vmem:[%s1 + $0x4f8] sm:$0xf]
        %v921 = vld [vmem:[%s1 + $0x4fc] sm:$0xf]
        %v922 = vld [vmem:[%s1 + $0x500] sm:$0xf]
        %v923 = vld [vmem:[%s1 + $0x504] sm:$0xf]
        %v924 = vld [vmem:[%s1 + $0x508] sm:$0xf]
        %v925 = vld [vmem:[%s1 + $0x50c] sm:$0xf]
        %v926 = vld [vmem:[%s1 + $0x510] sm:$0xf]
        %v927 = vld [vmem:[%s1 + $0x514] sm:$0xf]
        %v928 = vld [vmem:[%s1 + $0x518] sm:$0xf]
        %v929 = vld [vmem:[%s1 + $0x51c] sm:$0xf]
        %v930 = vld [vmem:[%s1 + $0x520] sm:$0xf]
        %v931 = vld [vmem:[%s1 + $0x524] sm:$0xf]
        %v932 = vld [vmem:[%s1 + $0x528] sm:$0xf]
        %v933 = vld [vmem:[%s1 + $0x52c] sm:$0xf]
        %v934 = vld [vmem:[%s1 + $0x530] sm:$0xf]
        %v935 = vld [vmem:[%s1 + $0x534] sm:$0xf]
        %v936 = vld [vmem:[%s1 + $0x538] sm:$0xf]
        %v937 = vld [vmem:[%s1 + $0x53c] sm:$0xf]
        %v938 = vld [vmem:[%s1 + $0x540] sm:$0xf]
        %v939 = vld [vmem:[%s1 + $0x544] sm:$0xf]
        %v940 = vld [vmem:[%s1 + $0x548] sm:$0xf]
        %v941 = vld [vmem:[%s1 + $0x54c] sm:$0xf]
        %v942 = vld [vmem:[%s1 + $0x550] sm:$0xf]
        %v943 = vld [vmem:[%s1 + $0x554] sm:$0xf]
        %v944 = vld [vmem:[%s1 + $0x558] sm:$0xf]
        %v945 = vld [vmem:[%s1 + $0x55c] sm:$0xf]
        %v946 = vld [vmem:[%s1 + $0x560] sm:$0xf]
        %v947 = vld [vmem:[%s1 + $0x564] sm:$0xf]
        %v948 = vld [vmem:[%s1 + $0x568] sm:$0xf]
        %v949 = vld [vmem:[%s1 + $0x56c] sm:$0xf]
        %v950 = vld [vmem:[%s1 + $0x570] sm:$0xf]
        %v951 = vld [vmem:[%s1 + $0x574] sm:$0xf]
        %v952 = vld [vmem:[%s1 + $0x578] sm:$0xf]
        %v953 = vld [vmem:[%s1 + $0x57c] sm:$0xf]
        %v954 = vld [vmem:[%s1 + $0x580] sm:$0xf]
        %v955 = vld [vmem:[%s1 + $0x584] sm:$0xf]
        %v956 = vld [vmem:[%s1 + $0x588] sm:$0xf]
        %v957 = vld [vmem:[%s1 + $0x58c] sm:$0xf]
        %v958 = vld [vmem:[%s1 + $0x590] sm:$0xf]
        %v959 = vld [vmem:[%s1 + $0x594] sm:$0xf]
        %v960 = vld [vmem:[%s1 + $0x598] sm:$0xf]
        %v961 = vld [vmem:[%s1 + $0x59c] sm:$0xf]
        %v962 = vld [vmem:[%s2] sm:$0x1]
        %v964 = vlaneseq
        %v965 = vshrl.u32 %v964, 7
        %v966 = vsub.s32 0, %v965
        %v967 = vrot.slane %v962, %v966
        %v1329 = vunpack.c.l.b16 %v602
        %v1330 = vunpack.c.l.b16 %v603
        %v1331 = vunpack.c.l.b16 %v604
        %v1332 = vunpack.c.l.b16 %v605
        %v1333 = vunpack.c.l.b16 %v606
        %v1334 = vunpack.c.l.b16 %v607
        %v1335 = vunpack.c.l.b16 %v608
        %v1336 = vunpack.c.l.b16 %v609
        %v1337 = vunpack.c.l.b16 %v610
        %v1338 = vunpack.c.l.b16 %v611
        %v1339 = vunpack.c.l.b16 %v612
        %v1340 = vunpack.c.l.b16 %v613
        %v1341 = vunpack.c.l.b16 %v614
        %v1342 = vunpack.c.l.b16 %v615
        %v1343 = vunpack.c.l.b16 %v616
        %v1344 = vunpack.c.l.b16 %v617
        %v1345 = vunpack.c.l.b16 %v618
        %v1346 = vunpack.c.l.b16 %v619
        %v1347 = vunpack.c.l.b16 %v620
        %v1348 = vunpack.c.l.b16 %v621
        %v1349 = vunpack.c.l.b16 %v622
        %v1350 = vunpack.c.l.b16 %v623
        %v1351 = vunpack.c.l.b16 %v624
        %v1352 = vunpack.c.l.b16 %v625
        %v1353 = vunpack.c.l.b16 %v626
        %v1354 = vunpack.c.l.b16 %v627
        %v1355 = vunpack.c.l.b16 %v628
        %v1356 = vunpack.c.l.b16 %v629
        %v1357 = vunpack.c.l.b16 %v630
        %v1358 = vunpack.c.l.b16 %v631
        %v1359 = vunpack.c.l.b16 %v632
        %v1360 = vunpack.c.l.b16 %v633
        %v1361 = vunpack.c.l.b16 %v634
        %v1362 = vunpack.c.l.b16 %v635
        %v1363 = vunpack.c.l.b16 %v636
        %v1364 = vunpack.c.l.b16 %v637
        %v1365 = vunpack.c.l.b16 %v638
        %v1366 = vunpack.c.l.b16 %v639
        %v1367 = vunpack.c.l.b16 %v640
        %v1368 = vunpack.c.l.b16 %v641
        %v1369 = vunpack.c.l.b16 %v642
        %v1370 = vunpack.c.l.b16 %v643
        %v1371 = vunpack.c.l.b16 %v644
        %v1372 = vunpack.c.l.b16 %v645
        %v1373 = vunpack.c.l.b16 %v646
        %v1374 = vunpack.c.l.b16 %v647
        %v1375 = vunpack.c.l.b16 %v648
        %v1376 = vunpack.c.l.b16 %v649
        %v1377 = vunpack.c.l.b16 %v650
        %v1378 = vunpack.c.l.b16 %v651
        %v1379 = vunpack.c.l.b16 %v652
        %v1380 = vunpack.c.l.b16 %v653
        %v1381 = vunpack.c.l.b16 %v654
        %v1382 = vunpack.c.l.b16 %v655
        %v1383 = vunpack.c.l.b16 %v656
        %v1384 = vunpack.c.l.b16 %v657
        %v1385 = vunpack.c.l.b16 %v658
        %v1386 = vunpack.c.l.b16 %v659
        %v1387 = vunpack.c.l.b16 %v660
        %v1388 = vunpack.c.l.b16 %v661
        %v1389 = vunpack.c.l.b16 %v662
        %v1390 = vunpack.c.l.b16 %v663
        %v1391 = vunpack.c.l.b16 %v664
        %v1392 = vunpack.c.l.b16 %v665
        %v1393 = vunpack.c.l.b16 %v666
        %v1394 = vunpack.c.l.b16 %v667
        %v1395 = vunpack.c.l.b16 %v668
        %v1396 = vunpack.c.l.b16 %v669
        %v1397 = vunpack.c.l.b16 %v670
        %v1398 = vunpack.c.l.b16 %v671
        %v1399 = vunpack.c.l.b16 %v672
        %v1400 = vunpack.c.l.b16 %v673
        %v1401 = vunpack.c.l.b16 %v674
        %v1402 = vunpack.c.l.b16 %v675
        %v1403 = vunpack.c.l.b16 %v676
        %v1404 = vunpack.c.l.b16 %v677
        %v1405 = vunpack.c.l.b16 %v678
        %v1406 = vunpack.c.l.b16 %v679
        %v1407 = vunpack.c.l.b16 %v680
        %v1408 = vunpack.c.l.b16 %v681
        %v1409 = vunpack.c.l.b16 %v682
        %v1410 = vunpack.c.l.b16 %v683
        %v1411 = vunpack.c.l.b16 %v684
        %v1412 = vunpack.c.l.b16 %v685
        %v1413 = vunpack.c.l.b16 %v686
        %v1414 = vunpack.c.l.b16 %v687
        %v1415 = vunpack.c.l.b16 %v688
        %v1416 = vunpack.c.l.b16 %v689
        %v1417 = vunpack.c.l.b16 %v690
        %v1418 = vunpack.c.l.b16 %v691
        %v1419 = vunpack.c.l.b16 %v692
        %v1420 = vunpack.c.l.b16 %v693
        %v1421 = vunpack.c.l.b16 %v694
        %v1422 = vunpack.c.l.b16 %v695
        %v1423 = vunpack.c.l.b16 %v696
        %v1424 = vunpack.c.l.b16 %v697
        %v1425 = vunpack.c.l.b16 %v698
        %v1426 = vunpack.c.l.b16 %v699
        %v1427 = vunpack.c.l.b16 %v700
        %v1428 = vunpack.c.l.b16 %v701
        %v1429 = vunpack.c.l.b16 %v702
        %v1430 = vunpack.c.l.b16 %v703
        %v1431 = vunpack.c.l.b16 %v704
        %v1432 = vunpack.c.l.b16 %v705
        %v1433 = vunpack.c.l.b16 %v706
        %v1434 = vunpack.c.l.b16 %v707
        %v1435 = vunpack.c.l.b16 %v708
        %v1436 = vunpack.c.l.b16 %v709
        %v1437 = vunpack.c.l.b16 %v710
        %v1438 = vunpack.c.l.b16 %v711
        %v1439 = vunpack.c.l.b16 %v712
        %v1440 = vunpack.c.l.b16 %v713
        %v1441 = vunpack.c.l.b16 %v714
        %v1442 = vunpack.c.l.b16 %v715
        %v1443 = vunpack.c.l.b16 %v716
        %v1444 = vunpack.c.l.b16 %v717
        %v1445 = vunpack.c.l.b16 %v718
        %v1446 = vunpack.c.l.b16 %v719
        %v1447 = vunpack.c.l.b16 %v720
        %v1448 = vunpack.c.l.b16 %v721
        %v1449 = vunpack.c.l.b16 %v722
        %v1450 = vunpack.c.l.b16 %v723
        %v1451 = vunpack.c.l.b16 %v724
        %v1452 = vunpack.c.l.b16 %v725
        %v1453 = vunpack.c.l.b16 %v726
        %v1454 = vunpack.c.l.b16 %v727
        %v1455 = vunpack.c.l.b16 %v728
        %v1456 = vunpack.c.l.b16 %v729
        %v1457 = vunpack.c.l.b16 %v730
        %v1458 = vunpack.c.l.b16 %v731
        %v1459 = vunpack.c.l.b16 %v732
        %v1460 = vunpack.c.l.b16 %v733
        %v1461 = vunpack.c.l.b16 %v734
        %v1462 = vunpack.c.l.b16 %v735
        %v1463 = vunpack.c.l.b16 %v736
        %v1464 = vunpack.c.l.b16 %v737
        %v1465 = vunpack.c.l.b16 %v738
        %v1466 = vunpack.c.l.b16 %v739
        %v1467 = vunpack.c.l.b16 %v740
        %v1468 = vunpack.c.l.b16 %v741
        %v1469 = vunpack.c.l.b16 %v742
        %v1470 = vunpack.c.l.b16 %v743
        %v1471 = vunpack.c.l.b16 %v744
        %v1472 = vunpack.c.l.b16 %v745
        %v1473 = vunpack.c.l.b16 %v746
        %v1474 = vunpack.c.l.b16 %v747
        %v1475 = vunpack.c.l.b16 %v748
        %v1476 = vunpack.c.l.b16 %v749
        %v1477 = vunpack.c.l.b16 %v750
        %v1478 = vunpack.c.l.b16 %v751
        %v1479 = vunpack.c.l.b16 %v752
        %v1480 = vunpack.c.l.b16 %v753
        %v1481 = vunpack.c.l.b16 %v754
        %v1482 = vunpack.c.l.b16 %v755
        %v1483 = vunpack.c.l.b16 %v756
        %v1484 = vunpack.c.l.b16 %v757
        %v1485 = vunpack.c.l.b16 %v758
        %v1486 = vunpack.c.l.b16 %v759
        %v1487 = vunpack.c.l.b16 %v760
        %v1488 = vunpack.c.l.b16 %v761
        %v1489 = vunpack.c.l.b16 %v762
        %v1490 = vunpack.c.l.b16 %v763
        %v1491 = vunpack.c.l.b16 %v764
        %v1492 = vunpack.c.l.b16 %v765
        %v1493 = vunpack.c.l.b16 %v766
        %v1494 = vunpack.c.l.b16 %v767
        %v1495 = vunpack.c.l.b16 %v768
        %v1496 = vunpack.c.l.b16 %v769
        %v1497 = vunpack.c.l.b16 %v770
        %v1498 = vunpack.c.l.b16 %v771
        %v1499 = vunpack.c.l.b16 %v772
        %v1500 = vunpack.c.l.b16 %v773
        %v1501 = vunpack.c.l.b16 %v774
        %v1502 = vunpack.c.l.b16 %v775
        %v1503 = vunpack.c.l.b16 %v776
        %v1504 = vunpack.c.l.b16 %v777
        %v1505 = vunpack.c.l.b16 %v778
        %v1506 = vunpack.c.l.b16 %v779
        %v1507 = vunpack.c.l.b16 %v780
        %v1508 = vunpack.c.l.b16 %v781
        %v1509 = vunpack.c.l.b16 %v782
        %v1510 = vunpack.c.l.b16 %v783
        %v1511 = vunpack.c.l.b16 %v784
        %v1512 = vunpack.c.l.b16 %v785
        %v1513 = vunpack.c.l.b16 %v786
        %v1514 = vunpack.c.l.b16 %v787
        %v1515 = vunpack.c.l.b16 %v788
        %v1516 = vunpack.c.l.b16 %v789
        %v1517 = vunpack.c.l.b16 %v790
        %v1518 = vunpack.c.l.b16 %v791
        %v1519 = vunpack.c.l.b16 %v792
        %v1520 = vunpack.c.l.b16 %v793
        %v1521 = vunpack.c.l.b16 %v794
        %v1522 = vunpack.c.l.b16 %v795
        %v1523 = vunpack.c.l.b16 %v796
        %v1524 = vunpack.c.l.b16 %v797
        %v1525 = vunpack.c.l.b16 %v798
        %v1526 = vunpack.c.l.b16 %v799
        %v1527 = vunpack.c.l.b16 %v800
        %v1528 = vunpack.c.l.b16 %v801
        %v1529 = vunpack.c.l.b16 %v802
        %v1530 = vunpack.c.l.b16 %v803
        %v1531 = vunpack.c.l.b16 %v804
        %v1532 = vunpack.c.l.b16 %v805
        %v1533 = vunpack.c.l.b16 %v806
        %v1534 = vunpack.c.l.b16 %v807
        %v1535 = vunpack.c.l.b16 %v808
        %v1536 = vunpack.c.l.b16 %v809
        %v1537 = vunpack.c.l.b16 %v810
        %v1538 = vunpack.c.l.b16 %v811
        %v1539 = vunpack.c.l.b16 %v812
        %v1540 = vunpack.c.l.b16 %v813
        %v1541 = vunpack.c.l.b16 %v814
        %v1542 = vunpack.c.l.b16 %v815
        %v1543 = vunpack.c.l.b16 %v816
        %v1544 = vunpack.c.l.b16 %v817
        %v1545 = vunpack.c.l.b16 %v818
        %v1546 = vunpack.c.l.b16 %v819
        %v1547 = vunpack.c.l.b16 %v820
        %v1548 = vunpack.c.l.b16 %v821
        %v1549 = vunpack.c.l.b16 %v822
        %v1550 = vunpack.c.l.b16 %v823
        %v1551 = vunpack.c.l.b16 %v824
        %v1552 = vunpack.c.l.b16 %v825
        %v1553 = vunpack.c.l.b16 %v826
        %v1554 = vunpack.c.l.b16 %v827
        %v1555 = vunpack.c.l.b16 %v828
        %v1556 = vunpack.c.l.b16 %v829
        %v1557 = vunpack.c.l.b16 %v830
        %v1558 = vunpack.c.l.b16 %v831
        %v1559 = vunpack.c.l.b16 %v832
        %v1560 = vunpack.c.l.b16 %v833
        %v1561 = vunpack.c.l.b16 %v834
        %v1562 = vunpack.c.l.b16 %v835
        %v1563 = vunpack.c.l.b16 %v836
        %v1564 = vunpack.c.l.b16 %v837
        %v1565 = vunpack.c.l.b16 %v838
        %v1566 = vunpack.c.l.b16 %v839
        %v1567 = vunpack.c.l.b16 %v840
        %v1568 = vunpack.c.l.b16 %v841
        %v1569 = vunpack.c.l.b16 %v842
        %v1570 = vunpack.c.l.b16 %v843
        %v1571 = vunpack.c.l.b16 %v844
        %v1572 = vunpack.c.l.b16 %v845
        %v1573 = vunpack.c.l.b16 %v846
        %v1574 = vunpack.c.l.b16 %v847
        %v1575 = vunpack.c.l.b16 %v848
        %v1576 = vunpack.c.l.b16 %v849
        %v1577 = vunpack.c.l.b16 %v850
        %v1578 = vunpack.c.l.b16 %v851
        %v1579 = vunpack.c.l.b16 %v852
        %v1580 = vunpack.c.l.b16 %v853
        %v1581 = vunpack.c.l.b16 %v854
        %v1582 = vunpack.c.l.b16 %v855
        %v1583 = vunpack.c.l.b16 %v856
        %v1584 = vunpack.c.l.b16 %v857
        %v1585 = vunpack.c.l.b16 %v858
        %v1586 = vunpack.c.l.b16 %v859
        %v1587 = vunpack.c.l.b16 %v860
        %v1588 = vunpack.c.l.b16 %v861
        %v1589 = vunpack.c.l.b16 %v862
        %v1590 = vunpack.c.l.b16 %v863
        %v1591 = vunpack.c.l.b16 %v864
        %v1592 = vunpack.c.l.b16 %v865
        %v1593 = vunpack.c.l.b16 %v866
        %v1594 = vunpack.c.l.b16 %v867
        %v1595 = vunpack.c.l.b16 %v868
        %v1596 = vunpack.c.l.b16 %v869
        %v1597 = vunpack.c.l.b16 %v870
        %v1598 = vunpack.c.l.b16 %v871
        %v1599 = vunpack.c.l.b16 %v872
        %v1600 = vunpack.c.l.b16 %v873
        %v1601 = vunpack.c.l.b16 %v874
        %v1602 = vunpack.c.l.b16 %v875
        %v1603 = vunpack.c.l.b16 %v876
        %v1604 = vunpack.c.l.b16 %v877
        %v1605 = vunpack.c.l.b16 %v878
        %v1606 = vunpack.c.l.b16 %v879
        %v1607 = vunpack.c.l.b16 %v880
        %v1608 = vunpack.c.l.b16 %v881
        %v1609 = vunpack.c.l.b16 %v882
        %v1610 = vunpack.c.l.b16 %v883
        %v1611 = vunpack.c.l.b16 %v884
        %v1612 = vunpack.c.l.b16 %v885
        %v1613 = vunpack.c.l.b16 %v886
        %v1614 = vunpack.c.l.b16 %v887
        %v1615 = vunpack.c.l.b16 %v888
        %v1616 = vunpack.c.l.b16 %v889
        %v1617 = vunpack.c.l.b16 %v890
        %v1618 = vunpack.c.l.b16 %v891
        %v1619 = vunpack.c.l.b16 %v892
        %v1620 = vunpack.c.l.b16 %v893
        %v1621 = vunpack.c.l.b16 %v894
        %v1622 = vunpack.c.l.b16 %v895
        %v1623 = vunpack.c.l.b16 %v896
        %v1624 = vunpack.c.l.b16 %v897
        %v1625 = vunpack.c.l.b16 %v898
        %v1626 = vunpack.c.l.b16 %v899
        %v1627 = vunpack.c.l.b16 %v900
        %v1628 = vunpack.c.l.b16 %v901
        %v1629 = vunpack.c.l.b16 %v902
        %v1630 = vunpack.c.l.b16 %v903
        %v1631 = vunpack.c.l.b16 %v904
        %v1632 = vunpack.c.l.b16 %v905
        %v1633 = vunpack.c.l.b16 %v906
        %v1634 = vunpack.c.l.b16 %v907
        %v1635 = vunpack.c.l.b16 %v908
        %v1636 = vunpack.c.l.b16 %v909
        %v1637 = vunpack.c.l.b16 %v910
        %v1638 = vunpack.c.l.b16 %v911
        %v1639 = vunpack.c.l.b16 %v912
        %v1640 = vunpack.c.l.b16 %v913
        %v1641 = vunpack.c.l.b16 %v914
        %v1642 = vunpack.c.l.b16 %v915
        %v1643 = vunpack.c.l.b16 %v916
        %v1644 = vunpack.c.l.b16 %v917
        %v1645 = vunpack.c.l.b16 %v918
        %v1646 = vunpack.c.l.b16 %v919
        %v1647 = vunpack.c.l.b16 %v920
        %v1648 = vunpack.c.l.b16 %v921
        %v1649 = vunpack.c.l.b16 %v922
        %v1650 = vunpack.c.l.b16 %v923
        %v1651 = vunpack.c.l.b16 %v924
        %v1652 = vunpack.c.l.b16 %v925
        %v1653 = vunpack.c.l.b16 %v926
        %v1654 = vunpack.c.l.b16 %v927
        %v1655 = vunpack.c.l.b16 %v928
        %v1656 = vunpack.c.l.b16 %v929
        %v1657 = vunpack.c.l.b16 %v930
        %v1658 = vunpack.c.l.b16 %v931
        %v1659 = vunpack.c.l.b16 %v932
        %v1660 = vunpack.c.l.b16 %v933
        %v1661 = vunpack.c.l.b16 %v934
        %v1662 = vunpack.c.l.b16 %v935
        %v1663 = vunpack.c.l.b16 %v936
        %v1664 = vunpack.c.l.b16 %v937
        %v1665 = vunpack.c.l.b16 %v938
        %v1666 = vunpack.c.l.b16 %v939
        %v1667 = vunpack.c.l.b16 %v940
        %v1668 = vunpack.c.l.b16 %v941
        %v1669 = vunpack.c.l.b16 %v942
        %v1670 = vunpack.c.l.b16 %v943
        %v1671 = vunpack.c.l.b16 %v944
        %v1672 = vunpack.c.l.b16 %v945
        %v1673 = vunpack.c.l.b16 %v946
        %v1674 = vunpack.c.l.b16 %v947
        %v1675 = vunpack.c.l.b16 %v948
        %v1676 = vunpack.c.l.b16 %v949
        %v1677 = vunpack.c.l.b16 %v950
        %v1678 = vunpack.c.l.b16 %v951
        %v1679 = vunpack.c.l.b16 %v952
        %v1680 = vunpack.c.l.b16 %v953
        %v1681 = vunpack.c.l.b16 %v954
        %v1682 = vunpack.c.l.b16 %v955
        %v1683 = vunpack.c.l.b16 %v956
        %v1684 = vunpack.c.l.b16 %v957
        %v1685 = vunpack.c.l.b16 %v958
        %v1686 = vunpack.c.l.b16 %v959
        %v1687 = vunpack.c.l.b16 %v960
        %v1688 = vunpack.c.l.b16 %v961
        %v1689 = vpack.c.b16 %v1330, %v1329
        %v1690 = vpack.c.b16 %v1332, %v1331
        %v1691 = vpack.c.b16 %v1334, %v1333
        %v1692 = vpack.c.b16 %v1336, %v1335
        %v1693 = vpack.c.b16 %v1338, %v1337
        %v1694 = vpack.c.b16 %v1340, %v1339
        %v1695 = vpack.c.b16 %v1342, %v1341
        %v1696 = vpack.c.b16 %v1344, %v1343
        %v1697 = vpack.c.b16 %v1346, %v1345
        %v1698 = vpack.c.b16 %v1348, %v1347
        %v1699 = vpack.c.b16 %v1350, %v1349
        %v1700 = vpack.c.b16 %v1352, %v1351
        %v1701 = vpack.c.b16 %v1354, %v1353
        %v1702 = vpack.c.b16 %v1356, %v1355
        %v1703 = vpack.c.b16 %v1358, %v1357
        %v1704 = vpack.c.b16 %v1360, %v1359
        %v1705 = vpack.c.b16 %v1362, %v1361
        %v1706 = vpack.c.b16 %v1364, %v1363
        %v1707 = vpack.c.b16 %v1366, %v1365
        %v1708 = vpack.c.b16 %v1368, %v1367
        %v1709 = vpack.c.b16 %v1370, %v1369
        %v1710 = vpack.c.b16 %v1372, %v1371
        %v1711 = vpack.c.b16 %v1374, %v1373
        %v1712 = vpack.c.b16 %v1376, %v1375
        %v1713 = vpack.c.b16 %v1378, %v1377
        %v1714 = vpack.c.b16 %v1380, %v1379
        %v1715 = vpack.c.b16 %v1382, %v1381
        %v1716 = vpack.c.b16 %v1384, %v1383
        %v1717 = vpack.c.b16 %v1386, %v1385
        %v1718 = vpack.c.b16 %v1388, %v1387
        %v1719 = vpack.c.b16 %v1390, %v1389
        %v1720 = vpack.c.b16 %v1392, %v1391
        %v1721 = vpack.c.b16 %v1394, %v1393
        %v1722 = vpack.c.b16 %v1396, %v1395
        %v1723 = vpack.c.b16 %v1398, %v1397
        %v1724 = vpack.c.b16 %v1400, %v1399
        %v1725 = vpack.c.b16 %v1402, %v1401
        %v1726 = vpack.c.b16 %v1404, %v1403
        %v1727 = vpack.c.b16 %v1406, %v1405
        %v1728 = vpack.c.b16 %v1408, %v1407
        %v1729 = vpack.c.b16 %v1410, %v1409
        %v1730 = vpack.c.b16 %v1412, %v1411
        %v1731 = vpack.c.b16 %v1414, %v1413
        %v1732 = vpack.c.b16 %v1416, %v1415
        %v1733 = vpack.c.b16 %v1418, %v1417
        %v1734 = vpack.c.b16 %v1420, %v1419
        %v1735 = vpack.c.b16 %v1422, %v1421
        %v1736 = vpack.c.b16 %v1424, %v1423
        %v1737 = vpack.c.b16 %v1426, %v1425
        %v1738 = vpack.c.b16 %v1428, %v1427
        %v1739 = vpack.c.b16 %v1430, %v1429
        %v1740 = vpack.c.b16 %v1432, %v1431
        %v1741 = vpack.c.b16 %v1434, %v1433
        %v1742 = vpack.c.b16 %v1436, %v1435
        %v1743 = vpack.c.b16 %v1438, %v1437
        %v1744 = vpack.c.b16 %v1440, %v1439
        %v1745 = vpack.c.b16 %v1442, %v1441
        %v1746 = vpack.c.b16 %v1444, %v1443
        %v1747 = vpack.c.b16 %v1446, %v1445
        %v1748 = vpack.c.b16 %v1448, %v1447
        %v1749 = vpack.c.b16 %v1450, %v1449
        %v1750 = vpack.c.b16 %v1452, %v1451
        %v1751 = vpack.c.b16 %v1454, %v1453
        %v1752 = vpack.c.b16 %v1456, %v1455
        %v1753 = vpack.c.b16 %v1458, %v1457
        %v1754 = vpack.c.b16 %v1460, %v1459
        %v1755 = vpack.c.b16 %v1462, %v1461
        %v1756 = vpack.c.b16 %v1464, %v1463
        %v1757 = vpack.c.b16 %v1466, %v1465
        %v1758 = vpack.c.b16 %v1468, %v1467
        %v1759 = vpack.c.b16 %v1470, %v1469
        %v1760 = vpack.c.b16 %v1472, %v1471
        %v1761 = vpack.c.b16 %v1474, %v1473
        %v1762 = vpack.c.b16 %v1476, %v1475
        %v1763 = vpack.c.b16 %v1478, %v1477
        %v1764 = vpack.c.b16 %v1480, %v1479
        %v1765 = vpack.c.b16 %v1482, %v1481
        %v1766 = vpack.c.b16 %v1484, %v1483
        %v1767 = vpack.c.b16 %v1486, %v1485
        %v1768 = vpack.c.b16 %v1488, %v1487
        %v1769 = vpack.c.b16 %v1490, %v1489
        %v1770 = vpack.c.b16 %v1492, %v1491
        %v1771 = vpack.c.b16 %v1494, %v1493
        %v1772 = vpack.c.b16 %v1496, %v1495
        %v1773 = vpack.c.b16 %v1498, %v1497
        %v1774 = vpack.c.b16 %v1500, %v1499
        %v1775 = vpack.c.b16 %v1502, %v1501
        %v1776 = vpack.c.b16 %v1504, %v1503
        %v1777 = vpack.c.b16 %v1506, %v1505
        %v1778 = vpack.c.b16 %v1508, %v1507
        %v1779 = vpack.c.b16 %v1510, %v1509
        %v1780 = vpack.c.b16 %v1512, %v1511
        %v1781 = vpack.c.b16 %v1514, %v1513
        %v1782 = vpack.c.b16 %v1516, %v1515
        %v1783 = vpack.c.b16 %v1518, %v1517
        %v1784 = vpack.c.b16 %v1520, %v1519
        %v1785 = vpack.c.b16 %v1522, %v1521
        %v1786 = vpack.c.b16 %v1524, %v1523
        %v1787 = vpack.c.b16 %v1526, %v1525
        %v1788 = vpack.c.b16 %v1528, %v1527
        %v1789 = vpack.c.b16 %v1530, %v1529
        %v1790 = vpack.c.b16 %v1532, %v1531
        %v1791 = vpack.c.b16 %v1534, %v1533
        %v1792 = vpack.c.b16 %v1536, %v1535
        %v1793 = vpack.c.b16 %v1538, %v1537
        %v1794 = vpack.c.b16 %v1540, %v1539
        %v1795 = vpack.c.b16 %v1542, %v1541
        %v1796 = vpack.c.b16 %v1544, %v1543
        %v1797 = vpack.c.b16 %v1546, %v1545
        %v1798 = vpack.c.b16 %v1548, %v1547
        %v1799 = vpack.c.b16 %v1550, %v1549
        %v1800 = vpack.c.b16 %v1552, %v1551
        %v1801 = vpack.c.b16 %v1554, %v1553
        %v1802 = vpack.c.b16 %v1556, %v1555
        %v1803 = vpack.c.b16 %v1558, %v1557
        %v1804 = vpack.c.b16 %v1560, %v1559
        %v1805 = vpack.c.b16 %v1562, %v1561
        %v1806 = vpack.c.b16 %v1564, %v1563
        %v1807 = vpack.c.b16 %v1566, %v1565
        %v1808 = vpack.c.b16 %v1568, %v1567
        %v1809 = vpack.c.b16 %v1570, %v1569
        %v1810 = vpack.c.b16 %v1572, %v1571
        %v1811 = vpack.c.b16 %v1574, %v1573
        %v1812 = vpack.c.b16 %v1576, %v1575
        %v1813 = vpack.c.b16 %v1578, %v1577
        %v1814 = vpack.c.b16 %v1580, %v1579
        %v1815 = vpack.c.b16 %v1582, %v1581
        %v1816 = vpack.c.b16 %v1584, %v1583
        %v1817 = vpack.c.b16 %v1586, %v1585
        %v1818 = vpack.c.b16 %v1588, %v1587
        %v1819 = vpack.c.b16 %v1590, %v1589
        %v1820 = vpack.c.b16 %v1592, %v1591
        %v1821 = vpack.c.b16 %v1594, %v1593
        %v1822 = vpack.c.b16 %v1596, %v1595
        %v1823 = vpack.c.b16 %v1598, %v1597
        %v1824 = vpack.c.b16 %v1600, %v1599
        %v1825 = vpack.c.b16 %v1602, %v1601
        %v1826 = vpack.c.b16 %v1604, %v1603
        %v1827 = vpack.c.b16 %v1606, %v1605
        %v1828 = vpack.c.b16 %v1608, %v1607
        %v1829 = vpack.c.b16 %v1610, %v1609
        %v1830 = vpack.c.b16 %v1612, %v1611
        %v1831 = vpack.c.b16 %v1614, %v1613
        %v1832 = vpack.c.b16 %v1616, %v1615
        %v1833 = vpack.c.b16 %v1618, %v1617
        %v1834 = vpack.c.b16 %v1620, %v1619
        %v1835 = vpack.c.b16 %v1622, %v1621
        %v1836 = vpack.c.b16 %v1624, %v1623
        %v1837 = vpack.c.b16 %v1626, %v1625
        %v1838 = vpack.c.b16 %v1628, %v1627
        %v1839 = vpack.c.b16 %v1630, %v1629
        %v1840 = vpack.c.b16 %v1632, %v1631
        %v1841 = vpack.c.b16 %v1634, %v1633
        %v1842 = vpack.c.b16 %v1636, %v1635
        %v1843 = vpack.c.b16 %v1638, %v1637
        %v1844 = vpack.c.b16 %v1640, %v1639
        %v1845 = vpack.c.b16 %v1642, %v1641
        %v1846 = vpack.c.b16 %v1644, %v1643
        %v1847 = vpack.c.b16 %v1646, %v1645
        %v1848 = vpack.c.b16 %v1648, %v1647
        %v1849 = vpack.c.b16 %v1650, %v1649
        %v1850 = vpack.c.b16 %v1652, %v1651
        %v1851 = vpack.c.b16 %v1654, %v1653
        %v1852 = vpack.c.b16 %v1656, %v1655
        %v1853 = vpack.c.b16 %v1658, %v1657
        %v1854 = vpack.c.b16 %v1660, %v1659
        %v1855 = vpack.c.b16 %v1662, %v1661
        %v1856 = vpack.c.b16 %v1664, %v1663
        %v1857 = vpack.c.b16 %v1666, %v1665
        %v1858 = vpack.c.b16 %v1668, %v1667
        %v1859 = vpack.c.b16 %v1670, %v1669
        %v1860 = vpack.c.b16 %v1672, %v1671
        %v1861 = vpack.c.b16 %v1674, %v1673
        %v1862 = vpack.c.b16 %v1676, %v1675
        %v1863 = vpack.c.b16 %v1678, %v1677
        %v1864 = vpack.c.b16 %v1680, %v1679
        %v1865 = vpack.c.b16 %v1682, %v1681
        %v1866 = vpack.c.b16 %v1684, %v1683
        %v1867 = vpack.c.b16 %v1686, %v1685
        %v1868 = vpack.c.b16 %v1688, %v1687
        %vm2049 = vcmask 523264
        %v2051 = vsel %vm2049, %v601, 0
        %2053 = vmatprep.subr.bf16.mxu0 0
        %2054 = vmatpush1.bf16.msra.mxu0 %v1689
        %2055 = vmatprep.subr.bf16.mxu0 0
        %2056 = vmatpush1.bf16.msra.mxu0 %v1690
        %2057 = vmatprep.subr.bf16.mxu0 0
        %2058 = vmatpush1.bf16.msra.mxu0 %v1691
        %2059 = vmatprep.subr.bf16.mxu0 0
        %2060 = vmatpush1.bf16.msra.mxu0 %v1692
        %2061 = vmatprep.subr.bf16.mxu0 0
        %2062 = vmatpush1.bf16.msra.mxu0 %v1693
        %2063 = vmatprep.subr.bf16.mxu0 0
        %2064 = vmatpush1.bf16.msra.mxu0 %v1694
        %2065 = vmatprep.subr.bf16.mxu0 0
        %2066 = vmatpush1.bf16.msra.mxu0 %v1695
        %2067 = vmatprep.subr.bf16.mxu0 0
        %2068 = vmatpush1.bf16.msra.mxu0 %v1696
        %2069 = vmatprep.subr.bf16.mxu0 0
        %2070 = vmatpush1.bf16.msra.mxu0 %v1697
        %2071 = vmatprep.subr.bf16.mxu0 0
        %2072 = vmatpush1.bf16.msra.mxu0 %v1698
        %2073 = vmatprep.subr.bf16.mxu0 0
        %2074 = vmatpush1.bf16.msra.mxu0 %v1699
        %2075 = vmatprep.subr.bf16.mxu0 0
        %2076 = vmatpush1.bf16.msra.mxu0 %v1700
        %2077 = vmatprep.subr.bf16.mxu0 0
        %2078 = vmatpush1.bf16.msra.mxu0 %v1701
        %2079 = vmatprep.subr.bf16.mxu0 0
        %2080 = vmatpush1.bf16.msra.mxu0 %v1702
        %2081 = vmatprep.subr.bf16.mxu0 0
        %2082 = vmatpush1.bf16.msra.mxu0 %v1703
        %2083 = vmatprep.subr.bf16.mxu0 0
        %2084 = vmatpush1.bf16.msra.mxu0 %v1704
        %2085 = vmatprep.mubr.bf16.mxu0 %v580
        %2086 = vmatmul.mubr.bf16.gmra.mrb[0].mxu0 %v579
        %v2087 = vpop.f32.mrb[0].mxu0
        %v2088 = vadd.f32 %v967, %v2087
        %v2089 = vpop.f32.mrb[0].mxu0
        %v2090 = vpop.f32.mrb[0].mxu0
        %v2091 = vpop.f32.mrb[0].mxu0
        %2092 = vdwg.mxu0
        %2093 = vmatprep.subr.bf16.mxu0 0
        %2094 = vmatpush1.bf16.msra.mxu0 %v1705
        %2095 = vmatprep.subr.bf16.mxu0 0
        %2096 = vmatpush1.bf16.msra.mxu0 %v1706
        %2097 = vmatprep.subr.bf16.mxu0 0
        %2098 = vmatpush1.bf16.msra.mxu0 %v1707
        %2099 = vmatprep.subr.bf16.mxu0 0
        %2100 = vmatpush1.bf16.msra.mxu0 %v1708
        %2101 = vmatprep.subr.bf16.mxu0 0
        %2102 = vmatpush1.bf16.msra.mxu0 %v1709
        %2103 = vmatprep.subr.bf16.mxu0 0
        %2104 = vmatpush1.bf16.msra.mxu0 %v1710
        %2105 = vmatprep.subr.bf16.mxu0 0
        %2106 = vmatpush1.bf16.msra.mxu0 %v1711
        %2107 = vmatprep.subr.bf16.mxu0 0
        %2108 = vmatpush1.bf16.msra.mxu0 %v1712
        %2109 = vmatprep.subr.bf16.mxu0 0
        %2110 = vmatpush1.bf16.msra.mxu0 %v1713
        %2111 = vmatprep.subr.bf16.mxu0 0
        %2112 = vmatpush1.bf16.msra.mxu0 %v1714
        %2113 = vmatprep.subr.bf16.mxu0 0
        %2114 = vmatpush1.bf16.msra.mxu0 %v1715
        %2115 = vmatprep.subr.bf16.mxu0 0
        %2116 = vmatpush1.bf16.msra.mxu0 %v1716
        %2117 = vmatprep.subr.bf16.mxu0 0
        %2118 = vmatpush1.bf16.msra.mxu0 %v1717
        %2119 = vmatprep.subr.bf16.mxu0 0
        %2120 = vmatpush1.bf16.msra.mxu0 %v1718
        %2121 = vmatprep.subr.bf16.mxu0 0
        %2122 = vmatpush1.bf16.msra.mxu0 %v1719
        %2123 = vmatprep.subr.bf16.mxu0 0
        %2124 = vmatpush1.bf16.msra.mxu0 %v1720
        %2125 = vmatprep.mubr.bf16.mxu0 %v582
        %2126 = vmatmul.mubr.bf16.gmra.mrb[0].mxu0 %v581
        %v2127 = vpop.f32.mrb[0].mxu0
        %v2128 = vadd.f32 %v2088, %v2127
        %v2129 = vpop.f32.mrb[0].mxu0
        %v2130 = vpop.f32.mrb[0].mxu0
        %v2131 = vpop.f32.mrb[0].mxu0
        %2132 = vdwg.mxu0
        %2133 = vmatprep.subr.bf16.mxu0 0
        %2134 = vmatpush1.bf16.msra.mxu0 %v1721
        %2135 = vmatprep.subr.bf16.mxu0 0
        %2136 = vmatpush1.bf16.msra.mxu0 %v1722
        %2137 = vmatprep.subr.bf16.mxu0 0
        %2138 = vmatpush1.bf16.msra.mxu0 %v1723
        %2139 = vmatprep.subr.bf16.mxu0 0
        %2140 = vmatpush1.bf16.msra.mxu0 %v1724
        %2141 = vmatprep.subr.bf16.mxu0 0
        %2142 = vmatpush1.bf16.msra.mxu0 %v1725
        %2143 = vmatprep.subr.bf16.mxu0 0
        %2144 = vmatpush1.bf16.msra.mxu0 %v1726
        %2145 = vmatprep.subr.bf16.mxu0 0
        %2146 = vmatpush1.bf16.msra.mxu0 %v1727
        %2147 = vmatprep.subr.bf16.mxu0 0
        %2148 = vmatpush1.bf16.msra.mxu0 %v1728
        %2149 = vmatprep.subr.bf16.mxu0 0
        %2150 = vmatpush1.bf16.msra.mxu0 %v1729
        %2151 = vmatprep.subr.bf16.mxu0 0
        %2152 = vmatpush1.bf16.msra.mxu0 %v1730
        %2153 = vmatprep.subr.bf16.mxu0 0
        %2154 = vmatpush1.bf16.msra.mxu0 %v1731
        %2155 = vmatprep.subr.bf16.mxu0 0
        %2156 = vmatpush1.bf16.msra.mxu0 %v1732
        %2157 = vmatprep.subr.bf16.mxu0 0
        %2158 = vmatpush1.bf16.msra.mxu0 %v1733
        %2159 = vmatprep.subr.bf16.mxu0 0
        %2160 = vmatpush1.bf16.msra.mxu0 %v1734
        %2161 = vmatprep.subr.bf16.mxu0 0
        %2162 = vmatpush1.bf16.msra.mxu0 %v1735
        %2163 = vmatprep.subr.bf16.mxu0 0
        %2164 = vmatpush1.bf16.msra.mxu0 %v1736
        %2165 = vmatprep.mubr.bf16.mxu0 %v584
        %2166 = vmatmul.mubr.bf16.gmra.mrb[0].mxu0 %v583
        %v2167 = vpop.f32.mrb[0].mxu0
        %v2168 = vadd.f32 %v2128, %v2167
        %v2169 = vpop.f32.mrb[0].mxu0
        %v2170 = vpop.f32.mrb[0].mxu0
        %v2171 = vpop.f32.mrb[0].mxu0
        %2172 = vdwg.mxu0
        %2173 = vmatprep.subr.bf16.mxu0 0
        %2174 = vmatpush1.bf16.msra.mxu0 %v1737
        %2175 = vmatprep.subr.bf16.mxu0 0
        %2176 = vmatpush1.bf16.msra.mxu0 %v1738
        %2177 = vmatprep.subr.bf16.mxu0 0
        %2178 = vmatpush1.bf16.msra.mxu0 %v1739
        %2179 = vmatprep.subr.bf16.mxu0 0
        %2180 = vmatpush1.bf16.msra.mxu0 %v1740
        %2181 = vmatprep.subr.bf16.mxu0 0
        %2182 = vmatpush1.bf16.msra.mxu0 %v1741
        %2183 = vmatprep.subr.bf16.mxu0 0
        %2184 = vmatpush1.bf16.msra.mxu0 %v1742
        %2185 = vmatprep.subr.bf16.mxu0 0
        %2186 = vmatpush1.bf16.msra.mxu0 %v1743
        %2187 = vmatprep.subr.bf16.mxu0 0
        %2188 = vmatpush1.bf16.msra.mxu0 %v1744
        %2189 = vmatprep.subr.bf16.mxu0 0
        %2190 = vmatpush1.bf16.msra.mxu0 %v1745
        %2191 = vmatprep.subr.bf16.mxu0 0
        %2192 = vmatpush1.bf16.msra.mxu0 %v1746
        %2193 = vmatprep.subr.bf16.mxu0 0
        %2194 = vmatpush1.bf16.msra.mxu0 %v1747
        %2195 = vmatprep.subr.bf16.mxu0 0
        %2196 = vmatpush1.bf16.msra.mxu0 %v1748
        %2197 = vmatprep.subr.bf16.mxu0 0
        %2198 = vmatpush1.bf16.msra.mxu0 %v1749
        %2199 = vmatprep.subr.bf16.mxu0 0
        %2200 = vmatpush1.bf16.msra.mxu0 %v1750
        %2201 = vmatprep.subr.bf16.mxu0 0
        %2202 = vmatpush1.bf16.msra.mxu0 %v1751
        %2203 = vmatprep.subr.bf16.mxu0 0
        %2204 = vmatpush1.bf16.msra.mxu0 %v1752
        %2205 = vmatprep.mubr.bf16.mxu0 %v586
        %2206 = vmatmul.mubr.bf16.gmra.mrb[0].mxu0 %v585
        %v2207 = vpop.f32.mrb[0].mxu0
        %v2208 = vadd.f32 %v2168, %v2207
        %v2209 = vpop.f32.mrb[0].mxu0
        %v2210 = vpop.f32.mrb[0].mxu0
        %v2211 = vpop.f32.mrb[0].mxu0
        %2212 = vdwg.mxu0
        %2213 = vmatprep.subr.bf16.mxu0 0
        %2214 = vmatpush1.bf16.msra.mxu0 %v1753
        %2215 = vmatprep.subr.bf16.mxu0 0
        %2216 = vmatpush1.bf16.msra.mxu0 %v1754
        %2217 = vmatprep.subr.bf16.mxu0 0
        %2218 = vmatpush1.bf16.msra.mxu0 %v1755
        %2219 = vmatprep.subr.bf16.mxu0 0
        %2220 = vmatpush1.bf16.msra.mxu0 %v1756
        %2221 = vmatprep.subr.bf16.mxu0 0
        %2222 = vmatpush1.bf16.msra.mxu0 %v1757
        %2223 = vmatprep.subr.bf16.mxu0 0
        %2224 = vmatpush1.bf16.msra.mxu0 %v1758
        %2225 = vmatprep.subr.bf16.mxu0 0
        %2226 = vmatpush1.bf16.msra.mxu0 %v1759
        %2227 = vmatprep.subr.bf16.mxu0 0
        %2228 = vmatpush1.bf16.msra.mxu0 %v1760
        %2229 = vmatprep.subr.bf16.mxu0 0
        %2230 = vmatpush1.bf16.msra.mxu0 %v1761
        %2231 = vmatprep.subr.bf16.mxu0 0
        %2232 = vmatpush1.bf16.msra.mxu0 %v1762
        %2233 = vmatprep.subr.bf16.mxu0 0
        %2234 = vmatpush1.bf16.msra.mxu0 %v1763
        %2235 = vmatprep.subr.bf16.mxu0 0
        %2236 = vmatpush1.bf16.msra.mxu0 %v1764
        %2237 = vmatprep.subr.bf16.mxu0 0
        %2238 = vmatpush1.bf16.msra.mxu0 %v1765
        %2239 = vmatprep.subr.bf16.mxu0 0
        %2240 = vmatpush1.bf16.msra.mxu0 %v1766
        %2241 = vmatprep.subr.bf16.mxu0 0
        %2242 = vmatpush1.bf16.msra.mxu0 %v1767
        %2243 = vmatprep.subr.bf16.mxu0 0
        %2244 = vmatpush1.bf16.msra.mxu0 %v1768
        %2245 = vmatprep.mubr.bf16.mxu0 %v588
        %2246 = vmatmul.mubr.bf16.gmra.mrb[0].mxu0 %v587
        %v2247 = vpop.f32.mrb[0].mxu0
        %v2248 = vadd.f32 %v2208, %v2247
        %v2249 = vpop.f32.mrb[0].mxu0
        %v2250 = vpop.f32.mrb[0].mxu0
        %v2251 = vpop.f32.mrb[0].mxu0
        %2252 = vdwg.mxu0
        %2253 = vmatprep.subr.bf16.mxu0 0
        %2254 = vmatpush1.bf16.msra.mxu0 %v1769
        %2255 = vmatprep.subr.bf16.mxu0 0
        %2256 = vmatpush1.bf16.msra.mxu0 %v1770
        %2257 = vmatprep.subr.bf16.mxu0 0
        %2258 = vmatpush1.bf16.msra.mxu0 %v1771
        %2259 = vmatprep.subr.bf16.mxu0 0
        %2260 = vmatpush1.bf16.msra.mxu0 %v1772
        %2261 = vmatprep.subr.bf16.mxu0 0
        %2262 = vmatpush1.bf16.msra.mxu0 %v1773
        %2263 = vmatprep.subr.bf16.mxu0 0
        %2264 = vmatpush1.bf16.msra.mxu0 %v1774
        %2265 = vmatprep.subr.bf16.mxu0 0
        %2266 = vmatpush1.bf16.msra.mxu0 %v1775
        %2267 = vmatprep.subr.bf16.mxu0 0
        %2268 = vmatpush1.bf16.msra.mxu0 %v1776
        %2269 = vmatprep.subr.bf16.mxu0 0
        %2270 = vmatpush1.bf16.msra.mxu0 %v1777
        %2271 = vmatprep.subr.bf16.mxu0 0
        %2272 = vmatpush1.bf16.msra.mxu0 %v1778
        %2273 = vmatprep.subr.bf16.mxu0 0
        %2274 = vmatpush1.bf16.msra.mxu0 %v1779
        %2275 = vmatprep.subr.bf16.mxu0 0
        %2276 = vmatpush1.bf16.msra.mxu0 %v1780
        %2277 = vmatprep.subr.bf16.mxu0 0
        %2278 = vmatpush1.bf16.msra.mxu0 %v1781
        %2279 = vmatprep.subr.bf16.mxu0 0
        %2280 = vmatpush1.bf16.msra.mxu0 %v1782
        %2281 = vmatprep.subr.bf16.mxu0 0
        %2282 = vmatpush1.bf16.msra.mxu0 %v1783
        %2283 = vmatprep.subr.bf16.mxu0 0
        %2284 = vmatpush1.bf16.msra.mxu0 %v1784
        %2285 = vmatprep.mubr.bf16.mxu0 %v590
        %2286 = vmatmul.mubr.bf16.gmra.mrb[0].mxu0 %v589
        %v2287 = vpop.f32.mrb[0].mxu0
        %v2288 = vadd.f32 %v2248, %v2287
        %v2289 = vpop.f32.mrb[0].mxu0
        %v2290 = vpop.f32.mrb[0].mxu0
        %v2291 = vpop.f32.mrb[0].mxu0
        %2292 = vdwg.mxu0
        %2293 = vmatprep.subr.bf16.mxu0 0
        %2294 = vmatpush1.bf16.msra.mxu0 %v1785
        %2295 = vmatprep.subr.bf16.mxu0 0
        %2296 = vmatpush1.bf16.msra.mxu0 %v1786
        %2297 = vmatprep.subr.bf16.mxu0 0
        %2298 = vmatpush1.bf16.msra.mxu0 %v1787
        %2299 = vmatprep.subr.bf16.mxu0 0
        %2300 = vmatpush1.bf16.msra.mxu0 %v1788
        %2301 = vmatprep.subr.bf16.mxu0 0
        %2302 = vmatpush1.bf16.msra.mxu0 %v1789
        %2303 = vmatprep.subr.bf16.mxu0 0
        %2304 = vmatpush1.bf16.msra.mxu0 %v1790
        %2305 = vmatprep.subr.bf16.mxu0 0
        %2306 = vmatpush1.bf16.msra.mxu0 %v1791
        %2307 = vmatprep.subr.bf16.mxu0 0
        %2308 = vmatpush1.bf16.msra.mxu0 %v1792
        %2309 = vmatprep.subr.bf16.mxu0 0
        %2310 = vmatpush1.bf16.msra.mxu0 %v1793
        %2311 = vmatprep.subr.bf16.mxu0 0
        %2312 = vmatpush1.bf16.msra.mxu0 %v1794
        %2313 = vmatprep.subr.bf16.mxu0 0
        %2314 = vmatpush1.bf16.msra.mxu0 %v1795
        %2315 = vmatprep.subr.bf16.mxu0 0
        %2316 = vmatpush1.bf16.msra.mxu0 %v1796
        %2317 = vmatprep.subr.bf16.mxu0 0
        %2318 = vmatpush1.bf16.msra.mxu0 %v1797
        %2319 = vmatprep.subr.bf16.mxu0 0
        %2320 = vmatpush1.bf16.msra.mxu0 %v1798
        %2321 = vmatprep.subr.bf16.mxu0 0
        %2322 = vmatpush1.bf16.msra.mxu0 %v1799
        %2323 = vmatprep.subr.bf16.mxu0 0
        %2324 = vmatpush1.bf16.msra.mxu0 %v1800
        %2325 = vmatprep.mubr.bf16.mxu0 %v592
        %2326 = vmatmul.mubr.bf16.gmra.mrb[0].mxu0 %v591
        %v2327 = vpop.f32.mrb[0].mxu0
        %v2328 = vadd.f32 %v2288, %v2327
        %v2329 = vpop.f32.mrb[0].mxu0
        %v2330 = vpop.f32.mrb[0].mxu0
        %v2331 = vpop.f32.mrb[0].mxu0
        %2332 = vdwg.mxu0
        %2333 = vmatprep.subr.bf16.mxu0 0
        %2334 = vmatpush1.bf16.msra.mxu0 %v1801
        %2335 = vmatprep.subr.bf16.mxu0 0
        %2336 = vmatpush1.bf16.msra.mxu0 %v1802
        %2337 = vmatprep.subr.bf16.mxu0 0
        %2338 = vmatpush1.bf16.msra.mxu0 %v1803
        %2339 = vmatprep.subr.bf16.mxu0 0
        %2340 = vmatpush1.bf16.msra.mxu0 %v1804
        %2341 = vmatprep.subr.bf16.mxu0 0
        %2342 = vmatpush1.bf16.msra.mxu0 %v1805
        %2343 = vmatprep.subr.bf16.mxu0 0
        %2344 = vmatpush1.bf16.msra.mxu0 %v1806
        %2345 = vmatprep.subr.bf16.mxu0 0
        %2346 = vmatpush1.bf16.msra.mxu0 %v1807
        %2347 = vmatprep.subr.bf16.mxu0 0
        %2348 = vmatpush1.bf16.msra.mxu0 %v1808
        %2349 = vmatprep.subr.bf16.mxu0 0
        %2350 = vmatpush1.bf16.msra.mxu0 %v1809
        %2351 = vmatprep.subr.bf16.mxu0 0
        %2352 = vmatpush1.bf16.msra.mxu0 %v1810
        %2353 = vmatprep.subr.bf16.mxu0 0
        %2354 = vmatpush1.bf16.msra.mxu0 %v1811
        %2355 = vmatprep.subr.bf16.mxu0 0
        %2356 = vmatpush1.bf16.msra.mxu0 %v1812
        %2357 = vmatprep.subr.bf16.mxu0 0
        %2358 = vmatpush1.bf16.msra.mxu0 %v1813
        %2359 = vmatprep.subr.bf16.mxu0 0
        %2360 = vmatpush1.bf16.msra.mxu0 %v1814
        %2361 = vmatprep.subr.bf16.mxu0 0
        %2362 = vmatpush1.bf16.msra.mxu0 %v1815
        %2363 = vmatprep.subr.bf16.mxu0 0
        %2364 = vmatpush1.bf16.msra.mxu0 %v1816
        %2365 = vmatprep.mubr.bf16.mxu0 %v594
        %2366 = vmatmul.mubr.bf16.gmra.mrb[0].mxu0 %v593
        %v2367 = vpop.f32.mrb[0].mxu0
        %v2368 = vadd.f32 %v2328, %v2367
        %v2369 = vpop.f32.mrb[0].mxu0
        %v2370 = vpop.f32.mrb[0].mxu0
        %v2371 = vpop.f32.mrb[0].mxu0
        %2372 = vdwg.mxu0
        %2373 = vmatprep.subr.bf16.mxu0 0
        %2374 = vmatpush1.bf16.msra.mxu0 %v1817
        %2375 = vmatprep.subr.bf16.mxu0 0
        %2376 = vmatpush1.bf16.msra.mxu0 %v1818
        %2377 = vmatprep.subr.bf16.mxu0 0
        %2378 = vmatpush1.bf16.msra.mxu0 %v1819
        %2379 = vmatprep.subr.bf16.mxu0 0
        %2380 = vmatpush1.bf16.msra.mxu0 %v1820
        %2381 = vmatprep.subr.bf16.mxu0 0
        %2382 = vmatpush1.bf16.msra.mxu0 %v1821
        %2383 = vmatprep.subr.bf16.mxu0 0
        %2384 = vmatpush1.bf16.msra.mxu0 %v1822
        %2385 = vmatprep.subr.bf16.mxu0 0
        %2386 = vmatpush1.bf16.msra.mxu0 %v1823
        %2387 = vmatprep.subr.bf16.mxu0 0
        %2388 = vmatpush1.bf16.msra.mxu0 %v1824
        %2389 = vmatprep.subr.bf16.mxu0 0
        %2390 = vmatpush1.bf16.msra.mxu0 %v1825
        %2391 = vmatprep.subr.bf16.mxu0 0
        %2392 = vmatpush1.bf16.msra.mxu0 %v1826
        %2393 = vmatprep.subr.bf16.mxu0 0
        %2394 = vmatpush1.bf16.msra.mxu0 %v1827
        %2395 = vmatprep.subr.bf16.mxu0 0
        %2396 = vmatpush1.bf16.msra.mxu0 %v1828
        %2397 = vmatprep.subr.bf16.mxu0 0
        %2398 = vmatpush1.bf16.msra.mxu0 %v1829
        %2399 = vmatprep.subr.bf16.mxu0 0
        %2400 = vmatpush1.bf16.msra.mxu0 %v1830
        %2401 = vmatprep.subr.bf16.mxu0 0
        %2402 = vmatpush1.bf16.msra.mxu0 %v1831
        %2403 = vmatprep.subr.bf16.mxu0 0
        %2404 = vmatpush1.bf16.msra.mxu0 %v1832
        %2405 = vmatprep.mubr.bf16.mxu0 %v596
        %2406 = vmatmul.mubr.bf16.gmra.mrb[0].mxu0 %v595
        %v2407 = vpop.f32.mrb[0].mxu0
        %v2408 = vadd.f32 %v2368, %v2407
        %v2409 = vpop.f32.mrb[0].mxu0
        %v2410 = vpop.f32.mrb[0].mxu0
        %v2411 = vpop.f32.mrb[0].mxu0
        %2412 = vdwg.mxu0
        %2413 = vmatprep.subr.bf16.mxu0 0
        %2414 = vmatpush1.bf16.msra.mxu0 %v1833
        %2415 = vmatprep.subr.bf16.mxu0 0
        %2416 = vmatpush1.bf16.msra.mxu0 %v1834
        %2417 = vmatprep.subr.bf16.mxu0 0
        %2418 = vmatpush1.bf16.msra.mxu0 %v1835
        %2419 = vmatprep.subr.bf16.mxu0 0
        %2420 = vmatpush1.bf16.msra.mxu0 %v1836
        %2421 = vmatprep.subr.bf16.mxu0 0
        %2422 = vmatpush1.bf16.msra.mxu0 %v1837
        %2423 = vmatprep.subr.bf16.mxu0 0
        %2424 = vmatpush1.bf16.msra.mxu0 %v1838
        %2425 = vmatprep.subr.bf16.mxu0 0
        %2426 = vmatpush1.bf16.msra.mxu0 %v1839
        %2427 = vmatprep.subr.bf16.mxu0 0
        %2428 = vmatpush1.bf16.msra.mxu0 %v1840
        %2429 = vmatprep.subr.bf16.mxu0 0
        %2430 = vmatpush1.bf16.msra.mxu0 %v1841
        %2431 = vmatprep.subr.bf16.mxu0 0
        %2432 = vmatpush1.bf16.msra.mxu0 %v1842
        %2433 = vmatprep.subr.bf16.mxu0 0
        %2434 = vmatpush1.bf16.msra.mxu0 %v1843
        %2435 = vmatprep.subr.bf16.mxu0 0
        %2436 = vmatpush1.bf16.msra.mxu0 %v1844
        %2437 = vmatprep.subr.bf16.mxu0 0
        %2438 = vmatpush1.bf16.msra.mxu0 %v1845
        %2439 = vmatprep.subr.bf16.mxu0 0
        %2440 = vmatpush1.bf16.msra.mxu0 %v1846
        %2441 = vmatprep.subr.bf16.mxu0 0
        %2442 = vmatpush1.bf16.msra.mxu0 %v1847
        %2443 = vmatprep.subr.bf16.mxu0 0
        %2444 = vmatpush1.bf16.msra.mxu0 %v1848
        %2445 = vmatprep.mubr.bf16.mxu0 %v598
        %2446 = vmatmul.mubr.bf16.gmra.mrb[0].mxu0 %v597
        %v2447 = vpop.f32.mrb[0].mxu0
        %v2448 = vadd.f32 %v2408, %v2447
        %v2449 = vpop.f32.mrb[0].mxu0
        %v2450 = vpop.f32.mrb[0].mxu0
        %v2451 = vpop.f32.mrb[0].mxu0
        %2452 = vdwg.mxu0
        %2453 = vmatprep.subr.bf16.mxu0 0
        %2454 = vmatpush1.bf16.msra.mxu0 %v1849
        %2455 = vmatprep.subr.bf16.mxu0 0
        %2456 = vmatpush1.bf16.msra.mxu0 %v1850
        %2457 = vmatprep.subr.bf16.mxu0 0
        %2458 = vmatpush1.bf16.msra.mxu0 %v1851
        %2459 = vmatprep.subr.bf16.mxu0 0
        %2460 = vmatpush1.bf16.msra.mxu0 %v1852
        %2461 = vmatprep.subr.bf16.mxu0 0
        %2462 = vmatpush1.bf16.msra.mxu0 %v1853
        %2463 = vmatprep.subr.bf16.mxu0 0
        %2464 = vmatpush1.bf16.msra.mxu0 %v1854
        %2465 = vmatprep.subr.bf16.mxu0 0
        %2466 = vmatpush1.bf16.msra.mxu0 %v1855
        %2467 = vmatprep.subr.bf16.mxu0 0
        %2468 = vmatpush1.bf16.msra.mxu0 %v1856
        %2469 = vmatprep.subr.bf16.mxu0 0
        %2470 = vmatpush1.bf16.msra.mxu0 %v1857
        %2471 = vmatprep.subr.bf16.mxu0 0
        %2472 = vmatpush1.bf16.msra.mxu0 %v1858
        %2473 = vmatprep.subr.bf16.mxu0 0
        %2474 = vmatpush1.bf16.msra.mxu0 %v1859
        %2475 = vmatprep.subr.bf16.mxu0 0
        %2476 = vmatpush1.bf16.msra.mxu0 %v1860
        %2477 = vmatprep.subr.bf16.mxu0 0
        %2478 = vmatpush1.bf16.msra.mxu0 %v1861
        %2479 = vmatprep.subr.bf16.mxu0 0
        %2480 = vmatpush1.bf16.msra.mxu0 %v1862
        %2481 = vmatprep.subr.bf16.mxu0 0
        %2482 = vmatpush1.bf16.msra.mxu0 %v1863
        %2483 = vmatprep.subr.bf16.mxu0 0
        %2484 = vmatpush1.bf16.msra.mxu0 %v1864
        %2485 = vmatprep.mubr.bf16.mxu0 %v600
        %2486 = vmatmul.mubr.bf16.gmra.mrb[0].mxu0 %v599
        %v2487 = vpop.f32.mrb[0].mxu0
        %v2488 = vadd.f32 %v2448, %v2487
        %v2489 = vpop.f32.mrb[0].mxu0
        %v2490 = vpop.f32.mrb[0].mxu0
        %v2491 = vpop.f32.mrb[0].mxu0
        %2492 = vdwg.mxu0
        %2493 = vmatprep.subr.bf16.mxu0 0
        %2494 = vmatpush1.bf16.msra.mxu0 %v1865
        %2495 = vmatprep.subr.bf16.mxu0 0
        %2496 = vmatpush1.bf16.msra.mxu0 %v1866
        %2497 = vmatprep.subr.bf16.mxu0 0
        %2498 = vmatpush1.bf16.msra.mxu0 %v1867
        %2499 = vmatprep.subr.bf16.mxu0 0
        %2500 = vmatpush1.bf16.msra.mxu0 %v1868
        %2501 = vmatprep.subr.bf16.mxu0 0
        %2502 = vmatpush1.bf16.msra.mxu0 0
        %2503 = vmatprep.subr.bf16.mxu0 0
        %2504 = vmatpush1.bf16.msra.mxu0 0
        %2505 = vmatprep.subr.bf16.mxu0 0
        %2506 = vmatpush1.bf16.msra.mxu0 0
        %2507 = vmatprep.subr.bf16.mxu0 0
        %2508 = vmatpush1.bf16.msra.mxu0 0
        %2509 = vmatprep.subr.bf16.mxu0 0
        %2510 = vmatpush1.bf16.msra.mxu0 0
        %2511 = vmatprep.subr.bf16.mxu0 0
        %2512 = vmatpush1.bf16.msra.mxu0 0
        %2513 = vmatprep.subr.bf16.mxu0 0
        %2514 = vmatpush1.bf16.msra.mxu0 0
        %2515 = vmatprep.subr.bf16.mxu0 0
        %2516 = vmatpush1.bf16.msra.mxu0 0
        %2517 = vmatprep.subr.bf16.mxu0 0
        %2518 = vmatpush1.bf16.msra.mxu0 0
        %2519 = vmatprep.subr.bf16.mxu0 0
        %2520 = vmatpush1.bf16.msra.mxu0 0
        %2521 = vmatprep.subr.bf16.mxu0 0
        %2522 = vmatpush1.bf16.msra.mxu0 0
        %2523 = vmatprep.subr.bf16.mxu0 0
        %2524 = vmatpush1.bf16.msra.mxu0 0
        %2525 = vmatprep.mubr.bf16.mxu0 0
        %2526 = vmatmul.mubr.bf16.gmra.mrb[0].mxu0 %v2051
        %v2527 = vpop.f32.mrb[0].mxu0
        %v2528 = vadd.f32 %v2488, %v2527
        %v2529 = vpop.f32.mrb[0].mxu0
        %v2530 = vpop.f32.mrb[0].mxu0
        %v2531 = vpop.f32.mrb[0].mxu0
        %2532 = vdwg.mxu0
        %v2533 = vmax.f32 %v2528, 0.0
        %v2534 = vand.u32 2147483647, %v2528
        %v2535 = vsub.f32 0.0, %v2534
        %v2536 = vmul.f32 %v2535, 1.442695
        %v2537 = vpow.pop %v2536
        %v2538 = vadd.f32 %v2537, 1.0
        %v2539 = vlog2.pop %v2538
        %v2540 = vmul.f32 %v2539, 0.6931472
        %v2541 = vadd.f32 %v2533, %v2540
        %v2542 = vtanh.pop %v2541
        %v2543 = vmul.f32 %v2528, %v2542
        %v2544 = vld [vmem:[%s3] sm:$0x1]
        %v2545 = vld [vmem:[%s4] sm:$0x1]
        %vm2546 = vcmask 517120
        %v2547 = vsel %vm2546, %v2543, 0.0
        %2548 = vadd.xlane.f32.xlu0 %v2547
        %v2549 = vpop.xlane.xlu0 %2548
        %v2550 = vrcp.pop 64.0
        %v2551 = vmul.f32 %v2549, %v2550
        %v2552 = vsub.f32 %v2543, %v2551
        %v2553 = vmul.f32 %v2552, %v2552
        %v2554 = vsel %vm2546, %v2553, 0.0
        %2555 = vadd.xlane.f32.xlu0 %v2554
        %v2556 = vpop.xlane.xlu0 %2555
        %v2557 = vmul.f32 %v2556, %v2550
        %v2558 = vadd.f32 %v2557, 0.001
        %v2559 = vrsqrt.pop %v2558
        %v2560 = vmul.f32 %v2552, %v2559
        %v2562 = vlaneseq
        %v2563 = vshrl.u32 %v2562, 7
        %v2564 = vsub.s32 0, %v2563
        %v2565 = vrot.slane %v2544, %v2564
        %v2567 = vmul.f32 %v2560, %v2565
        %v2569 = vlaneseq
        %v2570 = vshrl.u32 %v2569, 7
        %v2571 = vsub.s32 0, %v2570
        %v2572 = vrot.slane %v2545, %v2571
        %v2574 = vadd.f32 %v2567, %v2572
        %v2575 = vpack.c.bf16 %v2574, %v2574
        %v2576 = vld [vmem:[%s5] sm:$0xf]
        %v2577 = vld [vmem:[%s5 + $0x4] sm:$0xf]
        %v2578 = vld [vmem:[%s5 + $0x8] sm:$0xf]
        %v2579 = vld [vmem:[%s5 + $0xc] sm:$0xf]
        %v2580 = vld [vmem:[%s5 + $0x10] sm:$0xf]
        %v2581 = vld [vmem:[%s5 + $0x14] sm:$0xf]
        %v2582 = vld [vmem:[%s5 + $0x18] sm:$0xf]
        %v2583 = vld [vmem:[%s5 + $0x1c] sm:$0xf]
        %v2584 = vld [vmem:[%s6] sm:$0x1]
        %v2586 = vlaneseq
        %v2587 = vshrl.u32 %v2586, 7
        %v2588 = vsub.s32 0, %v2587
        %v2589 = vrot.slane %v2584, %v2588
        %v2599 = vunpack.c.l.b16 %v2576
        %v2600 = vunpack.c.l.b16 %v2577
        %v2601 = vunpack.c.l.b16 %v2578
        %v2602 = vunpack.c.l.b16 %v2579
        %v2603 = vunpack.c.l.b16 %v2580
        %v2604 = vunpack.c.l.b16 %v2581
        %v2605 = vunpack.c.l.b16 %v2582
        %v2606 = vunpack.c.l.b16 %v2583
        %v2607 = vpack.c.b16 %v2600, %v2599
        %v2608 = vpack.c.b16 %v2602, %v2601
        %v2609 = vpack.c.b16 %v2604, %v2603
        %v2610 = vpack.c.b16 %v2606, %v2605
        %v2616 = vsel %vm2049, %v2575, 0
        %2618 = vmatprep.subr.bf16.mxu0 0
        %2619 = vmatpush1.bf16.msra.mxu0 %v2607
        %2620 = vmatprep.subr.bf16.mxu0 0
        %2621 = vmatpush1.bf16.msra.mxu0 %v2608
        %2622 = vmatprep.subr.bf16.mxu0 0
        %2623 = vmatpush1.bf16.msra.mxu0 %v2609
        %2624 = vmatprep.subr.bf16.mxu0 0
        %2625 = vmatpush1.bf16.msra.mxu0 %v2610
        %2626 = vmatprep.subr.bf16.mxu0 0
        %2627 = vmatpush1.bf16.msra.mxu0 0
        %2628 = vmatprep.subr.bf16.mxu0 0
        %2629 = vmatpush1.bf16.msra.mxu0 0
        %2630 = vmatprep.subr.bf16.mxu0 0
        %2631 = vmatpush1.bf16.msra.mxu0 0
        %2632 = vmatprep.subr.bf16.mxu0 0
        %2633 = vmatpush1.bf16.msra.mxu0 0
        %2634 = vmatprep.subr.bf16.mxu0 0
        %2635 = vmatpush1.bf16.msra.mxu0 0
        %2636 = vmatprep.subr.bf16.mxu0 0
        %2637 = vmatpush1.bf16.msra.mxu0 0
        %2638 = vmatprep.subr.bf16.mxu0 0
        %2639 = vmatpush1.bf16.msra.mxu0 0
        %2640 = vmatprep.subr.bf16.mxu0 0
        %2641 = vmatpush1.bf16.msra.mxu0 0
        %2642 = vmatprep.subr.bf16.mxu0 0
        %2643 = vmatpush1.bf16.msra.mxu0 0
        %2644 = vmatprep.subr.bf16.mxu0 0
        %2645 = vmatpush1.bf16.msra.mxu0 0
        %2646 = vmatprep.subr.bf16.mxu0 0
        %2647 = vmatpush1.bf16.msra.mxu0 0
        %2648 = vmatprep.subr.bf16.mxu0 0
        %2649 = vmatpush1.bf16.msra.mxu0 0
        %2650 = vmatprep.mubr.bf16.mxu0 0
        %2651 = vmatmul.mubr.bf16.gmra.mrb[0].mxu0 %v2616
        %v2652 = vpop.f32.mrb[0].mxu0
        %v2653 = vadd.f32 %v2589, %v2652
        %v2654 = vpop.f32.mrb[0].mxu0
        %v2655 = vpop.f32.mrb[0].mxu0
        %v2656 = vpop.f32.mrb[0].mxu0
        %2657 = vdwg.mxu0
        %v2658 = vmax.f32 %v2653, 0.0
        %v2659 = vand.u32 2147483647, %v2653
        %v2660 = vsub.f32 0.0, %v2659
        %v2661 = vmul.f32 %v2660, 1.442695
        %v2662 = vpow.pop %v2661
        %v2663 = vadd.f32 %v2662, 1.0
        %v2664 = vlog2.pop %v2663
        %v2665 = vmul.f32 %v2664, 0.6931472
        %v2666 = vadd.f32 %v2658, %v2665
        %v2667 = vtanh.pop %v2666
        %v2668 = vmul.f32 %v2653, %v2667
        %v2669 = vld [vmem:[%s7] sm:$0x1]
        %v2670 = vld [vmem:[%s8] sm:$0x1]
        %vm2671 = vcmask 1041408
        %v2672 = vsel %vm2671, %v2668, 0.0
        %2673 = vadd.xlane.f32.xlu0 %v2672
        %v2674 = vpop.xlane.xlu0 %2673
        %v2675 = vrcp.pop 128.0
        %v2676 = vmul.f32 %v2674, %v2675
        %v2677 = vsub.f32 %v2668, %v2676
        %v2678 = vmul.f32 %v2677, %v2677
        %v2679 = vsel %vm2671, %v2678, 0.0
        %2680 = vadd.xlane.f32.xlu0 %v2679
        %v2681 = vpop.xlane.xlu0 %2680
        %v2682 = vmul.f32 %v2681, %v2675
        %v2683 = vadd.f32 %v2682, 0.001
        %v2684 = vrsqrt.pop %v2683
        %v2685 = vmul.f32 %v2677, %v2684
        %v2687 = vlaneseq
        %v2688 = vshrl.u32 %v2687, 7
        %v2689 = vsub.s32 0, %v2688
        %v2690 = vrot.slane %v2669, %v2689
        %v2692 = vmul.f32 %v2685, %v2690
        %v2694 = vlaneseq
        %v2695 = vshrl.u32 %v2694, 7
        %v2696 = vsub.s32 0, %v2695
        %v2697 = vrot.slane %v2670, %v2696
        %v2699 = vadd.f32 %v2692, %v2697
        %v2700 = vpack.c.bf16 %v2699, %v2699
        %v2701 = vld [vmem:[%s405] sm:$0xff]
        %v2702 = vld [vmem:[%s405 + $0x8] sm:$0xff]
        %v2703 = vld [vmem:[%s405 + $0x10] sm:$0xff]
        %v2704 = vld [vmem:[%s405 + $0x18] sm:$0xff]
        %v2705 = vld [vmem:[%s405 + $0x20] sm:$0xff]
        %v2706 = vld [vmem:[%s405 + $0x28] sm:$0xff]
        %v2707 = vld [vmem:[%s405 + $0x30] sm:$0xff]
        %v2708 = vld [vmem:[%s405 + $0x38] sm:$0xff]
        %v2709 = vld [vmem:[%s405 + $0x40] sm:$0xff]
        %v2710 = vld [vmem:[%s405 + $0x48] sm:$0xff]
        %v2711 = vld [vmem:[%s405 + $0x50] sm:$0xff]
        %v2712 = vld [vmem:[%s405 + $0x58] sm:$0xff]
        %v2713 = vld [vmem:[%s405 + $0x60] sm:$0xff]
        %v2714 = vld [vmem:[%s405 + $0x68] sm:$0xff]
        %v2715 = vld [vmem:[%s405 + $0x70] sm:$0xff]
        %v2716 = vld [vmem:[%s405 + $0x78] sm:$0xff]
        %v2717 = vld [vmem:[%s405 + $0x80] sm:$0xff]
        %v2718 = vld [vmem:[%s405 + $0x88] sm:$0xff]
        %v2719 = vld [vmem:[%s405 + $0x90] sm:$0xff]
        %v2720 = vld [vmem:[%s405 + $0x98] sm:$0xff]
        %v2721 = vld [vmem:[%s405 + $0xa0] sm:$0xff]
        %v2722 = vld [vmem:[%s405 + $0xa8] sm:$0xff]
        %v2723 = vld [vmem:[%s405 + $0xb0] sm:$0xff]
        %v2724 = vld [vmem:[%s405 + $0xb8] sm:$0xff]
        %v2725 = vld [vmem:[%s405 + $0xc0] sm:$0xff]
        %v2726 = vld [vmem:[%s405 + $0xc8] sm:$0xff]
        %v2727 = vld [vmem:[%s405 + $0xd0] sm:$0xff]
        %v2728 = vld [vmem:[%s405 + $0xd8] sm:$0xff]
        %v2729 = vld [vmem:[%s405 + $0xe0] sm:$0xff]
        %v2730 = vld [vmem:[%s405 + $0xe8] sm:$0xff]
        %v2731 = vld [vmem:[%s405 + $0xf0] sm:$0xff]
        %v2732 = vld [vmem:[%s405 + $0xf8] sm:$0xff]
        %v2765 = vunpack.c.l.b16 %v2701
        %v2766 = vunpack.c.h.b16 %v2701
        %v2767 = vunpack.c.l.b16 %v2702
        %v2768 = vunpack.c.h.b16 %v2702
        %v2769 = vunpack.c.l.b16 %v2703
        %v2770 = vunpack.c.h.b16 %v2703
        %v2771 = vunpack.c.l.b16 %v2704
        %v2772 = vunpack.c.h.b16 %v2704
        %v2773 = vunpack.c.l.b16 %v2705
        %v2774 = vunpack.c.h.b16 %v2705
        %v2775 = vunpack.c.l.b16 %v2706
        %v2776 = vunpack.c.h.b16 %v2706
        %v2777 = vunpack.c.l.b16 %v2707
        %v2778 = vunpack.c.h.b16 %v2707
        %v2779 = vunpack.c.l.b16 %v2708
        %v2780 = vunpack.c.h.b16 %v2708
        %v2781 = vunpack.c.l.b16 %v2709
        %v2782 = vunpack.c.h.b16 %v2709
        %v2783 = vunpack.c.l.b16 %v2710
        %v2784 = vunpack.c.h.b16 %v2710
        %v2785 = vunpack.c.l.b16 %v2711
        %v2786 = vunpack.c.h.b16 %v2711
        %v2787 = vunpack.c.l.b16 %v2712
        %v2788 = vunpack.c.h.b16 %v2712
        %v2789 = vunpack.c.l.b16 %v2713
        %v2790 = vunpack.c.h.b16 %v2713
        %v2791 = vunpack.c.l.b16 %v2714
        %v2792 = vunpack.c.h.b16 %v2714
        %v2793 = vunpack.c.l.b16 %v2715
        %v2794 = vunpack.c.h.b16 %v2715
        %v2795 = vunpack.c.l.b16 %v2716
        %v2796 = vunpack.c.h.b16 %v2716
        %v2797 = vunpack.c.l.b16 %v2717
        %v2798 = vunpack.c.h.b16 %v2717
        %v2799 = vunpack.c.l.b16 %v2718
        %v2800 = vunpack.c.h.b16 %v2718
        %v2801 = vunpack.c.l.b16 %v2719
        %v2802 = vunpack.c.h.b16 %v2719
        %v2803 = vunpack.c.l.b16 %v2720
        %v2804 = vunpack.c.h.b16 %v2720
        %v2805 = vunpack.c.l.b16 %v2721
        %v2806 = vunpack.c.h.b16 %v2721
        %v2807 = vunpack.c.l.b16 %v2722
        %v2808 = vunpack.c.h.b16 %v2722
        %v2809 = vunpack.c.l.b16 %v2723
        %v2810 = vunpack.c.h.b16 %v2723
        %v2811 = vunpack.c.l.b16 %v2724
        %v2812 = vunpack.c.h.b16 %v2724
        %v2813 = vunpack.c.l.b16 %v2725
        %v2814 = vunpack.c.h.b16 %v2725
        %v2815 = vunpack.c.l.b16 %v2726
        %v2816 = vunpack.c.h.b16 %v2726
        %v2817 = vunpack.c.l.b16 %v2727
        %v2818 = vunpack.c.h.b16 %v2727
        %v2819 = vunpack.c.l.b16 %v2728
        %v2820 = vunpack.c.h.b16 %v2728
        %v2821 = vunpack.c.l.b16 %v2729
        %v2822 = vunpack.c.h.b16 %v2729
        %v2823 = vunpack.c.l.b16 %v2730
        %v2824 = vunpack.c.h.b16 %v2730
        %v2825 = vunpack.c.l.b16 %v2731
        %v2826 = vunpack.c.h.b16 %v2731
        %v2827 = vunpack.c.l.b16 %v2732
        %v2828 = vunpack.c.h.b16 %v2732
        %v2829 = vpack.c.b16 %v2781, %v2765
        %v2830 = vpack.c.b16 %v2782, %v2766
        %v2831 = vpack.c.b16 %v2783, %v2767
        %v2832 = vpack.c.b16 %v2784, %v2768
        %v2833 = vpack.c.b16 %v2785, %v2769
        %v2834 = vpack.c.b16 %v2786, %v2770
        %v2835 = vpack.c.b16 %v2787, %v2771
        %v2836 = vpack.c.b16 %v2788, %v2772
        %v2837 = vpack.c.b16 %v2789, %v2773
        %v2838 = vpack.c.b16 %v2790, %v2774
        %v2839 = vpack.c.b16 %v2791, %v2775
        %v2840 = vpack.c.b16 %v2792, %v2776
        %v2841 = vpack.c.b16 %v2793, %v2777
        %v2842 = vpack.c.b16 %v2794, %v2778
        %v2843 = vpack.c.b16 %v2795, %v2779
        %v2844 = vpack.c.b16 %v2796, %v2780
        %v2845 = vpack.c.b16 %v2813, %v2797
        %v2846 = vpack.c.b16 %v2814, %v2798
        %v2847 = vpack.c.b16 %v2815, %v2799
        %v2848 = vpack.c.b16 %v2816, %v2800
        %v2849 = vpack.c.b16 %v2817, %v2801
        %v2850 = vpack.c.b16 %v2818, %v2802
        %v2851 = vpack.c.b16 %v2819, %v2803
        %v2852 = vpack.c.b16 %v2820, %v2804
        %v2853 = vpack.c.b16 %v2821, %v2805
        %v2854 = vpack.c.b16 %v2822, %v2806
        %v2855 = vpack.c.b16 %v2823, %v2807
        %v2856 = vpack.c.b16 %v2824, %v2808
        %v2857 = vpack.c.b16 %v2825, %v2809
        %v2858 = vpack.c.b16 %v2826, %v2810
        %v2859 = vpack.c.b16 %v2827, %v2811
        %v2860 = vpack.c.b16 %v2828, %v2812
        %vm2893 = vcmask 261120
        %v2895 = vsel %vm2893, %v2700, 0
        %2897 = vmatprep.subr.bf16.mxu0 %v2830
        %2898 = vmatpush1.bf16.msra.mxu0 %v2829
        %2899 = vmatprep.subr.bf16.mxu0 %v2846
        %2900 = vmatpush1.bf16.msra.mxu0 %v2845
        %2901 = vmatprep.subr.bf16.mxu0 0
        %2902 = vmatpush1.bf16.msra.mxu0 0
        %2903 = vmatprep.subr.bf16.mxu0 0
        %2904 = vmatpush1.bf16.msra.mxu0 0
        %2905 = vmatprep.subr.bf16.mxu0 0
        %2906 = vmatpush1.bf16.msra.mxu0 0
        %2907 = vmatprep.subr.bf16.mxu0 0
        %2908 = vmatpush1.bf16.msra.mxu0 0
        %2909 = vmatprep.subr.bf16.mxu0 0
        %2910 = vmatpush1.bf16.msra.mxu0 0
        %2911 = vmatprep.subr.bf16.mxu0 0
        %2912 = vmatpush1.bf16.msra.mxu0 0
        %2913 = vmatprep.subr.bf16.mxu0 0
        %2914 = vmatpush1.bf16.msra.mxu0 0
        %2915 = vmatprep.subr.bf16.mxu0 0
        %2916 = vmatpush1.bf16.msra.mxu0 0
        %2917 = vmatprep.subr.bf16.mxu0 0
        %2918 = vmatpush1.bf16.msra.mxu0 0
        %2919 = vmatprep.subr.bf16.mxu0 0
        %2920 = vmatpush1.bf16.msra.mxu0 0
        %2921 = vmatprep.subr.bf16.mxu0 0
        %2922 = vmatpush1.bf16.msra.mxu0 0
        %2923 = vmatprep.subr.bf16.mxu0 0
        %2924 = vmatpush1.bf16.msra.mxu0 0
        %2925 = vmatprep.subr.bf16.mxu0 0
        %2926 = vmatpush1.bf16.msra.mxu0 0
        %2927 = vmatprep.subr.bf16.mxu0 0
        %2928 = vmatpush1.bf16.msra.mxu0 0
        %2929 = vmatprep.mubr.bf16.mxu0 0
        %2930 = vmatmul.mubr.bf16.gmra.mrb[0].mxu0 %v2895
        %v2931 = vpop.f32.mrb[0].mxu0
        %v2932 = vadd.f32 0.0, %v2931
        %v2933 = vpop.f32.mrb[0].mxu0
        %v2934 = vadd.f32 0.0, %v2933
        %v2935 = vpop.f32.mrb[0].mxu0
        %v2936 = vpop.f32.mrb[0].mxu0
        %2937 = vdwg.mxu0
        %2938 = vmatprep.subr.bf16.mxu0 %v2832
        %2939 = vmatpush1.bf16.msra.mxu0 %v2831
        %2940 = vmatprep.subr.bf16.mxu0 %v2848
        %2941 = vmatpush1.bf16.msra.mxu0 %v2847
        %2942 = vmatprep.subr.bf16.mxu0 0
        %2943 = vmatpush1.bf16.msra.mxu0 0
        %2944 = vmatprep.subr.bf16.mxu0 0
        %2945 = vmatpush1.bf16.msra.mxu0 0
        %2946 = vmatprep.subr.bf16.mxu0 0
        %2947 = vmatpush1.bf16.msra.mxu0 0
        %2948 = vmatprep.subr.bf16.mxu0 0
        %2949 = vmatpush1.bf16.msra.mxu0 0
        %2950 = vmatprep.subr.bf16.mxu0 0
        %2951 = vmatpush1.bf16.msra.mxu0 0
        %2952 = vmatprep.subr.bf16.mxu0 0
        %2953 = vmatpush1.bf16.msra.mxu0 0
        %2954 = vmatprep.subr.bf16.mxu0 0
        %2955 = vmatpush1.bf16.msra.mxu0 0
        %2956 = vmatprep.subr.bf16.mxu0 0
        %2957 = vmatpush1.bf16.msra.mxu0 0
        %2958 = vmatprep.subr.bf16.mxu0 0
        %2959 = vmatpush1.bf16.msra.mxu0 0
        %2960 = vmatprep.subr.bf16.mxu0 0
        %2961 = vmatpush1.bf16.msra.mxu0 0
        %2962 = vmatprep.subr.bf16.mxu0 0
        %2963 = vmatpush1.bf16.msra.mxu0 0
        %2964 = vmatprep.subr.bf16.mxu0 0
        %2965 = vmatpush1.bf16.msra.mxu0 0
        %2966 = vmatprep.subr.bf16.mxu0 0
        %2967 = vmatpush1.bf16.msra.mxu0 0
        %2968 = vmatprep.subr.bf16.mxu0 0
        %2969 = vmatpush1.bf16.msra.mxu0 0
        %2970 = vmatprep.mubr.bf16.mxu0 0
        %2971 = vmatmul.mubr.bf16.gmra.mrb[0].mxu0 %v2895
        %v2972 = vpop.f32.mrb[0].mxu0
        %v2973 = vadd.f32 0.0, %v2972
        %v2974 = vpop.f32.mrb[0].mxu0
        %v2975 = vadd.f32 0.0, %v2974
        %v2976 = vpop.f32.mrb[0].mxu0
        %v2977 = vpop.f32.mrb[0].mxu0
        %2978 = vdwg.mxu0
        %2979 = vmatprep.subr.bf16.mxu0 %v2834
        %2980 = vmatpush1.bf16.msra.mxu0 %v2833
        %2981 = vmatprep.subr.bf16.mxu0 %v2850
        %2982 = vmatpush1.bf16.msra.mxu0 %v2849
        %2983 = vmatprep.subr.bf16.mxu0 0
        %2984 = vmatpush1.bf16.msra.mxu0 0
        %2985 = vmatprep.subr.bf16.mxu0 0
        %2986 = vmatpush1.bf16.msra.mxu0 0
        %2987 = vmatprep.subr.bf16.mxu0 0
        %2988 = vmatpush1.bf16.msra.mxu0 0
        %2989 = vmatprep.subr.bf16.mxu0 0
        %2990 = vmatpush1.bf16.msra.mxu0 0
        %2991 = vmatprep.subr.bf16.mxu0 0
        %2992 = vmatpush1.bf16.msra.mxu0 0
        %2993 = vmatprep.subr.bf16.mxu0 0
        %2994 = vmatpush1.bf16.msra.mxu0 0
        %2995 = vmatprep.subr.bf16.mxu0 0
        %2996 = vmatpush1.bf16.msra.mxu0 0
        %2997 = vmatprep.subr.bf16.mxu0 0
        %2998 = vmatpush1.bf16.msra.mxu0 0
        %2999 = vmatprep.subr.bf16.mxu0 0
        %3000 = vmatpush1.bf16.msra.mxu0 0
        %3001 = vmatprep.subr.bf16.mxu0 0
        %3002 = vmatpush1.bf16.msra.mxu0 0
        %3003 = vmatprep.subr.bf16.mxu0 0
        %3004 = vmatpush1.bf16.msra.mxu0 0
        %3005 = vmatprep.subr.bf16.mxu0 0
        %3006 = vmatpush1.bf16.msra.mxu0 0
        %3007 = vmatprep.subr.bf16.mxu0 0
        %3008 = vmatpush1.bf16.msra.mxu0 0
        %3009 = vmatprep.subr.bf16.mxu0 0
        %3010 = vmatpush1.bf16.msra.mxu0 0
        %3011 = vmatprep.mubr.bf16.mxu0 0
        %3012 = vmatmul.mubr.bf16.gmra.mrb[0].mxu0 %v2895
        %v3013 = vpop.f32.mrb[0].mxu0
        %v3014 = vadd.f32 0.0, %v3013
        %v3015 = vpop.f32.mrb[0].mxu0
        %v3016 = vadd.f32 0.0, %v3015
        %v3017 = vpop.f32.mrb[0].mxu0
        %v3018 = vpop.f32.mrb[0].mxu0
        %3019 = vdwg.mxu0
        %3020 = vmatprep.subr.bf16.mxu0 %v2836
        %3021 = vmatpush1.bf16.msra.mxu0 %v2835
        %3022 = vmatprep.subr.bf16.mxu0 %v2852
        %3023 = vmatpush1.bf16.msra.mxu0 %v2851
        %3024 = vmatprep.subr.bf16.mxu0 0
        %3025 = vmatpush1.bf16.msra.mxu0 0
        %3026 = vmatprep.subr.bf16.mxu0 0
        %3027 = vmatpush1.bf16.msra.mxu0 0
        %3028 = vmatprep.subr.bf16.mxu0 0
        %3029 = vmatpush1.bf16.msra.mxu0 0
        %3030 = vmatprep.subr.bf16.mxu0 0
        %3031 = vmatpush1.bf16.msra.mxu0 0
        %3032 = vmatprep.subr.bf16.mxu0 0
        %3033 = vmatpush1.bf16.msra.mxu0 0
        %3034 = vmatprep.subr.bf16.mxu0 0
        %3035 = vmatpush1.bf16.msra.mxu0 0
        %3036 = vmatprep.subr.bf16.mxu0 0
        %3037 = vmatpush1.bf16.msra.mxu0 0
        %3038 = vmatprep.subr.bf16.mxu0 0
        %3039 = vmatpush1.bf16.msra.mxu0 0
        %3040 = vmatprep.subr.bf16.mxu0 0
        %3041 = vmatpush1.bf16.msra.mxu0 0
        %3042 = vmatprep.subr.bf16.mxu0 0
        %3043 = vmatpush1.bf16.msra.mxu0 0
        %3044 = vmatprep.subr.bf16.mxu0 0
        %3045 = vmatpush1.bf16.msra.mxu0 0
        %3046 = vmatprep.subr.bf16.mxu0 0
        %3047 = vmatpush1.bf16.msra.mxu0 0
        %3048 = vmatprep.subr.bf16.mxu0 0
        %3049 = vmatpush1.bf16.msra.mxu0 0
        %3050 = vmatprep.subr.bf16.mxu0 0
        %3051 = vmatpush1.bf16.msra.mxu0 0
        %3052 = vmatprep.mubr.bf16.mxu0 0
        %3053 = vmatmul.mubr.bf16.gmra.mrb[0].mxu0 %v2895
        %v3054 = vpop.f32.mrb[0].mxu0
        %v3055 = vadd.f32 0.0, %v3054
        %v3056 = vpop.f32.mrb[0].mxu0
        %v3057 = vadd.f32 0.0, %v3056
        %v3058 = vpop.f32.mrb[0].mxu0
        %v3059 = vpop.f32.mrb[0].mxu0
        %3060 = vdwg.mxu0
        %3061 = vmatprep.subr.bf16.mxu0 %v2838
        %3062 = vmatpush1.bf16.msra.mxu0 %v2837
        %3063 = vmatprep.subr.bf16.mxu0 %v2854
        %3064 = vmatpush1.bf16.msra.mxu0 %v2853
        %3065 = vmatprep.subr.bf16.mxu0 0
        %3066 = vmatpush1.bf16.msra.mxu0 0
        %3067 = vmatprep.subr.bf16.mxu0 0
        %3068 = vmatpush1.bf16.msra.mxu0 0
        %3069 = vmatprep.subr.bf16.mxu0 0
        %3070 = vmatpush1.bf16.msra.mxu0 0
        %3071 = vmatprep.subr.bf16.mxu0 0
        %3072 = vmatpush1.bf16.msra.mxu0 0
        %3073 = vmatprep.subr.bf16.mxu0 0
        %3074 = vmatpush1.bf16.msra.mxu0 0
        %3075 = vmatprep.subr.bf16.mxu0 0
        %3076 = vmatpush1.bf16.msra.mxu0 0
        %3077 = vmatprep.subr.bf16.mxu0 0
        %3078 = vmatpush1.bf16.msra.mxu0 0
        %3079 = vmatprep.subr.bf16.mxu0 0
        %3080 = vmatpush1.bf16.msra.mxu0 0
        %3081 = vmatprep.subr.bf16.mxu0 0
        %3082 = vmatpush1.bf16.msra.mxu0 0
        %3083 = vmatprep.subr.bf16.mxu0 0
        %3084 = vmatpush1.bf16.msra.mxu0 0
        %3085 = vmatprep.subr.bf16.mxu0 0
        %3086 = vmatpush1.bf16.msra.mxu0 0
        %3087 = vmatprep.subr.bf16.mxu0 0
        %3088 = vmatpush1.bf16.msra.mxu0 0
        %3089 = vmatprep.subr.bf16.mxu0 0
        %3090 = vmatpush1.bf16.msra.mxu0 0
        %3091 = vmatprep.subr.bf16.mxu0 0
        %3092 = vmatpush1.bf16.msra.mxu0 0
        %3093 = vmatprep.mubr.bf16.mxu0 0
        %3094 = vmatmul.mubr.bf16.gmra.mrb[0].mxu0 %v2895
        %v3095 = vpop.f32.mrb[0].mxu0
        %v3096 = vadd.f32 0.0, %v3095
        %v3097 = vpop.f32.mrb[0].mxu0
        %v3098 = vadd.f32 0.0, %v3097
        %v3099 = vpop.f32.mrb[0].mxu0
        %v3100 = vpop.f32.mrb[0].mxu0
        %3101 = vdwg.mxu0
        %3102 = vmatprep.subr.bf16.mxu0 %v2840
        %3103 = vmatpush1.bf16.msra.mxu0 %v2839
        %3104 = vmatprep.subr.bf16.mxu0 %v2856
        %3105 = vmatpush1.bf16.msra.mxu0 %v2855
        %3106 = vmatprep.subr.bf16.mxu0 0
        %3107 = vmatpush1.bf16.msra.mxu0 0
        %3108 = vmatprep.subr.bf16.mxu0 0
        %3109 = vmatpush1.bf16.msra.mxu0 0
        %3110 = vmatprep.subr.bf16.mxu0 0
        %3111 = vmatpush1.bf16.msra.mxu0 0
        %3112 = vmatprep.subr.bf16.mxu0 0
        %3113 = vmatpush1.bf16.msra.mxu0 0
        %3114 = vmatprep.subr.bf16.mxu0 0
        %3115 = vmatpush1.bf16.msra.mxu0 0
        %3116 = vmatprep.subr.bf16.mxu0 0
        %3117 = vmatpush1.bf16.msra.mxu0 0
        %3118 = vmatprep.subr.bf16.mxu0 0
        %3119 = vmatpush1.bf16.msra.mxu0 0
        %3120 = vmatprep.subr.bf16.mxu0 0
        %3121 = vmatpush1.bf16.msra.mxu0 0
        %3122 = vmatprep.subr.bf16.mxu0 0
        %3123 = vmatpush1.bf16.msra.mxu0 0
        %3124 = vmatprep.subr.bf16.mxu0 0
        %3125 = vmatpush1.bf16.msra.mxu0 0
        %3126 = vmatprep.subr.bf16.mxu0 0
        %3127 = vmatpush1.bf16.msra.mxu0 0
        %3128 = vmatprep.subr.bf16.mxu0 0
        %3129 = vmatpush1.bf16.msra.mxu0 0
        %3130 = vmatprep.subr.bf16.mxu0 0
        %3131 = vmatpush1.bf16.msra.mxu0 0
        %3132 = vmatprep.subr.bf16.mxu0 0
        %3133 = vmatpush1.bf16.msra.mxu0 0
        %3134 = vmatprep.mubr.bf16.mxu0 0
        %3135 = vmatmul.mubr.bf16.gmra.mrb[0].mxu0 %v2895
        %v3136 = vpop.f32.mrb[0].mxu0
        %v3137 = vadd.f32 0.0, %v3136
        %v3138 = vpop.f32.mrb[0].mxu0
        %v3139 = vadd.f32 0.0, %v3138
        %v3140 = vpop.f32.mrb[0].mxu0
        %v3141 = vpop.f32.mrb[0].mxu0
        %3142 = vdwg.mxu0
        %3143 = vmatprep.subr.bf16.mxu0 %v2842
        %3144 = vmatpush1.bf16.msra.mxu0 %v2841
        %3145 = vmatprep.subr.bf16.mxu0 %v2858
        %3146 = vmatpush1.bf16.msra.mxu0 %v2857
        %3147 = vmatprep.subr.bf16.mxu0 0
        %3148 = vmatpush1.bf16.msra.mxu0 0
        %3149 = vmatprep.subr.bf16.mxu0 0
        %3150 = vmatpush1.bf16.msra.mxu0 0
        %3151 = vmatprep.subr.bf16.mxu0 0
        %3152 = vmatpush1.bf16.msra.mxu0 0
        %3153 = vmatprep.subr.bf16.mxu0 0
        %3154 = vmatpush1.bf16.msra.mxu0 0
        %3155 = vmatprep.subr.bf16.mxu0 0
        %3156 = vmatpush1.bf16.msra.mxu0 0
        %3157 = vmatprep.subr.bf16.mxu0 0
        %3158 = vmatpush1.bf16.msra.mxu0 0
        %3159 = vmatprep.subr.bf16.mxu0 0
        %3160 = vmatpush1.bf16.msra.mxu0 0
        %3161 = vmatprep.subr.bf16.mxu0 0
        %3162 = vmatpush1.bf16.msra.mxu0 0
        %3163 = vmatprep.subr.bf16.mxu0 0
        %3164 = vmatpush1.bf16.msra.mxu0 0
        %3165 = vmatprep.subr.bf16.mxu0 0
        %3166 = vmatpush1.bf16.msra.mxu0 0
        %3167 = vmatprep.subr.bf16.mxu0 0
        %3168 = vmatpush1.bf16.msra.mxu0 0
        %3169 = vmatprep.subr.bf16.mxu0 0
        %3170 = vmatpush1.bf16.msra.mxu0 0
        %3171 = vmatprep.subr.bf16.mxu0 0
        %3172 = vmatpush1.bf16.msra.mxu0 0
        %3173 = vmatprep.subr.bf16.mxu0 0
        %3174 = vmatpush1.bf16.msra.mxu0 0
        %3175 = vmatprep.mubr.bf16.mxu0 0
        %3176 = vmatmul.mubr.bf16.gmra.mrb[0].mxu0 %v2895
        %v3177 = vpop.f32.mrb[0].mxu0
        %v3178 = vadd.f32 0.0, %v3177
        %v3179 = vpop.f32.mrb[0].mxu0
        %v3180 = vadd.f32 0.0, %v3179
        %v3181 = vpop.f32.mrb[0].mxu0
        %v3182 = vpop.f32.mrb[0].mxu0
        %3183 = vdwg.mxu0
        %3184 = vmatprep.subr.bf16.mxu0 %v2844
        %3185 = vmatpush1.bf16.msra.mxu0 %v2843
        %3186 = vmatprep.subr.bf16.mxu0 %v2860
        %3187 = vmatpush1.bf16.msra.mxu0 %v2859
        %3188 = vmatprep.subr.bf16.mxu0 0
        %3189 = vmatpush1.bf16.msra.mxu0 0
        %3190 = vmatprep.subr.bf16.mxu0 0
        %3191 = vmatpush1.bf16.msra.mxu0 0
        %3192 = vmatprep.subr.bf16.mxu0 0
        %3193 = vmatpush1.bf16.msra.mxu0 0
        %3194 = vmatprep.subr.bf16.mxu0 0
        %3195 = vmatpush1.bf16.msra.mxu0 0
        %3196 = vmatprep.subr.bf16.mxu0 0
        %3197 = vmatpush1.bf16.msra.mxu0 0
        %3198 = vmatprep.subr.bf16.mxu0 0
        %3199 = vmatpush1.bf16.msra.mxu0 0
        %3200 = vmatprep.subr.bf16.mxu0 0
        %3201 = vmatpush1.bf16.msra.mxu0 0
        %3202 = vmatprep.subr.bf16.mxu0 0
        %3203 = vmatpush1.bf16.msra.mxu0 0
        %3204 = vmatprep.subr.bf16.mxu0 0
        %3205 = vmatpush1.bf16.msra.mxu0 0
        %3206 = vmatprep.subr.bf16.mxu0 0
        %3207 = vmatpush1.bf16.msra.mxu0 0
        %3208 = vmatprep.subr.bf16.mxu0 0
        %3209 = vmatpush1.bf16.msra.mxu0 0
        %3210 = vmatprep.subr.bf16.mxu0 0
        %3211 = vmatpush1.bf16.msra.mxu0 0
        %3212 = vmatprep.subr.bf16.mxu0 0
        %3213 = vmatpush1.bf16.msra.mxu0 0
        %3214 = vmatprep.subr.bf16.mxu0 0
        %3215 = vmatpush1.bf16.msra.mxu0 0
        %3216 = vmatprep.mubr.bf16.mxu0 0
        %3217 = vmatmul.mubr.bf16.gmra.mrb[0].mxu0 %v2895
        %v3218 = vpop.f32.mrb[0].mxu0
        %v3219 = vadd.f32 0.0, %v3218
        %v3220 = vpop.f32.mrb[0].mxu0
        %v3221 = vadd.f32 0.0, %v3220
        %v3222 = vpop.f32.mrb[0].mxu0
        %v3223 = vpop.f32.mrb[0].mxu0
        %3224 = vdwg.mxu0
        %3225 = vst [vmem:[%s439] sm:$0x3] %v2932
        %3226 = vst [vmem:[%s439 + $0x8] sm:$0x3] %v2934
        %3227 = vst [vmem:[%s439 + $0x10] sm:$0x3] %v2973
        %3228 = vst [vmem:[%s439 + $0x18] sm:$0x3] %v2975
        %3229 = vst [vmem:[%s439 + $0x20] sm:$0x3] %v3014
        %3230 = vst [vmem:[%s439 + $0x28] sm:$0x3] %v3016
        %3231 = vst [vmem:[%s439 + $0x30] sm:$0x3] %v3055
        %3232 = vst [vmem:[%s439 + $0x38] sm:$0x3] %v3057
        %3233 = vst [vmem:[%s439 + $0x40] sm:$0x3] %v3096
        %3234 = vst [vmem:[%s439 + $0x48] sm:$0x3] %v3098
        %3235 = vst [vmem:[%s439 + $0x50] sm:$0x3] %v3137
        %3236 = vst [vmem:[%s439 + $0x58] sm:$0x3] %v3139
        %3237 = vst [vmem:[%s439 + $0x60] sm:$0x3] %v3178
        %3238 = vst [vmem:[%s439 + $0x68] sm:$0x3] %v3180
        %3239 = vst [vmem:[%s439 + $0x70] sm:$0x3] %v3219
        %3240 = vst [vmem:[%s439 + $0x78] sm:$0x3] %v3221
        %3242 = vrot.lane.b32.xlu0 %v2700, 96
        %v3243 = vpop.permute.xlu0 %3242
        %v3245 = vsel %vm2893, %v3243, 0
        %3247 = vmatprep.subr.bf16.mxu0 %v2830
        %3248 = vmatpush1.bf16.msra.mxu0 %v2829
        %3249 = vmatprep.subr.bf16.mxu0 %v2846
        %3250 = vmatpush1.bf16.msra.mxu0 %v2845
        %3251 = vmatprep.subr.bf16.mxu0 0
        %3252 = vmatpush1.bf16.msra.mxu0 0
        %3253 = vmatprep.subr.bf16.mxu0 0
        %3254 = vmatpush1.bf16.msra.mxu0 0
        %3255 = vmatprep.subr.bf16.mxu0 0
        %3256 = vmatpush1.bf16.msra.mxu0 0
        %3257 = vmatprep.subr.bf16.mxu0 0
        %3258 = vmatpush1.bf16.msra.mxu0 0
        %3259 = vmatprep.subr.bf16.mxu0 0
        %3260 = vmatpush1.bf16.msra.mxu0 0
        %3261 = vmatprep.subr.bf16.mxu0 0
        %3262 = vmatpush1.bf16.msra.mxu0 0
        %3263 = vmatprep.subr.bf16.mxu0 0
        %3264 = vmatpush1.bf16.msra.mxu0 0
        %3265 = vmatprep.subr.bf16.mxu0 0
        %3266 = vmatpush1.bf16.msra.mxu0 0
        %3267 = vmatprep.subr.bf16.mxu0 0
        %3268 = vmatpush1.bf16.msra.mxu0 0
        %3269 = vmatprep.subr.bf16.mxu0 0
        %3270 = vmatpush1.bf16.msra.mxu0 0
        %3271 = vmatprep.subr.bf16.mxu0 0
        %3272 = vmatpush1.bf16.msra.mxu0 0
        %3273 = vmatprep.subr.bf16.mxu0 0
        %3274 = vmatpush1.bf16.msra.mxu0 0
        %3275 = vmatprep.subr.bf16.mxu0 0
        %3276 = vmatpush1.bf16.msra.mxu0 0
        %3277 = vmatprep.subr.bf16.mxu0 0
        %3278 = vmatpush1.bf16.msra.mxu0 0
        %3279 = vmatprep.mubr.bf16.mxu0 0
        %3280 = vmatmul.mubr.bf16.gmra.mrb[0].mxu0 %v3245
        %v3281 = vpop.f32.mrb[0].mxu0
        %v3282 = vadd.f32 0.0, %v3281
        %v3283 = vpop.f32.mrb[0].mxu0
        %v3284 = vadd.f32 0.0, %v3283
        %v3285 = vpop.f32.mrb[0].mxu0
        %v3286 = vpop.f32.mrb[0].mxu0
        %3287 = vdwg.mxu0
        %3288 = vmatprep.subr.bf16.mxu0 %v2832
        %3289 = vmatpush1.bf16.msra.mxu0 %v2831
        %3290 = vmatprep.subr.bf16.mxu0 %v2848
        %3291 = vmatpush1.bf16.msra.mxu0 %v2847
        %3292 = vmatprep.subr.bf16.mxu0 0
        %3293 = vmatpush1.bf16.msra.mxu0 0
        %3294 = vmatprep.subr.bf16.mxu0 0
        %3295 = vmatpush1.bf16.msra.mxu0 0
        %3296 = vmatprep.subr.bf16.mxu0 0
        %3297 = vmatpush1.bf16.msra.mxu0 0
        %3298 = vmatprep.subr.bf16.mxu0 0
        %3299 = vmatpush1.bf16.msra.mxu0 0
        %3300 = vmatprep.subr.bf16.mxu0 0
        %3301 = vmatpush1.bf16.msra.mxu0 0
        %3302 = vmatprep.subr.bf16.mxu0 0
        %3303 = vmatpush1.bf16.msra.mxu0 0
        %3304 = vmatprep.subr.bf16.mxu0 0
        %3305 = vmatpush1.bf16.msra.mxu0 0
        %3306 = vmatprep.subr.bf16.mxu0 0
        %3307 = vmatpush1.bf16.msra.mxu0 0
        %3308 = vmatprep.subr.bf16.mxu0 0
        %3309 = vmatpush1.bf16.msra.mxu0 0
        %3310 = vmatprep.subr.bf16.mxu0 0
        %3311 = vmatpush1.bf16.msra.mxu0 0
        %3312 = vmatprep.subr.bf16.mxu0 0
        %3313 = vmatpush1.bf16.msra.mxu0 0
        %3314 = vmatprep.subr.bf16.mxu0 0
        %3315 = vmatpush1.bf16.msra.mxu0 0
        %3316 = vmatprep.subr.bf16.mxu0 0
        %3317 = vmatpush1.bf16.msra.mxu0 0
        %3318 = vmatprep.subr.bf16.mxu0 0
        %3319 = vmatpush1.bf16.msra.mxu0 0
        %3320 = vmatprep.mubr.bf16.mxu0 0
        %3321 = vmatmul.mubr.bf16.gmra.mrb[0].mxu0 %v3245
        %v3322 = vpop.f32.mrb[0].mxu0
        %v3323 = vadd.f32 0.0, %v3322
        %v3324 = vpop.f32.mrb[0].mxu0
        %v3325 = vadd.f32 0.0, %v3324
        %v3326 = vpop.f32.mrb[0].mxu0
        %v3327 = vpop.f32.mrb[0].mxu0
        %3328 = vdwg.mxu0
        %3329 = vmatprep.subr.bf16.mxu0 %v2834
        %3330 = vmatpush1.bf16.msra.mxu0 %v2833
        %3331 = vmatprep.subr.bf16.mxu0 %v2850
        %3332 = vmatpush1.bf16.msra.mxu0 %v2849
        %3333 = vmatprep.subr.bf16.mxu0 0
        %3334 = vmatpush1.bf16.msra.mxu0 0
        %3335 = vmatprep.subr.bf16.mxu0 0
        %3336 = vmatpush1.bf16.msra.mxu0 0
        %3337 = vmatprep.subr.bf16.mxu0 0
        %3338 = vmatpush1.bf16.msra.mxu0 0
        %3339 = vmatprep.subr.bf16.mxu0 0
        %3340 = vmatpush1.bf16.msra.mxu0 0
        %3341 = vmatprep.subr.bf16.mxu0 0
        %3342 = vmatpush1.bf16.msra.mxu0 0
        %3343 = vmatprep.subr.bf16.mxu0 0
        %3344 = vmatpush1.bf16.msra.mxu0 0
        %3345 = vmatprep.subr.bf16.mxu0 0
        %3346 = vmatpush1.bf16.msra.mxu0 0
        %3347 = vmatprep.subr.bf16.mxu0 0
        %3348 = vmatpush1.bf16.msra.mxu0 0
        %3349 = vmatprep.subr.bf16.mxu0 0
        %3350 = vmatpush1.bf16.msra.mxu0 0
        %3351 = vmatprep.subr.bf16.mxu0 0
        %3352 = vmatpush1.bf16.msra.mxu0 0
        %3353 = vmatprep.subr.bf16.mxu0 0
        %3354 = vmatpush1.bf16.msra.mxu0 0
        %3355 = vmatprep.subr.bf16.mxu0 0
        %3356 = vmatpush1.bf16.msra.mxu0 0
        %3357 = vmatprep.subr.bf16.mxu0 0
        %3358 = vmatpush1.bf16.msra.mxu0 0
        %3359 = vmatprep.subr.bf16.mxu0 0
        %3360 = vmatpush1.bf16.msra.mxu0 0
        %3361 = vmatprep.mubr.bf16.mxu0 0
        %3362 = vmatmul.mubr.bf16.gmra.mrb[0].mxu0 %v3245
        %v3363 = vpop.f32.mrb[0].mxu0
        %v3364 = vadd.f32 0.0, %v3363
        %v3365 = vpop.f32.mrb[0].mxu0
        %v3366 = vadd.f32 0.0, %v3365
        %v3367 = vpop.f32.mrb[0].mxu0
        %v3368 = vpop.f32.mrb[0].mxu0
        %3369 = vdwg.mxu0
        %3370 = vmatprep.subr.bf16.mxu0 %v2836
        %3371 = vmatpush1.bf16.msra.mxu0 %v2835
        %3372 = vmatprep.subr.bf16.mxu0 %v2852
        %3373 = vmatpush1.bf16.msra.mxu0 %v2851
        %3374 = vmatprep.subr.bf16.mxu0 0
        %3375 = vmatpush1.bf16.msra.mxu0 0
        %3376 = vmatprep.subr.bf16.mxu0 0
        %3377 = vmatpush1.bf16.msra.mxu0 0
        %3378 = vmatprep.subr.bf16.mxu0 0
        %3379 = vmatpush1.bf16.msra.mxu0 0
        %3380 = vmatprep.subr.bf16.mxu0 0
        %3381 = vmatpush1.bf16.msra.mxu0 0
        %3382 = vmatprep.subr.bf16.mxu0 0
        %3383 = vmatpush1.bf16.msra.mxu0 0
        %3384 = vmatprep.subr.bf16.mxu0 0
        %3385 = vmatpush1.bf16.msra.mxu0 0
        %3386 = vmatprep.subr.bf16.mxu0 0
        %3387 = vmatpush1.bf16.msra.mxu0 0
        %3388 = vmatprep.subr.bf16.mxu0 0
        %3389 = vmatpush1.bf16.msra.mxu0 0
        %3390 = vmatprep.subr.bf16.mxu0 0
        %3391 = vmatpush1.bf16.msra.mxu0 0
        %3392 = vmatprep.subr.bf16.mxu0 0
        %3393 = vmatpush1.bf16.msra.mxu0 0
        %3394 = vmatprep.subr.bf16.mxu0 0
        %3395 = vmatpush1.bf16.msra.mxu0 0
        %3396 = vmatprep.subr.bf16.mxu0 0
        %3397 = vmatpush1.bf16.msra.mxu0 0
        %3398 = vmatprep.subr.bf16.mxu0 0
        %3399 = vmatpush1.bf16.msra.mxu0 0
        %3400 = vmatprep.subr.bf16.mxu0 0
        %3401 = vmatpush1.bf16.msra.mxu0 0
        %3402 = vmatprep.mubr.bf16.mxu0 0
        %3403 = vmatmul.mubr.bf16.gmra.mrb[0].mxu0 %v3245
        %v3404 = vpop.f32.mrb[0].mxu0
        %v3405 = vadd.f32 0.0, %v3404
        %v3406 = vpop.f32.mrb[0].mxu0
        %v3407 = vadd.f32 0.0, %v3406
        %v3408 = vpop.f32.mrb[0].mxu0
        %v3409 = vpop.f32.mrb[0].mxu0
        %3410 = vdwg.mxu0
        %3411 = vmatprep.subr.bf16.mxu0 %v2838
        %3412 = vmatpush1.bf16.msra.mxu0 %v2837
        %3413 = vmatprep.subr.bf16.mxu0 %v2854
        %3414 = vmatpush1.bf16.msra.mxu0 %v2853
        %3415 = vmatprep.subr.bf16.mxu0 0
        %3416 = vmatpush1.bf16.msra.mxu0 0
        %3417 = vmatprep.subr.bf16.mxu0 0
        %3418 = vmatpush1.bf16.msra.mxu0 0
        %3419 = vmatprep.subr.bf16.mxu0 0
        %3420 = vmatpush1.bf16.msra.mxu0 0
        %3421 = vmatprep.subr.bf16.mxu0 0
        %3422 = vmatpush1.bf16.msra.mxu0 0
        %3423 = vmatprep.subr.bf16.mxu0 0
        %3424 = vmatpush1.bf16.msra.mxu0 0
        %3425 = vmatprep.subr.bf16.mxu0 0
        %3426 = vmatpush1.bf16.msra.mxu0 0
        %3427 = vmatprep.subr.bf16.mxu0 0
        %3428 = vmatpush1.bf16.msra.mxu0 0
        %3429 = vmatprep.subr.bf16.mxu0 0
        %3430 = vmatpush1.bf16.msra.mxu0 0
        %3431 = vmatprep.subr.bf16.mxu0 0
        %3432 = vmatpush1.bf16.msra.mxu0 0
        %3433 = vmatprep.subr.bf16.mxu0 0
        %3434 = vmatpush1.bf16.msra.mxu0 0
        %3435 = vmatprep.subr.bf16.mxu0 0
        %3436 = vmatpush1.bf16.msra.mxu0 0
        %3437 = vmatprep.subr.bf16.mxu0 0
        %3438 = vmatpush1.bf16.msra.mxu0 0
        %3439 = vmatprep.subr.bf16.mxu0 0
        %3440 = vmatpush1.bf16.msra.mxu0 0
        %3441 = vmatprep.subr.bf16.mxu0 0
        %3442 = vmatpush1.bf16.msra.mxu0 0
        %3443 = vmatprep.mubr.bf16.mxu0 0
        %3444 = vmatmul.mubr.bf16.gmra.mrb[0].mxu0 %v3245
        %v3445 = vpop.f32.mrb[0].mxu0
        %v3446 = vadd.f32 0.0, %v3445
        %v3447 = vpop.f32.mrb[0].mxu0
        %v3448 = vadd.f32 0.0, %v3447
        %v3449 = vpop.f32.mrb[0].mxu0
        %v3450 = vpop.f32.mrb[0].mxu0
        %3451 = vdwg.mxu0
        %3452 = vmatprep.subr.bf16.mxu0 %v2840
        %3453 = vmatpush1.bf16.msra.mxu0 %v2839
        %3454 = vmatprep.subr.bf16.mxu0 %v2856
        %3455 = vmatpush1.bf16.msra.mxu0 %v2855
        %3456 = vmatprep.subr.bf16.mxu0 0
        %3457 = vmatpush1.bf16.msra.mxu0 0
        %3458 = vmatprep.subr.bf16.mxu0 0
        %3459 = vmatpush1.bf16.msra.mxu0 0
        %3460 = vmatprep.subr.bf16.mxu0 0
        %3461 = vmatpush1.bf16.msra.mxu0 0
        %3462 = vmatprep.subr.bf16.mxu0 0
        %3463 = vmatpush1.bf16.msra.mxu0 0
        %3464 = vmatprep.subr.bf16.mxu0 0
        %3465 = vmatpush1.bf16.msra.mxu0 0
        %3466 = vmatprep.subr.bf16.mxu0 0
        %3467 = vmatpush1.bf16.msra.mxu0 0
        %3468 = vmatprep.subr.bf16.mxu0 0
        %3469 = vmatpush1.bf16.msra.mxu0 0
        %3470 = vmatprep.subr.bf16.mxu0 0
        %3471 = vmatpush1.bf16.msra.mxu0 0
        %3472 = vmatprep.subr.bf16.mxu0 0
        %3473 = vmatpush1.bf16.msra.mxu0 0
        %3474 = vmatprep.subr.bf16.mxu0 0
        %3475 = vmatpush1.bf16.msra.mxu0 0
        %3476 = vmatprep.subr.bf16.mxu0 0
        %3477 = vmatpush1.bf16.msra.mxu0 0
        %3478 = vmatprep.subr.bf16.mxu0 0
        %3479 = vmatpush1.bf16.msra.mxu0 0
        %3480 = vmatprep.subr.bf16.mxu0 0
        %3481 = vmatpush1.bf16.msra.mxu0 0
        %3482 = vmatprep.subr.bf16.mxu0 0
        %3483 = vmatpush1.bf16.msra.mxu0 0
        %3484 = vmatprep.mubr.bf16.mxu0 0
        %3485 = vmatmul.mubr.bf16.gmra.mrb[0].mxu0 %v3245
        %v3486 = vpop.f32.mrb[0].mxu0
        %v3487 = vadd.f32 0.0, %v3486
        %v3488 = vpop.f32.mrb[0].mxu0
        %v3489 = vadd.f32 0.0, %v3488
        %v3490 = vpop.f32.mrb[0].mxu0
        %v3491 = vpop.f32.mrb[0].mxu0
        %3492 = vdwg.mxu0
        %3493 = vmatprep.subr.bf16.mxu0 %v2842
        %3494 = vmatpush1.bf16.msra.mxu0 %v2841
        %3495 = vmatprep.subr.bf16.mxu0 %v2858
        %3496 = vmatpush1.bf16.msra.mxu0 %v2857
        %3497 = vmatprep.subr.bf16.mxu0 0
        %3498 = vmatpush1.bf16.msra.mxu0 0
        %3499 = vmatprep.subr.bf16.mxu0 0
        %3500 = vmatpush1.bf16.msra.mxu0 0
        %3501 = vmatprep.subr.bf16.mxu0 0
        %3502 = vmatpush1.bf16.msra.mxu0 0
        %3503 = vmatprep.subr.bf16.mxu0 0
        %3504 = vmatpush1.bf16.msra.mxu0 0
        %3505 = vmatprep.subr.bf16.mxu0 0
        %3506 = vmatpush1.bf16.msra.mxu0 0
        %3507 = vmatprep.subr.bf16.mxu0 0
        %3508 = vmatpush1.bf16.msra.mxu0 0
        %3509 = vmatprep.subr.bf16.mxu0 0
        %3510 = vmatpush1.bf16.msra.mxu0 0
        %3511 = vmatprep.subr.bf16.mxu0 0
        %3512 = vmatpush1.bf16.msra.mxu0 0
        %3513 = vmatprep.subr.bf16.mxu0 0
        %3514 = vmatpush1.bf16.msra.mxu0 0
        %3515 = vmatprep.subr.bf16.mxu0 0
        %3516 = vmatpush1.bf16.msra.mxu0 0
        %3517 = vmatprep.subr.bf16.mxu0 0
        %3518 = vmatpush1.bf16.msra.mxu0 0
        %3519 = vmatprep.subr.bf16.mxu0 0
        %3520 = vmatpush1.bf16.msra.mxu0 0
        %3521 = vmatprep.subr.bf16.mxu0 0
        %3522 = vmatpush1.bf16.msra.mxu0 0
        %3523 = vmatprep.subr.bf16.mxu0 0
        %3524 = vmatpush1.bf16.msra.mxu0 0
        %3525 = vmatprep.mubr.bf16.mxu0 0
        %3526 = vmatmul.mubr.bf16.gmra.mrb[0].mxu0 %v3245
        %v3527 = vpop.f32.mrb[0].mxu0
        %v3528 = vadd.f32 0.0, %v3527
        %v3529 = vpop.f32.mrb[0].mxu0
        %v3530 = vadd.f32 0.0, %v3529
        %v3531 = vpop.f32.mrb[0].mxu0
        %v3532 = vpop.f32.mrb[0].mxu0
        %3533 = vdwg.mxu0
        %3534 = vmatprep.subr.bf16.mxu0 %v2844
        %3535 = vmatpush1.bf16.msra.mxu0 %v2843
        %3536 = vmatprep.subr.bf16.mxu0 %v2860
        %3537 = vmatpush1.bf16.msra.mxu0 %v2859
        %3538 = vmatprep.subr.bf16.mxu0 0
        %3539 = vmatpush1.bf16.msra.mxu0 0
        %3540 = vmatprep.subr.bf16.mxu0 0
        %3541 = vmatpush1.bf16.msra.mxu0 0
        %3542 = vmatprep.subr.bf16.mxu0 0
        %3543 = vmatpush1.bf16.msra.mxu0 0
        %3544 = vmatprep.subr.bf16.mxu0 0
        %3545 = vmatpush1.bf16.msra.mxu0 0
        %3546 = vmatprep.subr.bf16.mxu0 0
        %3547 = vmatpush1.bf16.msra.mxu0 0
        %3548 = vmatprep.subr.bf16.mxu0 0
        %3549 = vmatpush1.bf16.msra.mxu0 0
        %3550 = vmatprep.subr.bf16.mxu0 0
        %3551 = vmatpush1.bf16.msra.mxu0 0
        %3552 = vmatprep.subr.bf16.mxu0 0
        %3553 = vmatpush1.bf16.msra.mxu0 0
        %3554 = vmatprep.subr.bf16.mxu0 0
        %3555 = vmatpush1.bf16.msra.mxu0 0
        %3556 = vmatprep.subr.bf16.mxu0 0
        %3557 = vmatpush1.bf16.msra.mxu0 0
        %3558 = vmatprep.subr.bf16.mxu0 0
        %3559 = vmatpush1.bf16.msra.mxu0 0
        %3560 = vmatprep.subr.bf16.mxu0 0
        %3561 = vmatpush1.bf16.msra.mxu0 0
        %3562 = vmatprep.subr.bf16.mxu0 0
        %3563 = vmatpush1.bf16.msra.mxu0 0
        %3564 = vmatprep.subr.bf16.mxu0 0
        %3565 = vmatpush1.bf16.msra.mxu0 0
        %3566 = vmatprep.mubr.bf16.mxu0 0
        %3567 = vmatmul.mubr.bf16.gmra.mrb[0].mxu0 %v3245
        %v3568 = vpop.f32.mrb[0].mxu0
        %v3569 = vadd.f32 0.0, %v3568
        %v3570 = vpop.f32.mrb[0].mxu0
        %v3571 = vadd.f32 0.0, %v3570
        %v3572 = vpop.f32.mrb[0].mxu0
        %v3573 = vpop.f32.mrb[0].mxu0
        %3574 = vdwg.mxu0
        %v3591 = vrot.slane %v3282, 6
        %v3592 = vrot.slane %v3284, 6
        %v3593 = vrot.slane %v3323, 6
        %v3594 = vrot.slane %v3325, 6
        %v3595 = vrot.slane %v3364, 6
        %v3596 = vrot.slane %v3366, 6
        %v3597 = vrot.slane %v3405, 6
        %v3598 = vrot.slane %v3407, 6
        %v3599 = vrot.slane %v3446, 6
        %v3600 = vrot.slane %v3448, 6
        %v3601 = vrot.slane %v3487, 6
        %v3602 = vrot.slane %v3489, 6
        %v3603 = vrot.slane %v3528, 6
        %v3604 = vrot.slane %v3530, 6
        %v3605 = vrot.slane %v3569, 6
        %v3606 = vrot.slane %v3571, 6
        %3623 = vst [vmem:[%s439] sm:$0xc] %v3591
        %3624 = vst [vmem:[%s439 + $0x8] sm:$0xc] %v3592
        %3625 = vst [vmem:[%s439 + $0x10] sm:$0xc] %v3593
        %3626 = vst [vmem:[%s439 + $0x18] sm:$0xc] %v3594
        %3627 = vst [vmem:[%s439 + $0x20] sm:$0xc] %v3595
        %3628 = vst [vmem:[%s439 + $0x28] sm:$0xc] %v3596
        %3629 = vst [vmem:[%s439 + $0x30] sm:$0xc] %v3597
        %3630 = vst [vmem:[%s439 + $0x38] sm:$0xc] %v3598
        %3631 = vst [vmem:[%s439 + $0x40] sm:$0xc] %v3599
        %3632 = vst [vmem:[%s439 + $0x48] sm:$0xc] %v3600
        %3633 = vst [vmem:[%s439 + $0x50] sm:$0xc] %v3601
        %3634 = vst [vmem:[%s439 + $0x58] sm:$0xc] %v3602
        %3635 = vst [vmem:[%s439 + $0x60] sm:$0xc] %v3603
        %3636 = vst [vmem:[%s439 + $0x68] sm:$0xc] %v3604
        %3637 = vst [vmem:[%s439 + $0x70] sm:$0xc] %v3605
        %3638 = vst [vmem:[%s439 + $0x78] sm:$0xc] %v3606
        %3639 = vrot.lane.b32.xlu0 %v2700, 64
        %v3640 = vpop.permute.xlu0 %3639
        %v3642 = vsel %vm2893, %v3640, 0
        %3644 = vmatprep.subr.bf16.mxu0 %v2830
        %3645 = vmatpush1.bf16.msra.mxu0 %v2829
        %3646 = vmatprep.subr.bf16.mxu0 %v2846
        %3647 = vmatpush1.bf16.msra.mxu0 %v2845
        %3648 = vmatprep.subr.bf16.mxu0 0
        %3649 = vmatpush1.bf16.msra.mxu0 0
        %3650 = vmatprep.subr.bf16.mxu0 0
        %3651 = vmatpush1.bf16.msra.mxu0 0
        %3652 = vmatprep.subr.bf16.mxu0 0
        %3653 = vmatpush1.bf16.msra.mxu0 0
        %3654 = vmatprep.subr.bf16.mxu0 0
        %3655 = vmatpush1.bf16.msra.mxu0 0
        %3656 = vmatprep.subr.bf16.mxu0 0
        %3657 = vmatpush1.bf16.msra.mxu0 0
        %3658 = vmatprep.subr.bf16.mxu0 0
        %3659 = vmatpush1.bf16.msra.mxu0 0
        %3660 = vmatprep.subr.bf16.mxu0 0
        %3661 = vmatpush1.bf16.msra.mxu0 0
        %3662 = vmatprep.subr.bf16.mxu0 0
        %3663 = vmatpush1.bf16.msra.mxu0 0
        %3664 = vmatprep.subr.bf16.mxu0 0
        %3665 = vmatpush1.bf16.msra.mxu0 0
        %3666 = vmatprep.subr.bf16.mxu0 0
        %3667 = vmatpush1.bf16.msra.mxu0 0
        %3668 = vmatprep.subr.bf16.mxu0 0
        %3669 = vmatpush1.bf16.msra.mxu0 0
        %3670 = vmatprep.subr.bf16.mxu0 0
        %3671 = vmatpush1.bf16.msra.mxu0 0
        %3672 = vmatprep.subr.bf16.mxu0 0
        %3673 = vmatpush1.bf16.msra.mxu0 0
        %3674 = vmatprep.subr.bf16.mxu0 0
        %3675 = vmatpush1.bf16.msra.mxu0 0
        %3676 = vmatprep.mubr.bf16.mxu0 0
        %3677 = vmatmul.mubr.bf16.gmra.mrb[0].mxu0 %v3642
        %v3678 = vpop.f32.mrb[0].mxu0
        %v3679 = vadd.f32 0.0, %v3678
        %v3680 = vpop.f32.mrb[0].mxu0
        %v3681 = vadd.f32 0.0, %v3680
        %v3682 = vpop.f32.mrb[0].mxu0
        %v3683 = vpop.f32.mrb[0].mxu0
        %3684 = vdwg.mxu0
        %3685 = vmatprep.subr.bf16.mxu0 %v2832
        %3686 = vmatpush1.bf16.msra.mxu0 %v2831
        %3687 = vmatprep.subr.bf16.mxu0 %v2848
        %3688 = vmatpush1.bf16.msra.mxu0 %v2847
        %3689 = vmatprep.subr.bf16.mxu0 0
        %3690 = vmatpush1.bf16.msra.mxu0 0
        %3691 = vmatprep.subr.bf16.mxu0 0
        %3692 = vmatpush1.bf16.msra.mxu0 0
        %3693 = vmatprep.subr.bf16.mxu0 0
        %3694 = vmatpush1.bf16.msra.mxu0 0
        %3695 = vmatprep.subr.bf16.mxu0 0
        %3696 = vmatpush1.bf16.msra.mxu0 0
        %3697 = vmatprep.subr.bf16.mxu0 0
        %3698 = vmatpush1.bf16.msra.mxu0 0
        %3699 = vmatprep.subr.bf16.mxu0 0
        %3700 = vmatpush1.bf16.msra.mxu0 0
        %3701 = vmatprep.subr.bf16.mxu0 0
        %3702 = vmatpush1.bf16.msra.mxu0 0
        %3703 = vmatprep.subr.bf16.mxu0 0
        %3704 = vmatpush1.bf16.msra.mxu0 0
        %3705 = vmatprep.subr.bf16.mxu0 0
        %3706 = vmatpush1.bf16.msra.mxu0 0
        %3707 = vmatprep.subr.bf16.mxu0 0
        %3708 = vmatpush1.bf16.msra.mxu0 0
        %3709 = vmatprep.subr.bf16.mxu0 0
        %3710 = vmatpush1.bf16.msra.mxu0 0
        %3711 = vmatprep.subr.bf16.mxu0 0
        %3712 = vmatpush1.bf16.msra.mxu0 0
        %3713 = vmatprep.subr.bf16.mxu0 0
        %3714 = vmatpush1.bf16.msra.mxu0 0
        %3715 = vmatprep.subr.bf16.mxu0 0
        %3716 = vmatpush1.bf16.msra.mxu0 0
        %3717 = vmatprep.mubr.bf16.mxu0 0
        %3718 = vmatmul.mubr.bf16.gmra.mrb[0].mxu0 %v3642
        %v3719 = vpop.f32.mrb[0].mxu0
        %v3720 = vadd.f32 0.0, %v3719
        %v3721 = vpop.f32.mrb[0].mxu0
        %v3722 = vadd.f32 0.0, %v3721
        %v3723 = vpop.f32.mrb[0].mxu0
        %v3724 = vpop.f32.mrb[0].mxu0
        %3725 = vdwg.mxu0
        %3726 = vmatprep.subr.bf16.mxu0 %v2834
        %3727 = vmatpush1.bf16.msra.mxu0 %v2833
        %3728 = vmatprep.subr.bf16.mxu0 %v2850
        %3729 = vmatpush1.bf16.msra.mxu0 %v2849
        %3730 = vmatprep.subr.bf16.mxu0 0
        %3731 = vmatpush1.bf16.msra.mxu0 0
        %3732 = vmatprep.subr.bf16.mxu0 0
        %3733 = vmatpush1.bf16.msra.mxu0 0
        %3734 = vmatprep.subr.bf16.mxu0 0
        %3735 = vmatpush1.bf16.msra.mxu0 0
        %3736 = vmatprep.subr.bf16.mxu0 0
        %3737 = vmatpush1.bf16.msra.mxu0 0
        %3738 = vmatprep.subr.bf16.mxu0 0
        %3739 = vmatpush1.bf16.msra.mxu0 0
        %3740 = vmatprep.subr.bf16.mxu0 0
        %3741 = vmatpush1.bf16.msra.mxu0 0
        %3742 = vmatprep.subr.bf16.mxu0 0
        %3743 = vmatpush1.bf16.msra.mxu0 0
        %3744 = vmatprep.subr.bf16.mxu0 0
        %3745 = vmatpush1.bf16.msra.mxu0 0
        %3746 = vmatprep.subr.bf16.mxu0 0
        %3747 = vmatpush1.bf16.msra.mxu0 0
        %3748 = vmatprep.subr.bf16.mxu0 0
        %3749 = vmatpush1.bf16.msra.mxu0 0
        %3750 = vmatprep.subr.bf16.mxu0 0
        %3751 = vmatpush1.bf16.msra.mxu0 0
        %3752 = vmatprep.subr.bf16.mxu0 0
        %3753 = vmatpush1.bf16.msra.mxu0 0
        %3754 = vmatprep.subr.bf16.mxu0 0
        %3755 = vmatpush1.bf16.msra.mxu0 0
        %3756 = vmatprep.subr.bf16.mxu0 0
        %3757 = vmatpush1.bf16.msra.mxu0 0
        %3758 = vmatprep.mubr.bf16.mxu0 0
        %3759 = vmatmul.mubr.bf16.gmra.mrb[0].mxu0 %v3642
        %v3760 = vpop.f32.mrb[0].mxu0
        %v3761 = vadd.f32 0.0, %v3760
        %v3762 = vpop.f32.mrb[0].mxu0
        %v3763 = vadd.f32 0.0, %v3762
        %v3764 = vpop.f32.mrb[0].mxu0
        %v3765 = vpop.f32.mrb[0].mxu0
        %3766 = vdwg.mxu0
        %3767 = vmatprep.subr.bf16.mxu0 %v2836
        %3768 = vmatpush1.bf16.msra.mxu0 %v2835
        %3769 = vmatprep.subr.bf16.mxu0 %v2852
        %3770 = vmatpush1.bf16.msra.mxu0 %v2851
        %3771 = vmatprep.subr.bf16.mxu0 0
        %3772 = vmatpush1.bf16.msra.mxu0 0
        %3773 = vmatprep.subr.bf16.mxu0 0
        %3774 = vmatpush1.bf16.msra.mxu0 0
        %3775 = vmatprep.subr.bf16.mxu0 0
        %3776 = vmatpush1.bf16.msra.mxu0 0
        %3777 = vmatprep.subr.bf16.mxu0 0
        %3778 = vmatpush1.bf16.msra.mxu0 0
        %3779 = vmatprep.subr.bf16.mxu0 0
        %3780 = vmatpush1.bf16.msra.mxu0 0
        %3781 = vmatprep.subr.bf16.mxu0 0
        %3782 = vmatpush1.bf16.msra.mxu0 0
        %3783 = vmatprep.subr.bf16.mxu0 0
        %3784 = vmatpush1.bf16.msra.mxu0 0
        %3785 = vmatprep.subr.bf16.mxu0 0
        %3786 = vmatpush1.bf16.msra.mxu0 0
        %3787 = vmatprep.subr.bf16.mxu0 0
        %3788 = vmatpush1.bf16.msra.mxu0 0
        %3789 = vmatprep.subr.bf16.mxu0 0
        %3790 = vmatpush1.bf16.msra.mxu0 0
        %3791 = vmatprep.subr.bf16.mxu0 0
        %3792 = vmatpush1.bf16.msra.mxu0 0
        %3793 = vmatprep.subr.bf16.mxu0 0
        %3794 = vmatpush1.bf16.msra.mxu0 0
        %3795 = vmatprep.subr.bf16.mxu0 0
        %3796 = vmatpush1.bf16.msra.mxu0 0
        %3797 = vmatprep.subr.bf16.mxu0 0
        %3798 = vmatpush1.bf16.msra.mxu0 0
        %3799 = vmatprep.mubr.bf16.mxu0 0
        %3800 = vmatmul.mubr.bf16.gmra.mrb[0].mxu0 %v3642
        %v3801 = vpop.f32.mrb[0].mxu0
        %v3802 = vadd.f32 0.0, %v3801
        %v3803 = vpop.f32.mrb[0].mxu0
        %v3804 = vadd.f32 0.0, %v3803
        %v3805 = vpop.f32.mrb[0].mxu0
        %v3806 = vpop.f32.mrb[0].mxu0
        %3807 = vdwg.mxu0
        %3808 = vmatprep.subr.bf16.mxu0 %v2838
        %3809 = vmatpush1.bf16.msra.mxu0 %v2837
        %3810 = vmatprep.subr.bf16.mxu0 %v2854
        %3811 = vmatpush1.bf16.msra.mxu0 %v2853
        %3812 = vmatprep.subr.bf16.mxu0 0
        %3813 = vmatpush1.bf16.msra.mxu0 0
        %3814 = vmatprep.subr.bf16.mxu0 0
        %3815 = vmatpush1.bf16.msra.mxu0 0
        %3816 = vmatprep.subr.bf16.mxu0 0
        %3817 = vmatpush1.bf16.msra.mxu0 0
        %3818 = vmatprep.subr.bf16.mxu0 0
        %3819 = vmatpush1.bf16.msra.mxu0 0
        %3820 = vmatprep.subr.bf16.mxu0 0
        %3821 = vmatpush1.bf16.msra.mxu0 0
        %3822 = vmatprep.subr.bf16.mxu0 0
        %3823 = vmatpush1.bf16.msra.mxu0 0
        %3824 = vmatprep.subr.bf16.mxu0 0
        %3825 = vmatpush1.bf16.msra.mxu0 0
        %3826 = vmatprep.subr.bf16.mxu0 0
        %3827 = vmatpush1.bf16.msra.mxu0 0
        %3828 = vmatprep.subr.bf16.mxu0 0
        %3829 = vmatpush1.bf16.msra.mxu0 0
        %3830 = vmatprep.subr.bf16.mxu0 0
        %3831 = vmatpush1.bf16.msra.mxu0 0
        %3832 = vmatprep.subr.bf16.mxu0 0
        %3833 = vmatpush1.bf16.msra.mxu0 0
        %3834 = vmatprep.subr.bf16.mxu0 0
        %3835 = vmatpush1.bf16.msra.mxu0 0
        %3836 = vmatprep.subr.bf16.mxu0 0
        %3837 = vmatpush1.bf16.msra.mxu0 0
        %3838 = vmatprep.subr.bf16.mxu0 0
        %3839 = vmatpush1.bf16.msra.mxu0 0
        %3840 = vmatprep.mubr.bf16.mxu0 0
        %3841 = vmatmul.mubr.bf16.gmra.mrb[0].mxu0 %v3642
        %v3842 = vpop.f32.mrb[0].mxu0
        %v3843 = vadd.f32 0.0, %v3842
        %v3844 = vpop.f32.mrb[0].mxu0
        %v3845 = vadd.f32 0.0, %v3844
        %v3846 = vpop.f32.mrb[0].mxu0
        %v3847 = vpop.f32.mrb[0].mxu0
        %3848 = vdwg.mxu0
        %3849 = vmatprep.subr.bf16.mxu0 %v2840
        %3850 = vmatpush1.bf16.msra.mxu0 %v2839
        %3851 = vmatprep.subr.bf16.mxu0 %v2856
        %3852 = vmatpush1.bf16.msra.mxu0 %v2855
        %3853 = vmatprep.subr.bf16.mxu0 0
        %3854 = vmatpush1.bf16.msra.mxu0 0
        %3855 = vmatprep.subr.bf16.mxu0 0
        %3856 = vmatpush1.bf16.msra.mxu0 0
        %3857 = vmatprep.subr.bf16.mxu0 0
        %3858 = vmatpush1.bf16.msra.mxu0 0
        %3859 = vmatprep.subr.bf16.mxu0 0
        %3860 = vmatpush1.bf16.msra.mxu0 0
        %3861 = vmatprep.subr.bf16.mxu0 0
        %3862 = vmatpush1.bf16.msra.mxu0 0
        %3863 = vmatprep.subr.bf16.mxu0 0
        %3864 = vmatpush1.bf16.msra.mxu0 0
        %3865 = vmatprep.subr.bf16.mxu0 0
        %3866 = vmatpush1.bf16.msra.mxu0 0
        %3867 = vmatprep.subr.bf16.mxu0 0
        %3868 = vmatpush1.bf16.msra.mxu0 0
        %3869 = vmatprep.subr.bf16.mxu0 0
        %3870 = vmatpush1.bf16.msra.mxu0 0
        %3871 = vmatprep.subr.bf16.mxu0 0
        %3872 = vmatpush1.bf16.msra.mxu0 0
        %3873 = vmatprep.subr.bf16.mxu0 0
        %3874 = vmatpush1.bf16.msra.mxu0 0
        %3875 = vmatprep.subr.bf16.mxu0 0
        %3876 = vmatpush1.bf16.msra.mxu0 0
        %3877 = vmatprep.subr.bf16.mxu0 0
        %3878 = vmatpush1.bf16.msra.mxu0 0
        %3879 = vmatprep.subr.bf16.mxu0 0
        %3880 = vmatpush1.bf16.msra.mxu0 0
        %3881 = vmatprep.mubr.bf16.mxu0 0
        %3882 = vmatmul.mubr.bf16.gmra.mrb[0].mxu0 %v3642
        %v3883 = vpop.f32.mrb[0].mxu0
        %v3884 = vadd.f32 0.0, %v3883
        %v3885 = vpop.f32.mrb[0].mxu0
        %v3886 = vadd.f32 0.0, %v3885
        %v3887 = vpop.f32.mrb[0].mxu0
        %v3888 = vpop.f32.mrb[0].mxu0
        %3889 = vdwg.mxu0
        %3890 = vmatprep.subr.bf16.mxu0 %v2842
        %3891 = vmatpush1.bf16.msra.mxu0 %v2841
        %3892 = vmatprep.subr.bf16.mxu0 %v2858
        %3893 = vmatpush1.bf16.msra.mxu0 %v2857
        %3894 = vmatprep.subr.bf16.mxu0 0
        %3895 = vmatpush1.bf16.msra.mxu0 0
        %3896 = vmatprep.subr.bf16.mxu0 0
        %3897 = vmatpush1.bf16.msra.mxu0 0
        %3898 = vmatprep.subr.bf16.mxu0 0
        %3899 = vmatpush1.bf16.msra.mxu0 0
        %3900 = vmatprep.subr.bf16.mxu0 0
        %3901 = vmatpush1.bf16.msra.mxu0 0
        %3902 = vmatprep.subr.bf16.mxu0 0
        %3903 = vmatpush1.bf16.msra.mxu0 0
        %3904 = vmatprep.subr.bf16.mxu0 0
        %3905 = vmatpush1.bf16.msra.mxu0 0
        %3906 = vmatprep.subr.bf16.mxu0 0
        %3907 = vmatpush1.bf16.msra.mxu0 0
        %3908 = vmatprep.subr.bf16.mxu0 0
        %3909 = vmatpush1.bf16.msra.mxu0 0
        %3910 = vmatprep.subr.bf16.mxu0 0
        %3911 = vmatpush1.bf16.msra.mxu0 0
        %3912 = vmatprep.subr.bf16.mxu0 0
        %3913 = vmatpush1.bf16.msra.mxu0 0
        %3914 = vmatprep.subr.bf16.mxu0 0
        %3915 = vmatpush1.bf16.msra.mxu0 0
        %3916 = vmatprep.subr.bf16.mxu0 0
        %3917 = vmatpush1.bf16.msra.mxu0 0
        %3918 = vmatprep.subr.bf16.mxu0 0
        %3919 = vmatpush1.bf16.msra.mxu0 0
        %3920 = vmatprep.subr.bf16.mxu0 0
        %3921 = vmatpush1.bf16.msra.mxu0 0
        %3922 = vmatprep.mubr.bf16.mxu0 0
        %3923 = vmatmul.mubr.bf16.gmra.mrb[0].mxu0 %v3642
        %v3924 = vpop.f32.mrb[0].mxu0
        %v3925 = vadd.f32 0.0, %v3924
        %v3926 = vpop.f32.mrb[0].mxu0
        %v3927 = vadd.f32 0.0, %v3926
        %v3928 = vpop.f32.mrb[0].mxu0
        %v3929 = vpop.f32.mrb[0].mxu0
        %3930 = vdwg.mxu0
        %3931 = vmatprep.subr.bf16.mxu0 %v2844
        %3932 = vmatpush1.bf16.msra.mxu0 %v2843
        %3933 = vmatprep.subr.bf16.mxu0 %v2860
        %3934 = vmatpush1.bf16.msra.mxu0 %v2859
        %3935 = vmatprep.subr.bf16.mxu0 0
        %3936 = vmatpush1.bf16.msra.mxu0 0
        %3937 = vmatprep.subr.bf16.mxu0 0
        %3938 = vmatpush1.bf16.msra.mxu0 0
        %3939 = vmatprep.subr.bf16.mxu0 0
        %3940 = vmatpush1.bf16.msra.mxu0 0
        %3941 = vmatprep.subr.bf16.mxu0 0
        %3942 = vmatpush1.bf16.msra.mxu0 0
        %3943 = vmatprep.subr.bf16.mxu0 0
        %3944 = vmatpush1.bf16.msra.mxu0 0
        %3945 = vmatprep.subr.bf16.mxu0 0
        %3946 = vmatpush1.bf16.msra.mxu0 0
        %3947 = vmatprep.subr.bf16.mxu0 0
        %3948 = vmatpush1.bf16.msra.mxu0 0
        %3949 = vmatprep.subr.bf16.mxu0 0
        %3950 = vmatpush1.bf16.msra.mxu0 0
        %3951 = vmatprep.subr.bf16.mxu0 0
        %3952 = vmatpush1.bf16.msra.mxu0 0
        %3953 = vmatprep.subr.bf16.mxu0 0
        %3954 = vmatpush1.bf16.msra.mxu0 0
        %3955 = vmatprep.subr.bf16.mxu0 0
        %3956 = vmatpush1.bf16.msra.mxu0 0
        %3957 = vmatprep.subr.bf16.mxu0 0
        %3958 = vmatpush1.bf16.msra.mxu0 0
        %3959 = vmatprep.subr.bf16.mxu0 0
        %3960 = vmatpush1.bf16.msra.mxu0 0
        %3961 = vmatprep.subr.bf16.mxu0 0
        %3962 = vmatpush1.bf16.msra.mxu0 0
        %3963 = vmatprep.mubr.bf16.mxu0 0
        %3964 = vmatmul.mubr.bf16.gmra.mrb[0].mxu0 %v3642
        %v3965 = vpop.f32.mrb[0].mxu0
        %v3966 = vadd.f32 0.0, %v3965
        %v3967 = vpop.f32.mrb[0].mxu0
        %v3968 = vadd.f32 0.0, %v3967
        %v3969 = vpop.f32.mrb[0].mxu0
        %v3970 = vpop.f32.mrb[0].mxu0
        %3971 = vdwg.mxu0
        %v3988 = vrot.slane %v3679, 4
        %v3989 = vrot.slane %v3681, 4
        %v3990 = vrot.slane %v3720, 4
        %v3991 = vrot.slane %v3722, 4
        %v3992 = vrot.slane %v3761, 4
        %v3993 = vrot.slane %v3763, 4
        %v3994 = vrot.slane %v3802, 4
        %v3995 = vrot.slane %v3804, 4
        %v3996 = vrot.slane %v3843, 4
        %v3997 = vrot.slane %v3845, 4
        %v3998 = vrot.slane %v3884, 4
        %v3999 = vrot.slane %v3886, 4
        %v4000 = vrot.slane %v3925, 4
        %v4001 = vrot.slane %v3927, 4
        %v4002 = vrot.slane %v3966, 4
        %v4003 = vrot.slane %v3968, 4
        %4020 = vst [vmem:[%s439] sm:$0x30] %v3988
        %4021 = vst [vmem:[%s439 + $0x8] sm:$0x30] %v3989
        %4022 = vst [vmem:[%s439 + $0x10] sm:$0x30] %v3990
        %4023 = vst [vmem:[%s439 + $0x18] sm:$0x30] %v3991
        %4024 = vst [vmem:[%s439 + $0x20] sm:$0x30] %v3992
        %4025 = vst [vmem:[%s439 + $0x28] sm:$0x30] %v3993
        %4026 = vst [vmem:[%s439 + $0x30] sm:$0x30] %v3994
        %4027 = vst [vmem:[%s439 + $0x38] sm:$0x30] %v3995
        %4028 = vst [vmem:[%s439 + $0x40] sm:$0x30] %v3996
        %4029 = vst [vmem:[%s439 + $0x48] sm:$0x30] %v3997
        %4030 = vst [vmem:[%s439 + $0x50] sm:$0x30] %v3998
        %4031 = vst [vmem:[%s439 + $0x58] sm:$0x30] %v3999
        %4032 = vst [vmem:[%s439 + $0x60] sm:$0x30] %v4000
        %4033 = vst [vmem:[%s439 + $0x68] sm:$0x30] %v4001
        %4034 = vst [vmem:[%s439 + $0x70] sm:$0x30] %v4002
        %4035 = vst [vmem:[%s439 + $0x78] sm:$0x30] %v4003
        %4036 = vrot.lane.b32.xlu0 %v2700, 32
        %v4037 = vpop.permute.xlu0 %4036
        %v4039 = vsel %vm2893, %v4037, 0
        %4041 = vmatprep.subr.bf16.mxu0 %v2830
        %4042 = vmatpush1.bf16.msra.mxu0 %v2829
        %4043 = vmatprep.subr.bf16.mxu0 %v2846
        %4044 = vmatpush1.bf16.msra.mxu0 %v2845
        %4045 = vmatprep.subr.bf16.mxu0 0
        %4046 = vmatpush1.bf16.msra.mxu0 0
        %4047 = vmatprep.subr.bf16.mxu0 0
        %4048 = vmatpush1.bf16.msra.mxu0 0
        %4049 = vmatprep.subr.bf16.mxu0 0
        %4050 = vmatpush1.bf16.msra.mxu0 0
        %4051 = vmatprep.subr.bf16.mxu0 0
        %4052 = vmatpush1.bf16.msra.mxu0 0
        %4053 = vmatprep.subr.bf16.mxu0 0
        %4054 = vmatpush1.bf16.msra.mxu0 0
        %4055 = vmatprep.subr.bf16.mxu0 0
        %4056 = vmatpush1.bf16.msra.mxu0 0
        %4057 = vmatprep.subr.bf16.mxu0 0
        %4058 = vmatpush1.bf16.msra.mxu0 0
        %4059 = vmatprep.subr.bf16.mxu0 0
        %4060 = vmatpush1.bf16.msra.mxu0 0
        %4061 = vmatprep.subr.bf16.mxu0 0
        %4062 = vmatpush1.bf16.msra.mxu0 0
        %4063 = vmatprep.subr.bf16.mxu0 0
        %4064 = vmatpush1.bf16.msra.mxu0 0
        %4065 = vmatprep.subr.bf16.mxu0 0
        %4066 = vmatpush1.bf16.msra.mxu0 0
        %4067 = vmatprep.subr.bf16.mxu0 0
        %4068 = vmatpush1.bf16.msra.mxu0 0
        %4069 = vmatprep.subr.bf16.mxu0 0
        %4070 = vmatpush1.bf16.msra.mxu0 0
        %4071 = vmatprep.subr.bf16.mxu0 0
        %4072 = vmatpush1.bf16.msra.mxu0 0
        %4073 = vmatprep.mubr.bf16.mxu0 0
        %4074 = vmatmul.mubr.bf16.gmra.mrb[0].mxu0 %v4039
        %v4075 = vpop.f32.mrb[0].mxu0
        %v4076 = vadd.f32 0.0, %v4075
        %v4077 = vpop.f32.mrb[0].mxu0
        %v4078 = vadd.f32 0.0, %v4077
        %v4079 = vpop.f32.mrb[0].mxu0
        %v4080 = vpop.f32.mrb[0].mxu0
        %4081 = vdwg.mxu0
        %4082 = vmatprep.subr.bf16.mxu0 %v2832
        %4083 = vmatpush1.bf16.msra.mxu0 %v2831
        %4084 = vmatprep.subr.bf16.mxu0 %v2848
        %4085 = vmatpush1.bf16.msra.mxu0 %v2847
        %4086 = vmatprep.subr.bf16.mxu0 0
        %4087 = vmatpush1.bf16.msra.mxu0 0
        %4088 = vmatprep.subr.bf16.mxu0 0
        %4089 = vmatpush1.bf16.msra.mxu0 0
        %4090 = vmatprep.subr.bf16.mxu0 0
        %4091 = vmatpush1.bf16.msra.mxu0 0
        %4092 = vmatprep.subr.bf16.mxu0 0
        %4093 = vmatpush1.bf16.msra.mxu0 0
        %4094 = vmatprep.subr.bf16.mxu0 0
        %4095 = vmatpush1.bf16.msra.mxu0 0
        %4096 = vmatprep.subr.bf16.mxu0 0
        %4097 = vmatpush1.bf16.msra.mxu0 0
        %4098 = vmatprep.subr.bf16.mxu0 0
        %4099 = vmatpush1.bf16.msra.mxu0 0
        %4100 = vmatprep.subr.bf16.mxu0 0
        %4101 = vmatpush1.bf16.msra.mxu0 0
        %4102 = vmatprep.subr.bf16.mxu0 0
        %4103 = vmatpush1.bf16.msra.mxu0 0
        %4104 = vmatprep.subr.bf16.mxu0 0
        %4105 = vmatpush1.bf16.msra.mxu0 0
        %4106 = vmatprep.subr.bf16.mxu0 0
        %4107 = vmatpush1.bf16.msra.mxu0 0
        %4108 = vmatprep.subr.bf16.mxu0 0
        %4109 = vmatpush1.bf16.msra.mxu0 0
        %4110 = vmatprep.subr.bf16.mxu0 0
        %4111 = vmatpush1.bf16.msra.mxu0 0
        %4112 = vmatprep.subr.bf16.mxu0 0
        %4113 = vmatpush1.bf16.msra.mxu0 0
        %4114 = vmatprep.mubr.bf16.mxu0 0
        %4115 = vmatmul.mubr.bf16.gmra.mrb[0].mxu0 %v4039
        %v4116 = vpop.f32.mrb[0].mxu0
        %v4117 = vadd.f32 0.0, %v4116
        %v4118 = vpop.f32.mrb[0].mxu0
        %v4119 = vadd.f32 0.0, %v4118
        %v4120 = vpop.f32.mrb[0].mxu0
        %v4121 = vpop.f32.mrb[0].mxu0
        %4122 = vdwg.mxu0
        %4123 = vmatprep.subr.bf16.mxu0 %v2834
        %4124 = vmatpush1.bf16.msra.mxu0 %v2833
        %4125 = vmatprep.subr.bf16.mxu0 %v2850
        %4126 = vmatpush1.bf16.msra.mxu0 %v2849
        %4127 = vmatprep.subr.bf16.mxu0 0
        %4128 = vmatpush1.bf16.msra.mxu0 0
        %4129 = vmatprep.subr.bf16.mxu0 0
        %4130 = vmatpush1.bf16.msra.mxu0 0
        %4131 = vmatprep.subr.bf16.mxu0 0
        %4132 = vmatpush1.bf16.msra.mxu0 0
        %4133 = vmatprep.subr.bf16.mxu0 0
        %4134 = vmatpush1.bf16.msra.mxu0 0
        %4135 = vmatprep.subr.bf16.mxu0 0
        %4136 = vmatpush1.bf16.msra.mxu0 0
        %4137 = vmatprep.subr.bf16.mxu0 0
        %4138 = vmatpush1.bf16.msra.mxu0 0
        %4139 = vmatprep.subr.bf16.mxu0 0
        %4140 = vmatpush1.bf16.msra.mxu0 0
        %4141 = vmatprep.subr.bf16.mxu0 0
        %4142 = vmatpush1.bf16.msra.mxu0 0
        %4143 = vmatprep.subr.bf16.mxu0 0
        %4144 = vmatpush1.bf16.msra.mxu0 0
        %4145 = vmatprep.subr.bf16.mxu0 0
        %4146 = vmatpush1.bf16.msra.mxu0 0
        %4147 = vmatprep.subr.bf16.mxu0 0
        %4148 = vmatpush1.bf16.msra.mxu0 0
        %4149 = vmatprep.subr.bf16.mxu0 0
        %4150 = vmatpush1.bf16.msra.mxu0 0
        %4151 = vmatprep.subr.bf16.mxu0 0
        %4152 = vmatpush1.bf16.msra.mxu0 0
        %4153 = vmatprep.subr.bf16.mxu0 0
        %4154 = vmatpush1.bf16.msra.mxu0 0
        %4155 = vmatprep.mubr.bf16.mxu0 0
        %4156 = vmatmul.mubr.bf16.gmra.mrb[0].mxu0 %v4039
        %v4157 = vpop.f32.mrb[0].mxu0
        %v4158 = vadd.f32 0.0, %v4157
        %v4159 = vpop.f32.mrb[0].mxu0
        %v4160 = vadd.f32 0.0, %v4159
        %v4161 = vpop.f32.mrb[0].mxu0
        %v4162 = vpop.f32.mrb[0].mxu0
        %4163 = vdwg.mxu0
        %4164 = vmatprep.subr.bf16.mxu0 %v2836
        %4165 = vmatpush1.bf16.msra.mxu0 %v2835
        %4166 = vmatprep.subr.bf16.mxu0 %v2852
        %4167 = vmatpush1.bf16.msra.mxu0 %v2851
        %4168 = vmatprep.subr.bf16.mxu0 0
        %4169 = vmatpush1.bf16.msra.mxu0 0
        %4170 = vmatprep.subr.bf16.mxu0 0
        %4171 = vmatpush1.bf16.msra.mxu0 0
        %4172 = vmatprep.subr.bf16.mxu0 0
        %4173 = vmatpush1.bf16.msra.mxu0 0
        %4174 = vmatprep.subr.bf16.mxu0 0
        %4175 = vmatpush1.bf16.msra.mxu0 0
        %4176 = vmatprep.subr.bf16.mxu0 0
        %4177 = vmatpush1.bf16.msra.mxu0 0
        %4178 = vmatprep.subr.bf16.mxu0 0
        %4179 = vmatpush1.bf16.msra.mxu0 0
        %4180 = vmatprep.subr.bf16.mxu0 0
        %4181 = vmatpush1.bf16.msra.mxu0 0
        %4182 = vmatprep.subr.bf16.mxu0 0
        %4183 = vmatpush1.bf16.msra.mxu0 0
        %4184 = vmatprep.subr.bf16.mxu0 0
        %4185 = vmatpush1.bf16.msra.mxu0 0
        %4186 = vmatprep.subr.bf16.mxu0 0
        %4187 = vmatpush1.bf16.msra.mxu0 0
        %4188 = vmatprep.subr.bf16.mxu0 0
        %4189 = vmatpush1.bf16.msra.mxu0 0
        %4190 = vmatprep.subr.bf16.mxu0 0
        %4191 = vmatpush1.bf16.msra.mxu0 0
        %4192 = vmatprep.subr.bf16.mxu0 0
        %4193 = vmatpush1.bf16.msra.mxu0 0
        %4194 = vmatprep.subr.bf16.mxu0 0
        %4195 = vmatpush1.bf16.msra.mxu0 0
        %4196 = vmatprep.mubr.bf16.mxu0 0
        %4197 = vmatmul.mubr.bf16.gmra.mrb[0].mxu0 %v4039
        %v4198 = vpop.f32.mrb[0].mxu0
        %v4199 = vadd.f32 0.0, %v4198
        %v4200 = vpop.f32.mrb[0].mxu0
        %v4201 = vadd.f32 0.0, %v4200
        %v4202 = vpop.f32.mrb[0].mxu0
        %v4203 = vpop.f32.mrb[0].mxu0
        %4204 = vdwg.mxu0
        %4205 = vmatprep.subr.bf16.mxu0 %v2838
        %4206 = vmatpush1.bf16.msra.mxu0 %v2837
        %4207 = vmatprep.subr.bf16.mxu0 %v2854
        %4208 = vmatpush1.bf16.msra.mxu0 %v2853
        %4209 = vmatprep.subr.bf16.mxu0 0
        %4210 = vmatpush1.bf16.msra.mxu0 0
        %4211 = vmatprep.subr.bf16.mxu0 0
        %4212 = vmatpush1.bf16.msra.mxu0 0
        %4213 = vmatprep.subr.bf16.mxu0 0
        %4214 = vmatpush1.bf16.msra.mxu0 0
        %4215 = vmatprep.subr.bf16.mxu0 0
        %4216 = vmatpush1.bf16.msra.mxu0 0
        %4217 = vmatprep.subr.bf16.mxu0 0
        %4218 = vmatpush1.bf16.msra.mxu0 0
        %4219 = vmatprep.subr.bf16.mxu0 0
        %4220 = vmatpush1.bf16.msra.mxu0 0
        %4221 = vmatprep.subr.bf16.mxu0 0
        %4222 = vmatpush1.bf16.msra.mxu0 0
        %4223 = vmatprep.subr.bf16.mxu0 0
        %4224 = vmatpush1.bf16.msra.mxu0 0
        %4225 = vmatprep.subr.bf16.mxu0 0
        %4226 = vmatpush1.bf16.msra.mxu0 0
        %4227 = vmatprep.subr.bf16.mxu0 0
        %4228 = vmatpush1.bf16.msra.mxu0 0
        %4229 = vmatprep.subr.bf16.mxu0 0
        %4230 = vmatpush1.bf16.msra.mxu0 0
        %4231 = vmatprep.subr.bf16.mxu0 0
        %4232 = vmatpush1.bf16.msra.mxu0 0
        %4233 = vmatprep.subr.bf16.mxu0 0
        %4234 = vmatpush1.bf16.msra.mxu0 0
        %4235 = vmatprep.subr.bf16.mxu0 0
        %4236 = vmatpush1.bf16.msra.mxu0 0
        %4237 = vmatprep.mubr.bf16.mxu0 0
        %4238 = vmatmul.mubr.bf16.gmra.mrb[0].mxu0 %v4039
        %v4239 = vpop.f32.mrb[0].mxu0
        %v4240 = vadd.f32 0.0, %v4239
        %v4241 = vpop.f32.mrb[0].mxu0
        %v4242 = vadd.f32 0.0, %v4241
        %v4243 = vpop.f32.mrb[0].mxu0
        %v4244 = vpop.f32.mrb[0].mxu0
        %4245 = vdwg.mxu0
        %4246 = vmatprep.subr.bf16.mxu0 %v2840
        %4247 = vmatpush1.bf16.msra.mxu0 %v2839
        %4248 = vmatprep.subr.bf16.mxu0 %v2856
        %4249 = vmatpush1.bf16.msra.mxu0 %v2855
        %4250 = vmatprep.subr.bf16.mxu0 0
        %4251 = vmatpush1.bf16.msra.mxu0 0
        %4252 = vmatprep.subr.bf16.mxu0 0
        %4253 = vmatpush1.bf16.msra.mxu0 0
        %4254 = vmatprep.subr.bf16.mxu0 0
        %4255 = vmatpush1.bf16.msra.mxu0 0
        %4256 = vmatprep.subr.bf16.mxu0 0
        %4257 = vmatpush1.bf16.msra.mxu0 0
        %4258 = vmatprep.subr.bf16.mxu0 0
        %4259 = vmatpush1.bf16.msra.mxu0 0
        %4260 = vmatprep.subr.bf16.mxu0 0
        %4261 = vmatpush1.bf16.msra.mxu0 0
        %4262 = vmatprep.subr.bf16.mxu0 0
        %4263 = vmatpush1.bf16.msra.mxu0 0
        %4264 = vmatprep.subr.bf16.mxu0 0
        %4265 = vmatpush1.bf16.msra.mxu0 0
        %4266 = vmatprep.subr.bf16.mxu0 0
        %4267 = vmatpush1.bf16.msra.mxu0 0
        %4268 = vmatprep.subr.bf16.mxu0 0
        %4269 = vmatpush1.bf16.msra.mxu0 0
        %4270 = vmatprep.subr.bf16.mxu0 0
        %4271 = vmatpush1.bf16.msra.mxu0 0
        %4272 = vmatprep.subr.bf16.mxu0 0
        %4273 = vmatpush1.bf16.msra.mxu0 0
        %4274 = vmatprep.subr.bf16.mxu0 0
        %4275 = vmatpush1.bf16.msra.mxu0 0
        %4276 = vmatprep.subr.bf16.mxu0 0
        %4277 = vmatpush1.bf16.msra.mxu0 0
        %4278 = vmatprep.mubr.bf16.mxu0 0
        %4279 = vmatmul.mubr.bf16.gmra.mrb[0].mxu0 %v4039
        %v4280 = vpop.f32.mrb[0].mxu0
        %v4281 = vadd.f32 0.0, %v4280
        %v4282 = vpop.f32.mrb[0].mxu0
        %v4283 = vadd.f32 0.0, %v4282
        %v4284 = vpop.f32.mrb[0].mxu0
        %v4285 = vpop.f32.mrb[0].mxu0
        %4286 = vdwg.mxu0
        %4287 = vmatprep.subr.bf16.mxu0 %v2842
        %4288 = vmatpush1.bf16.msra.mxu0 %v2841
        %4289 = vmatprep.subr.bf16.mxu0 %v2858
        %4290 = vmatpush1.bf16.msra.mxu0 %v2857
        %4291 = vmatprep.subr.bf16.mxu0 0
        %4292 = vmatpush1.bf16.msra.mxu0 0
        %4293 = vmatprep.subr.bf16.mxu0 0
        %4294 = vmatpush1.bf16.msra.mxu0 0
        %4295 = vmatprep.subr.bf16.mxu0 0
        %4296 = vmatpush1.bf16.msra.mxu0 0
        %4297 = vmatprep.subr.bf16.mxu0 0
        %4298 = vmatpush1.bf16.msra.mxu0 0
        %4299 = vmatprep.subr.bf16.mxu0 0
        %4300 = vmatpush1.bf16.msra.mxu0 0
        %4301 = vmatprep.subr.bf16.mxu0 0
        %4302 = vmatpush1.bf16.msra.mxu0 0
        %4303 = vmatprep.subr.bf16.mxu0 0
        %4304 = vmatpush1.bf16.msra.mxu0 0
        %4305 = vmatprep.subr.bf16.mxu0 0
        %4306 = vmatpush1.bf16.msra.mxu0 0
        %4307 = vmatprep.subr.bf16.mxu0 0
        %4308 = vmatpush1.bf16.msra.mxu0 0
        %4309 = vmatprep.subr.bf16.mxu0 0
        %4310 = vmatpush1.bf16.msra.mxu0 0
        %4311 = vmatprep.subr.bf16.mxu0 0
        %4312 = vmatpush1.bf16.msra.mxu0 0
        %4313 = vmatprep.subr.bf16.mxu0 0
        %4314 = vmatpush1.bf16.msra.mxu0 0
        %4315 = vmatprep.subr.bf16.mxu0 0
        %4316 = vmatpush1.bf16.msra.mxu0 0
        %4317 = vmatprep.subr.bf16.mxu0 0
        %4318 = vmatpush1.bf16.msra.mxu0 0
        %4319 = vmatprep.mubr.bf16.mxu0 0
        %4320 = vmatmul.mubr.bf16.gmra.mrb[0].mxu0 %v4039
        %v4321 = vpop.f32.mrb[0].mxu0
        %v4322 = vadd.f32 0.0, %v4321
        %v4323 = vpop.f32.mrb[0].mxu0
        %v4324 = vadd.f32 0.0, %v4323
        %v4325 = vpop.f32.mrb[0].mxu0
        %v4326 = vpop.f32.mrb[0].mxu0
        %4327 = vdwg.mxu0
        %4328 = vmatprep.subr.bf16.mxu0 %v2844
        %4329 = vmatpush1.bf16.msra.mxu0 %v2843
        %4330 = vmatprep.subr.bf16.mxu0 %v2860
        %4331 = vmatpush1.bf16.msra.mxu0 %v2859
        %4332 = vmatprep.subr.bf16.mxu0 0
        %4333 = vmatpush1.bf16.msra.mxu0 0
        %4334 = vmatprep.subr.bf16.mxu0 0
        %4335 = vmatpush1.bf16.msra.mxu0 0
        %4336 = vmatprep.subr.bf16.mxu0 0
        %4337 = vmatpush1.bf16.msra.mxu0 0
        %4338 = vmatprep.subr.bf16.mxu0 0
        %4339 = vmatpush1.bf16.msra.mxu0 0
        %4340 = vmatprep.subr.bf16.mxu0 0
        %4341 = vmatpush1.bf16.msra.mxu0 0
        %4342 = vmatprep.subr.bf16.mxu0 0
        %4343 = vmatpush1.bf16.msra.mxu0 0
        %4344 = vmatprep.subr.bf16.mxu0 0
        %4345 = vmatpush1.bf16.msra.mxu0 0
        %4346 = vmatprep.subr.bf16.mxu0 0
        %4347 = vmatpush1.bf16.msra.mxu0 0
        %4348 = vmatprep.subr.bf16.mxu0 0
        %4349 = vmatpush1.bf16.msra.mxu0 0
        %4350 = vmatprep.subr.bf16.mxu0 0
        %4351 = vmatpush1.bf16.msra.mxu0 0
        %4352 = vmatprep.subr.bf16.mxu0 0
        %4353 = vmatpush1.bf16.msra.mxu0 0
        %4354 = vmatprep.subr.bf16.mxu0 0
        %4355 = vmatpush1.bf16.msra.mxu0 0
        %4356 = vmatprep.subr.bf16.mxu0 0
        %4357 = vmatpush1.bf16.msra.mxu0 0
        %4358 = vmatprep.subr.bf16.mxu0 0
        %4359 = vmatpush1.bf16.msra.mxu0 0
        %4360 = vmatprep.mubr.bf16.mxu0 0
        %4361 = vmatmul.mubr.bf16.gmra.mrb[0].mxu0 %v4039
        %v4362 = vpop.f32.mrb[0].mxu0
        %v4363 = vadd.f32 0.0, %v4362
        %v4364 = vpop.f32.mrb[0].mxu0
        %v4365 = vadd.f32 0.0, %v4364
        %v4366 = vpop.f32.mrb[0].mxu0
        %v4367 = vpop.f32.mrb[0].mxu0
        %4368 = vdwg.mxu0
        %v4385 = vrot.slane %v4076, 2
        %v4386 = vrot.slane %v4078, 2
        %v4387 = vrot.slane %v4117, 2
        %v4388 = vrot.slane %v4119, 2
        %v4389 = vrot.slane %v4158, 2
        %v4390 = vrot.slane %v4160, 2
        %v4391 = vrot.slane %v4199, 2
        %v4392 = vrot.slane %v4201, 2
        %v4393 = vrot.slane %v4240, 2
        %v4394 = vrot.slane %v4242, 2
        %v4395 = vrot.slane %v4281, 2
        %v4396 = vrot.slane %v4283, 2
        %v4397 = vrot.slane %v4322, 2
        %v4398 = vrot.slane %v4324, 2
        %v4399 = vrot.slane %v4363, 2
        %v4400 = vrot.slane %v4365, 2
        %4417 = vst [vmem:[%s439] sm:$0xc0] %v4385
        %4418 = vst [vmem:[%s439 + $0x8] sm:$0xc0] %v4386
        %4419 = vst [vmem:[%s439 + $0x10] sm:$0xc0] %v4387
        %4420 = vst [vmem:[%s439 + $0x18] sm:$0xc0] %v4388
        %4421 = vst [vmem:[%s439 + $0x20] sm:$0xc0] %v4389
        %4422 = vst [vmem:[%s439 + $0x28] sm:$0xc0] %v4390
        %4423 = vst [vmem:[%s439 + $0x30] sm:$0xc0] %v4391
        %4424 = vst [vmem:[%s439 + $0x38] sm:$0xc0] %v4392
        %4425 = vst [vmem:[%s439 + $0x40] sm:$0xc0] %v4393
        %4426 = vst [vmem:[%s439 + $0x48] sm:$0xc0] %v4394
        %4427 = vst [vmem:[%s439 + $0x50] sm:$0xc0] %v4395
        %4428 = vst [vmem:[%s439 + $0x58] sm:$0xc0] %v4396
        %4429 = vst [vmem:[%s439 + $0x60] sm:$0xc0] %v4397
        %4430 = vst [vmem:[%s439 + $0x68] sm:$0xc0] %v4398
        %4431 = vst [vmem:[%s439 + $0x70] sm:$0xc0] %v4399
        %4432 = vst [vmem:[%s439 + $0x78] sm:$0xc0] %v4400
        %s4433 = sand.u32 %s247, 1
        %s4434 = scalar_lea.sflag [#allocation4], %s4433
        %s4435 = sand.u32 %s247, 1
        %s4436 = smul.addr %s4435, 128
        %s4437 = scalar_lea.vmem [#allocation3], %s4436
        // Predicated region
        $region84: #{tpu_custom_call.1} parent=78 // pred_check
          %p4438 = pneg %p257
        $region85: #{tpu_custom_call.1} parent=78 // pred_check_branch
          %4440 = sbr.rel (%p4438) target = $region87
        $region86: #{tpu_custom_call.1} parent=78 // pred_region
          %s4441 = smul.u32 16, %s24
          %s4443 = ssub.s32 2048, 2048
          %4444 = vsyncadd %s4434, %s4443
          %s4445 = smul.addr %s4441, 128
          %s4446 = scalar_lea.hbm %s10, %s4445
          %s4448 = sshll.u32 %s4437, 4
          %s4449 = int_to_ptr.vmem [resolvable:$true] %s4448
          %4451 = dma.vmem_to_hbm [thread:$0]  %s4449, 2048, %s4446, %s4434
        $region87: #{tpu_custom_call.1} parent=78 // pred_fallthru
          _
      $region79: #{tpu_custom_call.1} parent=5 // pred_fallthru
        _
      %p4452 = scmp.le.s32.totalorder 2, %s19
      // Predicated region
      $region88: #{tpu_custom_call.1} parent=5 // pred_check
        %p4453 = pneg %p4452
      $region89: #{tpu_custom_call.1} parent=5 // pred_check_branch
        %4455 = sbr.rel (%p4453) target = $region91
      $region90: #{tpu_custom_call.1} parent=5 // pred_region
        %s4456 = ssub.s32 %s19, 2
        // Predicated region
        $region92: #{tpu_custom_call.1} parent=90 // pred_check
          %p4457 = pneg %p263
        $region93: #{tpu_custom_call.1} parent=90 // pred_check_branch
          %4459 = sbr.rel (%p4457) target = $region95
        $region94: #{tpu_custom_call.1} parent=90 // pred_region
          %s4460 = sand.u32 %s248, 1
          %s4461 = scalar_lea.sflag [#allocation4], %s4460
          %s4462 = sand.u32 %s248, 1
          %s4463 = smul.addr %s4462, 128
          %s4464 = scalar_lea.vmem [#allocation3], %s4463
          %4465 = dma.done %s4461, 2048
        $region95: #{tpu_custom_call.1} parent=90 // pred_fallthru
          _
      $region91: #{tpu_custom_call.1} parent=5 // pred_fallthru
        _
    $region6: #{tpu_custom_call.1} parent=1 // loop_footer
      %s23 = sadd.s32 1, %s19
    $region7: #{tpu_custom_call.1} parent=1 // loop_footer_branch
      %18 = sbr.rel target = $region3
    $region8: #{tpu_custom_call.1} parent=1 // loop_exit
      _
    %4466 = vsyncpa [#allocation4], 1
    %s4467 = scalar_lea.sflag [#allocation4], 1
    %4468 = vsyncpa %s4467, 1

</llo_original>
